<compile_context>
chip_gen: v5e
topology: v5e:2x2
jax: 0.10.0
libtpu: 0.0.40
codegen_flags: <defaults>
</compile_context>

<pallas_src>
import functools

import numpy as np
import jax
import jax.numpy as jnp
from jax.experimental import pallas as pl
from jax.experimental.pallas import tpu as pltpu


VMEM_LIMIT = 32 * 1024 * 1024  # safe on v5e/v6e/v7x scoped-VMEM budgets


def _tile_m(m, tile):
    """Pick an M tile: full array if small, else `tile` (multiple of 16)."""
    if m <= tile:
        return m, m, 1
    mp = ((m + tile - 1) // tile) * tile
    return tile, mp, mp // tile


# ----------------------------------------------------------------------------
# Linear (+ optional ReLU): y = x @ w_t + b, tiled over M, bf16 MXU inputs.
# ----------------------------------------------------------------------------
def _linear_kernel(x_ref, w_ref, b_ref, o_ref, *, act):
    y = jnp.dot(x_ref[...], w_ref[...], preferred_element_type=jnp.float32)
    y = y + b_ref[...]
    if act == "relu":
        y = jnp.maximum(y, 0.0)
    o_ref[...] = y


def pallas_linear(x, w_t, b, act="none", tile_m=512):
    M, K = x.shape
    _, N = w_t.shape
    x = x.astype(jnp.bfloat16)
    w_t = w_t.astype(jnp.bfloat16)
    b2 = b.reshape(1, N).astype(jnp.float32)
    tm, mp, gm = _tile_m(M, tile_m)
    if mp != M:
        x = jnp.pad(x, ((0, mp - M), (0, 0)))
    out = pl.pallas_call(
        functools.partial(_linear_kernel, act=act),
        out_shape=jax.ShapeDtypeStruct((mp, N), jnp.float32),
        grid=(gm,),
        in_specs=[pl.BlockSpec((tm, K), lambda i: (i, 0)),
                  pl.BlockSpec((K, N), lambda i: (0, 0)),
                  pl.BlockSpec((1, N), lambda i: (0, 0))],
        out_specs=pl.BlockSpec((tm, N), lambda i: (i, 0)),
        compiler_params=pltpu.CompilerParams(
            dimension_semantics=("parallel",), vmem_limit_bytes=VMEM_LIMIT),
    )(x, w_t, b2)
    return out[:M]


# ----------------------------------------------------------------------------
# Char CNN: Conv1d(char_dim, 100, Kw) + max over positions.
# Input is the flattened (N, char_size*char_dim) char embeddings; the Kw-wide
# windows are sliced in-kernel (no im2col copy in HBM).  CO padded to 128.
# ----------------------------------------------------------------------------
def _charcnn_kernel(x_ref, w_ref, b_ref, o_ref, *, out_len, cd, kw):
    x = x_ref[...]
    w = w_ref[...]
    acc = jnp.dot(x[:, 0:kw * cd], w, preferred_element_type=jnp.float32)
    for l in range(1, out_len):
        y = jnp.dot(x[:, l * cd:l * cd + kw * cd], w,
                    preferred_element_type=jnp.float32)
        acc = jnp.maximum(acc, y)
    o_ref[...] = acc + b_ref[...]


def pallas_char_cnn(ch_flat, w_kc, bias, out_len, cd, kw, tile_n=512):
    N, W = ch_flat.shape
    CO = w_kc.shape[1]
    CO_pad = ((CO + 127) // 128) * 128
    w_p = jnp.pad(w_kc, ((0, 0), (0, CO_pad - CO))).astype(jnp.bfloat16)
    b_p = jnp.pad(bias, (0, CO_pad - CO)).reshape(1, CO_pad).astype(jnp.float32)
    x = ch_flat.astype(jnp.bfloat16)
    tn, np_, gm = _tile_m(N, tile_n)
    if np_ != N:
        x = jnp.pad(x, ((0, np_ - N), (0, 0)))
    out = pl.pallas_call(
        functools.partial(_charcnn_kernel, out_len=out_len, cd=cd, kw=kw),
        out_shape=jax.ShapeDtypeStruct((np_, CO_pad), jnp.float32),
        grid=(gm,),
        in_specs=[pl.BlockSpec((tn, W), lambda i: (i, 0)),
                  pl.BlockSpec((kw * cd, CO_pad), lambda i: (0, 0)),
                  pl.BlockSpec((1, CO_pad), lambda i: (0, 0))],
        out_specs=pl.BlockSpec((tn, CO_pad), lambda i: (i, 0)),
        compiler_params=pltpu.CompilerParams(
            dimension_semantics=("parallel",), vmem_limit_bytes=VMEM_LIMIT),
    )(x, w_p, b_p)
    return out[:N, :CO]


# ----------------------------------------------------------------------------
# LSTM recurrence with multi-timestep blocking.  linear_re(+ReLU) and the
# length mask are fused, with linear_re batched over the TU timesteps of each
# grid step (one (TU*B, H) x (H, H) matmul per step).
# x_proj already contains x @ W_ih^T + b_ih + b_hh.
# ----------------------------------------------------------------------------
def _lstm_kernel(xp_ref, lens_ref, whhT_ref, wreT_ref, bre_ref, o_ref,
                 h_ref, c_ref, hs_ref, *, hidden, tu, b_pad):
    blk = pl.program_id(0)

    @pl.when(blk == 0)
    def _():
        h_ref[...] = jnp.zeros_like(h_ref)
        c_ref[...] = jnp.zeros_like(c_ref)

    whhT = whhT_ref[...]          # (H, 4H) bf16, resident
    lens = lens_ref[...]          # (B, 1)  f32
    t0 = (blk * tu).astype(jnp.float32)

    h = h_ref[...]
    c = c_ref[...]
    for i in range(tu):           # unrolled inner time loop (recurrence)
        gates = xp_ref[i] + jnp.dot(h.astype(jnp.bfloat16), whhT,
                                    preferred_element_type=jnp.float32)
        ig = jax.nn.sigmoid(gates[:, 0:hidden])
        fg = jax.nn.sigmoid(gates[:, hidden:2 * hidden])
        gg = jnp.tanh(gates[:, 2 * hidden:3 * hidden])
        og = jax.nn.sigmoid(gates[:, 3 * hidden:4 * hidden])
        c = fg * c + ig * gg
        h = og * jnp.tanh(c)
        # pad_packed semantics: hidden state zeroed past the sequence length
        # (padded rows later give relu(b_re), exactly as in the torch module).
        mask = (lens > (t0 + float(i))).astype(jnp.float32)       # (B, 1)
        hs_ref[i] = h * mask
    h_ref[...] = h
    c_ref[...] = c

    # Batched linear_re + ReLU over all tu timesteps of this grid step.
    hm = hs_ref[...].reshape(tu * b_pad, hidden)
    y = jnp.dot(hm.astype(jnp.bfloat16), wreT_ref[...],
                preferred_element_type=jnp.float32) + bre_ref[...]
    o_ref[...] = jnp.maximum(y, 0.0).reshape(tu, b_pad, hidden)


def pallas_lstm_fused(x_proj_sbf, context_lens, whh_T, wre_T, b_re, hidden, tu=16):
    """x_proj_sbf: (S, B, 4H) f32.  Returns relu(linear_re(masked h_t)), (S, B, H)."""
    S, B, G = x_proj_sbf.shape
    tu = min(tu, S)
    B_pad = max(8, ((B + 7) // 8) * 8)
    S_pad = ((S + tu - 1) // tu) * tu
    xp = jnp.pad(x_proj_sbf.astype(jnp.float32),
                 ((0, S_pad - S), (0, B_pad - B), (0, 0)))
    lens = jnp.pad(context_lens.astype(jnp.float32), (0, B_pad - B)).reshape(B_pad, 1)
    out = pl.pallas_call(
        functools.partial(_lstm_kernel, hidden=hidden, tu=tu, b_pad=B_pad),
        out_shape=jax.ShapeDtypeStruct((S_pad, B_pad, hidden), jnp.float32),
        grid=(S_pad // tu,),
        in_specs=[pl.BlockSpec((tu, B_pad, G), lambda t: (t, 0, 0)),
                  pl.BlockSpec((B_pad, 1), lambda t: (0, 0)),
                  pl.BlockSpec((hidden, G), lambda t: (0, 0)),
                  pl.BlockSpec((hidden, hidden), lambda t: (0, 0)),
                  pl.BlockSpec((1, hidden), lambda t: (0, 0))],
        out_specs=pl.BlockSpec((tu, B_pad, hidden), lambda t: (t, 0, 0)),
        scratch_shapes=[pltpu.VMEM((B_pad, hidden), jnp.float32),
                        pltpu.VMEM((B_pad, hidden), jnp.float32),
                        pltpu.VMEM((tu, B_pad, hidden), jnp.float32)],
        compiler_params=pltpu.CompilerParams(
            dimension_semantics=("arbitrary",), vmem_limit_bytes=VMEM_LIMIT),
    )(xp, lens, whh_T.astype(jnp.bfloat16), wre_T.astype(jnp.bfloat16),
      b_re.reshape(1, hidden).astype(jnp.float32))
    return out[:S, :B]


# ----------------------------------------------------------------------------
# Batched matmul (mention pooling) -- h_mapping/t_mapping merged into one call.
# ----------------------------------------------------------------------------
def _bmm_kernel(a_ref, b_ref, o_ref):
    o_ref[0] = jnp.dot(a_ref[0], b_ref[0], preferred_element_type=jnp.float32)


def pallas_bmm(a, b):
    B, M, K = a.shape
    _, _, N = b.shape
    return pl.pallas_call(
        _bmm_kernel,
        out_shape=jax.ShapeDtypeStruct((B, M, N), jnp.float32),
        grid=(B,),
        in_specs=[pl.BlockSpec((1, M, K), lambda i: (i, 0, 0)),
                  pl.BlockSpec((1, K, N), lambda i: (i, 0, 0))],
        out_specs=pl.BlockSpec((1, M, N), lambda i: (i, 0, 0)),
        compiler_params=pltpu.CompilerParams(
            dimension_semantics=("parallel",), vmem_limit_bytes=VMEM_LIMIT),
    )(a.astype(jnp.bfloat16), b.astype(jnp.bfloat16))


# ----------------------------------------------------------------------------
# Bilinear: out[p,k] = s[p] @ W[k] @ t[p] + b[k], as one big GEMM.
# Feature dim padded to a multiple of 128 (144 -> 256) for lane alignment.
# ----------------------------------------------------------------------------
def _bilinear_kernel(s_ref, t_ref, w2_ref, b_ref, o_ref, *, nrel, feat):
    sw = jnp.dot(s_ref[...], w2_ref[...], preferred_element_type=jnp.float32)  # (P, K*I)
    t = t_ref[...].astype(jnp.float32)
    cols = []
    for k in range(nrel):
        chunk = sw[:, k * feat:(k + 1) * feat]      # lane-aligned slice
        cols.append(jnp.sum(chunk * t, axis=-1, keepdims=True))
    o_ref[...] = jnp.concatenate(cols, axis=-1) + b_ref[...]


def pallas_bilinear(s, t, w, b, tile_m=256):
    P, I = s.shape
    K = w.shape[0]
    Ip = ((I + 127) // 128) * 128
    s_p = jnp.pad(s, ((0, 0), (0, Ip - I))).astype(jnp.bfloat16)
    t_p = jnp.pad(t, ((0, 0), (0, Ip - I))).astype(jnp.bfloat16)
    w_p = jnp.pad(w, ((0, 0), (0, Ip - I), (0, Ip - I)))
    w2 = jnp.transpose(w_p, (1, 0, 2)).reshape(Ip, K * Ip).astype(jnp.bfloat16)
    b2 = b.reshape(1, K).astype(jnp.float32)
    tm, pp, gm = _tile_m(P, tile_m)
    if pp != P:
        s_p = jnp.pad(s_p, ((0, pp - P), (0, 0)))
        t_p = jnp.pad(t_p, ((0, pp - P), (0, 0)))
    out = pl.pallas_call(
        functools.partial(_bilinear_kernel, nrel=K, feat=Ip),
        out_shape=jax.ShapeDtypeStruct((pp, K), jnp.float32),
        grid=(gm,),
        in_specs=[pl.BlockSpec((tm, Ip), lambda i: (i, 0)),
                  pl.BlockSpec((tm, Ip), lambda i: (i, 0)),
                  pl.BlockSpec((Ip, K * Ip), lambda i: (0, 0)),
                  pl.BlockSpec((1, K), lambda i: (0, 0))],
        out_specs=pl.BlockSpec((tm, K), lambda i: (i, 0)),
        compiler_params=pltpu.CompilerParams(
            dimension_semantics=("parallel",), vmem_limit_bytes=VMEM_LIMIT),
    )(s_p, t_p, w2, b2)
    return out[:P]


# ----------------------------------------------------------------------------
# Soft-rule reasoning: tiny (K=2n+1, L) contractions -- left to XLA einsums.
# ----------------------------------------------------------------------------
def reasoning_by_soft_rules(logits, diff_w, diff_weights, n, T, L):
    n_e = logits.shape[0]
    eye = jnp.eye(n_e, dtype=logits.dtype)
    inp = jnp.concatenate(
        [logits, jnp.transpose(logits, (1, 0, 2)), eye[..., None]], axis=-1)  # (n_e,n_e,2n+1)
    all_states = []
    for r in range(n):
        cur_states = []
        for t in range(T):
            w = diff_w[r, t]                                    # (L, 2n+1)
            if r != 0:
                one_hot = jnp.zeros_like(w).at[:, 0].set(-1e30).at[:, n].set(-1e30)
                w = w + one_hot
            w = jax.nn.softmax(w, axis=-1)
            if t == 0:
                s = jnp.einsum("mnr,lr->mnl", inp, w)
            else:
                s_tmp = jnp.einsum("mkr,knl->mrnl", inp, cur_states[t - 1])
                s = jnp.einsum("mrnl,lr->mnl", s_tmp, w)
            cur_states.append(s)
        weight = jnp.tanh(diff_weights[r])                      # (L, 1)
        final_state = jnp.einsum("mnl,lk->mnk", cur_states[-1], weight)[..., 0]
        all_states.append(final_state)
    return jnp.stack(all_states, axis=-1)                       # (n_e, n_e, n)


# ----------------------------------------------------------------------------
# Model forward (glue in JAX, heavy compute in the kernels above)
# ----------------------------------------------------------------------------
def lstm_model_forward(params, cfg, context_idxs, pos, context_ner, context_char_idxs,
                       context_lens, h_t_pairs, h_mapping, t_mapping, relation_mask,
                       dis_h_2_t, dis_t_2_h):
    n = cfg["relation_num"]
    T, L = cfg["T"], cfg["L"]
    hidden = 128
    char_hidden = 100
    Kw = 5

    bsz, para_size = context_idxs.shape
    char_size = context_char_idxs.shape[2]
    cd = params["char_emb"].shape[1]

    # --- char CNN: Conv1d(char_dim, 100, 5) + max over positions -----------
    N = bsz * para_size
    out_len = char_size - Kw + 1
    ch_emb = params["char_emb"][context_char_idxs.reshape(-1, char_size)]   # (N, cs, cd)
    ch_flat = ch_emb.reshape(N, char_size * cd)
    # weight flattened in (k, c) order to match in-kernel window slicing
    w_kc = jnp.transpose(params["char_cnn_w"], (2, 1, 0)).reshape(Kw * cd, char_hidden)
    context_ch = pallas_char_cnn(ch_flat, w_kc, params["char_cnn_b"], out_len, cd, Kw)
    context_ch = context_ch.reshape(bsz, para_size, char_hidden)

    # --- pair index fix-up:  p + (p == 0) - 1 -------------------------------
    h_t_pairs = h_t_pairs + (h_t_pairs == 0).astype(h_t_pairs.dtype) - 1

    # --- token features ------------------------------------------------------
    sent = jnp.concatenate([
        params["word_emb"][context_idxs],
        params["coref_emb"][pos],
        params["ner_emb"][context_ner],
        context_ch,
    ], axis=-1)                                                             # (B, P, input_size)

    # --- EncoderLSTM input projection (x @ W_ih^T + b_ih + b_hh) ------------
    in_size = sent.shape[-1]
    x_flat = sent.reshape(bsz * para_size, in_size)
    b_all = params["lstm_b_ih"] + params["lstm_b_hh"]
    x_proj = pallas_linear(x_flat, params["lstm_w_ih"].T, b_all, act="none")
    x_proj = jnp.transpose(x_proj.reshape(bsz, para_size, 4 * hidden), (1, 0, 2))  # (S, B, 4H)

    # --- LSTM recurrence with fused length-mask + linear_re + ReLU ----------
    context_output = pallas_lstm_fused(
        x_proj, context_lens, params["lstm_w_hh"].T,
        params["linear_re_w"].T, params["linear_re_b"], hidden)            # (S, B, H)
    context_output = jnp.transpose(context_output, (1, 0, 2))              # (B, S, H)

    # --- mention pooling (merged bmm over h_mapping|t_mapping) --------------
    num_pairs = h_mapping.shape[1]
    maps = jnp.concatenate([h_mapping, t_mapping], axis=1)                  # (B, 2P, S)
    pooled = pallas_bmm(maps, context_output)                               # (B, 2P, H)
    start_re_output = pooled[:, :num_pairs]
    end_re_output = pooled[:, num_pairs:]

    s_rep = jnp.concatenate([start_re_output, params["dis_emb"][dis_h_2_t]], axis=-1)
    t_rep = jnp.concatenate([end_re_output, params["dis_emb"][dis_t_2_h]], axis=-1)

    feat = s_rep.shape[-1]
    predict_re = pallas_bilinear(s_rep.reshape(bsz * num_pairs, feat),
                                 t_rep.reshape(bsz * num_pairs, feat),
                                 params["bili_w"], params["bili_b"])
    predict_re = predict_re.reshape(bsz, num_pairs, n)

    # --- soft-rule reasoning, vmapped over batch (tiny einsums -> XLA) -------
    n_e = int(np.sqrt(num_pairs)) + 1

    def per_example(pred_b, mask_b, pairs_b):
        indices = jnp.transpose(pairs_b, (1, 0))                            # (2, num_pairs)
        inp_b = jax.nn.sigmoid(pred_b) * mask_b[:, None]
        dense = jnp.zeros((n_e, n_e, n), jnp.float32).at[indices[0], indices[1]].add(inp_b)
        logits_rule = reasoning_by_soft_rules(dense, params["diff_w"],
                                              params["diff_weights"], n, T, L)
        flat = logits_rule.reshape(-1, n)
        lin_idx = indices[0] * n_e + indices[1]
        return flat[lin_idx]

    predictions_new = jax.vmap(per_example)(predict_re, relation_mask, h_t_pairs)
    logits_rule_soft = predictions_new + predict_re
    return predict_re, logits_rule_soft


# ----------------------------------------------------------------------------
# Deterministic parameter init (shapes follow the module's __init__)
# ----------------------------------------------------------------------------
def init_params(key, cfg):
    n, T, L = cfg["relation_num"], cfg["T"], cfg["L"]
    hidden, char_hidden, Kw = 128, 100, 5
    input_size = cfg["word_dim"] + cfg["coref_size"] + cfg["entity_type_size"] + char_hidden
    bili_in = hidden + cfg["dis_size"]
    ks = jax.random.split(key, 16)
    std = 0.1
    p = {}
    p["word_emb"] = jax.random.normal(ks[0], (cfg["word_vocab"], cfg["word_dim"]), jnp.float32) * std
    p["char_emb"] = jax.random.normal(ks[1], (cfg["char_vocab"], cfg["char_dim"]), jnp.float32) * std
    p["coref_emb"] = (jax.random.normal(ks[2], (cfg["max_length"], cfg["coref_size"]), jnp.float32) * std).at[0].set(0.0)
    p["ner_emb"] = (jax.random.normal(ks[3], (20, cfg["entity_type_size"]), jnp.float32) * std).at[0].set(0.0)
    p["dis_emb"] = (jax.random.normal(ks[4], (20, cfg["dis_size"]), jnp.float32) * std).at[10].set(0.0)
    p["char_cnn_w"] = jax.random.normal(ks[5], (char_hidden, cfg["char_dim"], Kw), jnp.float32) * std
    p["char_cnn_b"] = jnp.zeros((char_hidden,), jnp.float32)
    p["diff_w"] = jax.random.normal(ks[6], (n, T, L, 2 * n + 1), jnp.float32) * std
    p["diff_weights"] = jax.random.normal(ks[7], (n, L, 1), jnp.float32) * std
    p["lstm_w_ih"] = jax.random.normal(ks[8], (4 * hidden, input_size), jnp.float32) * std
    p["lstm_w_hh"] = jax.random.normal(ks[9], (4 * hidden, hidden), jnp.float32) * std
    p["lstm_b_ih"] = jnp.zeros((4 * hidden,), jnp.float32)
    p["lstm_b_hh"] = jnp.zeros((4 * hidden,), jnp.float32)
    p["linear_re_w"] = jax.random.normal(ks[10], (hidden, hidden), jnp.float32) * std
    p["linear_re_b"] = jnp.zeros((hidden,), jnp.float32)
    p["bili_w"] = jax.random.normal(ks[11], (n, bili_in, bili_in), jnp.float32) * 0.05
    p["bili_b"] = jnp.zeros((n,), jnp.float32)
    return p


if __name__ == "__main__":
    cfg = dict(relation_num=4, T=2, L=20,
               coref_size=8, entity_type_size=8, dis_size=16,
               max_length=16, keep_prob=0.8,
               word_vocab=50, word_dim=32, char_vocab=30, char_dim=16)

    params = init_params(jax.random.PRNGKey(0), cfg)

    bsz, para_size, char_size, num_pairs = 2, 16, 8, 12
    n_e = int(np.sqrt(num_pairs)) + 1

    ks = jax.random.split(jax.random.PRNGKey(0), 12)
    context_idxs = jax.random.randint(ks[0], (bsz, para_size), 0, cfg["word_vocab"])
    pos = jax.random.randint(ks[1], (bsz, para_size), 0, cfg["max_length"])
    context_ner = jax.random.randint(ks[2], (bsz, para_size), 0, 20)
    context_char_idxs = jax.random.randint(ks[3], (bsz, para_size, char_size), 0, cfg["char_vocab"])
    context_lens = jnp.array([16, 12], dtype=jnp.int32)
    h_t_pairs = jax.random.randint(ks[4], (bsz, num_pairs, 2), 0, n_e + 1)
    h_mapping = jax.random.uniform(ks[5], (bsz, num_pairs, para_size), jnp.float32) / para_size
    t_mapping = jax.random.uniform(ks[6], (bsz, num_pairs, para_size), jnp.float32) / para_size
    relation_mask = jnp.ones((bsz, num_pairs), jnp.float32)
    dis_h_2_t = jax.random.randint(ks[7], (bsz, num_pairs), 0, 20)
    dis_t_2_h = jax.random.randint(ks[8], (bsz, num_pairs), 0, 20)

    fwd = jax.jit(lambda p, *a: lstm_model_forward(p, cfg, *a))
    predict_re, logits_rule_soft = fwd(
        params, context_idxs, pos, context_ner, context_char_idxs,
        context_lens, h_t_pairs, h_mapping, t_mapping, relation_mask,
        dis_h_2_t, dis_t_2_h)

    jax.block_until_ready((predict_re, logits_rule_soft))
    assert predict_re.shape == (bsz, num_pairs, cfg["relation_num"])
    assert logits_rule_soft.shape == (bsz, num_pairs, cfg["relation_num"])
    print("KERNEL_OK")
</pallas_src>

<mosaic_0001>
module attributes {stable_mosaic.version = 11 : i64} {
  func.func @_charcnn_kernel(%arg0: i32, %arg1: memref<32x128xbf16, #tpu.memory_space<vmem>>, %arg2: memref<80x128xbf16, #tpu.memory_space<vmem>>, %arg3: memref<1x128xf32, #tpu.memory_space<vmem>>, %arg4: memref<32x128xf32, #tpu.memory_space<vmem>>) attributes {dimension_semantics = [#tpu.dimension_semantics<parallel>], iteration_bounds = array<i64: 1>, scalar_prefetch = 0 : i64, scratch_operands = 0 : i64, tpu.core_type = #tpu.core_type<tc>, window_params = [{transform_indices = @transform_0, window_bounds = array<i64: 32, 128>}, {pipeline_mode = #tpu.pipeline_mode<synchronous>, transform_indices = @transform_1, window_bounds = array<i64: 80, 128>}, {pipeline_mode = #tpu.pipeline_mode<synchronous>, transform_indices = @transform_2, window_bounds = array<i64: 1, 128>}, {transform_indices = @transform_3, window_bounds = array<i64: 32, 128>}]} {
    %c0 = arith.constant 0 : index
    %c0_0 = arith.constant 0 : index
    %0 = vector.load %arg1[%c0, %c0_0] : memref<32x128xbf16, #tpu.memory_space<vmem>>, vector<32x128xbf16>
    %c0_1 = arith.constant 0 : index
    %c0_2 = arith.constant 0 : index
    %1 = vector.load %arg2[%c0_1, %c0_2] : memref<80x128xbf16, #tpu.memory_space<vmem>>, vector<80x128xbf16>
    %2 = vector.extract_strided_slice %0 {offsets = [0, 0], sizes = [32, 80], strides = [1, 1]} : vector<32x128xbf16> to vector<32x80xbf16>
    %cst = arith.constant dense<0.000000e+00> : vector<32x128xf32>
    %3 = tpu.matmul %2, %1, %cst {dimension_numbers = #tpu.dot_dimension_numbers<[1], [0], [0], [1], [0, 0, 1, 1], [], []>} : vector<32x80xbf16>, vector<80x128xbf16>, vector<32x128xf32> -> vector<32x128xf32>
    %4 = vector.extract_strided_slice %0 {offsets = [0, 16], sizes = [32, 80], strides = [1, 1]} : vector<32x128xbf16> to vector<32x80xbf16>
    %cst_3 = arith.constant dense<0.000000e+00> : vector<32x128xf32>
    %5 = tpu.matmul %4, %1, %cst_3 {dimension_numbers = #tpu.dot_dimension_numbers<[1], [0], [0], [1], [0, 0, 1, 1], [], []>} : vector<32x80xbf16>, vector<80x128xbf16>, vector<32x128xf32> -> vector<32x128xf32>
    %6 = arith.maximumf %3, %5 : vector<32x128xf32>
    %7 = vector.extract_strided_slice %0 {offsets = [0, 32], sizes = [32, 80], strides = [1, 1]} : vector<32x128xbf16> to vector<32x80xbf16>
    %cst_4 = arith.constant dense<0.000000e+00> : vector<32x128xf32>
    %8 = tpu.matmul %7, %1, %cst_4 {dimension_numbers = #tpu.dot_dimension_numbers<[1], [0], [0], [1], [0, 0, 1, 1], [], []>} : vector<32x80xbf16>, vector<80x128xbf16>, vector<32x128xf32> -> vector<32x128xf32>
    %9 = arith.maximumf %6, %8 : vector<32x128xf32>
    %10 = vector.extract_strided_slice %0 {offsets = [0, 48], sizes = [32, 80], strides = [1, 1]} : vector<32x128xbf16> to vector<32x80xbf16>
    %cst_5 = arith.constant dense<0.000000e+00> : vector<32x128xf32>
    %11 = tpu.matmul %10, %1, %cst_5 {dimension_numbers = #tpu.dot_dimension_numbers<[1], [0], [0], [1], [0, 0, 1, 1], [], []>} : vector<32x80xbf16>, vector<80x128xbf16>, vector<32x128xf32> -> vector<32x128xf32>
    %12 = arith.maximumf %9, %11 : vector<32x128xf32>
    %c0_6 = arith.constant 0 : index
    %c0_7 = arith.constant 0 : index
    %13 = vector.load %arg3[%c0_6, %c0_7] : memref<1x128xf32, #tpu.memory_space<vmem>>, vector<1x128xf32>
    %14 = vector.broadcast %13 : vector<1x128xf32> to vector<32x128xf32>
    %15 = arith.addf %12, %14 : vector<32x128xf32>
    %c0_8 = arith.constant 0 : index
    %c0_9 = arith.constant 0 : index
    %16 = vector.load %arg4[%c0_8, %c0_9] : memref<32x128xf32, #tpu.memory_space<vmem>>, vector<32x128xf32>
    tpu.vector_store %arg4[%c0_8, %c0_9], %15 {strides = array<i32>} : memref<32x128xf32, #tpu.memory_space<vmem>>, vector<32x128xf32>,
    return
  }
  func.func @transform_0(%arg0: i32) -> (i32, i32) {
    %c0_i32 = arith.constant 0 : i32
    %c0_i32_0 = arith.constant 0 : i32
    return %arg0, %c0_i32 : i32, i32
  }
  func.func @transform_1(%arg0: i32) -> (i32, i32) {
    %c0_i32 = arith.constant 0 : i32
    %c0_i32_0 = arith.constant 0 : i32
    %c0_i32_1 = arith.constant 0 : i32
    return %c0_i32, %c0_i32_0 : i32, i32
  }
  func.func @transform_2(%arg0: i32) -> (i32, i32) {
    %c0_i32 = arith.constant 0 : i32
    %c0_i32_0 = arith.constant 0 : i32
    %c0_i32_1 = arith.constant 0 : i32
    return %c0_i32, %c0_i32_0 : i32, i32
  }
  func.func @transform_3(%arg0: i32) -> (i32, i32) {
    %c0_i32 = arith.constant 0 : i32
    %c0_i32_0 = arith.constant 0 : i32
    return %arg0, %c0_i32 : i32, i32
  }
}

module attributes {stable_mosaic.version = 11 : i64} {
  func.func @_linear_kernel(%arg0: i32, %arg1: memref<32x148xbf16, #tpu.memory_space<vmem>>, %arg2: memref<148x512xbf16, #tpu.memory_space<vmem>>, %arg3: memref<1x512xf32, #tpu.memory_space<vmem>>, %arg4: memref<32x512xf32, #tpu.memory_space<vmem>>) attributes {dimension_semantics = [#tpu.dimension_semantics<parallel>], iteration_bounds = array<i64: 1>, scalar_prefetch = 0 : i64, scratch_operands = 0 : i64, tpu.core_type = #tpu.core_type<tc>, window_params = [{transform_indices = @transform_0, window_bounds = array<i64: 32, 148>}, {pipeline_mode = #tpu.pipeline_mode<synchronous>, transform_indices = @transform_1, window_bounds = array<i64: 148, 512>}, {pipeline_mode = #tpu.pipeline_mode<synchronous>, transform_indices = @transform_2, window_bounds = array<i64: 1, 512>}, {transform_indices = @transform_3, window_bounds = array<i64: 32, 512>}]} {
    %c0 = arith.constant 0 : index
    %c0_0 = arith.constant 0 : index
    %0 = vector.load %arg1[%c0, %c0_0] : memref<32x148xbf16, #tpu.memory_space<vmem>>, vector<32x148xbf16>
    %c0_1 = arith.constant 0 : index
    %c0_2 = arith.constant 0 : index
    %1 = vector.load %arg2[%c0_1, %c0_2] : memref<148x512xbf16, #tpu.memory_space<vmem>>, vector<148x512xbf16>
    %cst = arith.constant dense<0.000000e+00> : vector<32x512xf32>
    %2 = tpu.matmul %0, %1, %cst {dimension_numbers = #tpu.dot_dimension_numbers<[1], [0], [0], [1], [0, 0, 1, 1], [], []>} : vector<32x148xbf16>, vector<148x512xbf16>, vector<32x512xf32> -> vector<32x512xf32>
    %c0_3 = arith.constant 0 : index
    %c0_4 = arith.constant 0 : index
    %3 = vector.load %arg3[%c0_3, %c0_4] : memref<1x512xf32, #tpu.memory_space<vmem>>, vector<1x512xf32>
    %4 = vector.broadcast %3 : vector<1x512xf32> to vector<32x512xf32>
    %5 = arith.addf %2, %4 : vector<32x512xf32>
    %c0_5 = arith.constant 0 : index
    %c0_6 = arith.constant 0 : index
    %6 = vector.load %arg4[%c0_5, %c0_6] : memref<32x512xf32, #tpu.memory_space<vmem>>, vector<32x512xf32>
    tpu.vector_store %arg4[%c0_5, %c0_6], %5 {strides = array<i32>} : memref<32x512xf32, #tpu.memory_space<vmem>>, vector<32x512xf32>,
    return
  }
  func.func @transform_0(%arg0: i32) -> (i32, i32) {
    %c0_i32 = arith.constant 0 : i32
    %c0_i32_0 = arith.constant 0 : i32
    return %arg0, %c0_i32 : i32, i32
  }
  func.func @transform_1(%arg0: i32) -> (i32, i32) {
    %c0_i32 = arith.constant 0 : i32
    %c0_i32_0 = arith.constant 0 : i32
    %c0_i32_1 = arith.constant 0 : i32
    return %c0_i32, %c0_i32_0 : i32, i32
  }
  func.func @transform_2(%arg0: i32) -> (i32, i32) {
    %c0_i32 = arith.constant 0 : i32
    %c0_i32_0 = arith.constant 0 : i32
    %c0_i32_1 = arith.constant 0 : i32
    return %c0_i32, %c0_i32_0 : i32, i32
  }
  func.func @transform_3(%arg0: i32) -> (i32, i32) {
    %c0_i32 = arith.constant 0 : i32
    %c0_i32_0 = arith.constant 0 : i32
    return %arg0, %c0_i32 : i32, i32
  }
}

module attributes {stable_mosaic.version = 11 : i64} {
  func.func @_bmm_kernel(%arg0: i32, %arg1: memref<1x24x16xbf16, #tpu.memory_space<vmem>>, %arg2: memref<1x16x128xbf16, #tpu.memory_space<vmem>>, %arg3: memref<1x24x128xf32, #tpu.memory_space<vmem>>) attributes {dimension_semantics = [#tpu.dimension_semantics<parallel>], iteration_bounds = array<i64: 2>, scalar_prefetch = 0 : i64, scratch_operands = 0 : i64, tpu.core_type = #tpu.core_type<tc>, window_params = [{transform_indices = @transform_0, window_bounds = array<i64: 1, 24, 16>}, {transform_indices = @transform_1, window_bounds = array<i64: 1, 16, 128>}, {transform_indices = @transform_2, window_bounds = array<i64: 1, 24, 128>}]} {
    %c0 = arith.constant 0 : index
    %c0_0 = arith.constant 0 : index
    %c0_1 = arith.constant 0 : index
    %0 = vector.load %arg1[%c0, %c0_0, %c0_1] : memref<1x24x16xbf16, #tpu.memory_space<vmem>>, vector<1x24x16xbf16>
    %1 = vector.shape_cast %0 : vector<1x24x16xbf16> to vector<24x16xbf16>
    %c0_2 = arith.constant 0 : index
    %c0_3 = arith.constant 0 : index
    %c0_4 = arith.constant 0 : index
    %2 = vector.load %arg2[%c0_2, %c0_3, %c0_4] : memref<1x16x128xbf16, #tpu.memory_space<vmem>>, vector<1x16x128xbf16>
    %3 = vector.shape_cast %2 : vector<1x16x128xbf16> to vector<16x128xbf16>
    %cst = arith.constant dense<0.000000e+00> : vector<24x128xf32>
    %4 = tpu.matmul %1, %3, %cst {dimension_numbers = #tpu.dot_dimension_numbers<[1], [0], [0], [1], [0, 0, 1, 1], [], []>} : vector<24x16xbf16>, vector<16x128xbf16>, vector<24x128xf32> -> vector<24x128xf32>
    %c0_5 = arith.constant 0 : index
    %c0_6 = arith.constant 0 : index
    %c0_7 = arith.constant 0 : index
    %5 = vector.load %arg3[%c0_5, %c0_6, %c0_7] : memref<1x24x128xf32, #tpu.memory_space<vmem>>, vector<1x24x128xf32>
    %6 = vector.shape_cast %5 : vector<1x24x128xf32> to vector<24x128xf32>
    %7 = vector.shape_cast %4 : vector<24x128xf32> to vector<1x24x128xf32>
    tpu.vector_store %arg3[%c0_5, %c0_6, %c0_7], %7 {strides = array<i32>} : memref<1x24x128xf32, #tpu.memory_space<vmem>>, vector<1x24x128xf32>,
    return
  }
  func.func @transform_0(%arg0: i32) -> (i32, i32, i32) {
    %c0_i32 = arith.constant 0 : i32
    %c0_i32_0 = arith.constant 0 : i32
    %c0_i32_1 = arith.constant 0 : i32
    return %arg0, %c0_i32, %c0_i32_0 : i32, i32, i32
  }
  func.func @transform_1(%arg0: i32) -> (i32, i32, i32) {
    %c0_i32 = arith.constant 0 : i32
    %c0_i32_0 = arith.constant 0 : i32
    %c0_i32_1 = arith.constant 0 : i32
    return %arg0, %c0_i32, %c0_i32_0 : i32, i32, i32
  }
  func.func @transform_2(%arg0: i32) -> (i32, i32, i32) {
    %c0_i32 = arith.constant 0 : i32
    %c0_i32_0 = arith.constant 0 : i32
    %c0_i32_1 = arith.constant 0 : i32
    return %arg0, %c0_i32, %c0_i32_0 : i32, i32, i32
  }
}

module attributes {stable_mosaic.version = 11 : i64} {
  func.func @_lstm_kernel(%arg0: i32, %arg1: memref<16x8x512xf32, #tpu.memory_space<vmem>>, %arg2: memref<8x1xf32, #tpu.memory_space<vmem>>, %arg3: memref<128x512xbf16, #tpu.memory_space<vmem>>, %arg4: memref<128x128xbf16, #tpu.memory_space<vmem>>, %arg5: memref<1x128xf32, #tpu.memory_space<vmem>>, %arg6: memref<16x8x128xf32, #tpu.memory_space<vmem>>, %arg7: memref<8x128xf32, #tpu.memory_space<vmem>>, %arg8: memref<8x128xf32, #tpu.memory_space<vmem>>, %arg9: memref<16x8x128xf32, #tpu.memory_space<vmem>>) attributes {dimension_semantics = [#tpu.dimension_semantics<arbitrary>], iteration_bounds = array<i64: 1>, scalar_prefetch = 0 : i64, scratch_operands = 3 : i64, tpu.core_type = #tpu.core_type<tc>, window_params = [{transform_indices = @transform_0, window_bounds = array<i64: 16, 8, 512>}, {pipeline_mode = #tpu.pipeline_mode<synchronous>, transform_indices = @transform_1, window_bounds = array<i64: 8, 1>}, {pipeline_mode = #tpu.pipeline_mode<synchronous>, transform_indices = @transform_2, window_bounds = array<i64: 128, 512>}, {pipeline_mode = #tpu.pipeline_mode<synchronous>, transform_indices = @transform_3, window_bounds = array<i64: 128, 128>}, {pipeline_mode = #tpu.pipeline_mode<synchronous>, transform_indices = @transform_4, window_bounds = array<i64: 1, 128>}, {transform_indices = @transform_5, window_bounds = array<i64: 16, 8, 128>}]} {
    %c0_i32 = arith.constant 0 : i32
    %0 = arith.cmpi eq, %arg0, %c0_i32 : i32
    %1 = arith.extui %0 : i1 to i32
    %c0_i32_0 = arith.constant 0 : i32
    %2 = arith.cmpi ne, %1, %c0_i32_0 : i32
    scf.if %2 {
      %cst_184 = arith.constant 0.000000e+00 : f32
      %663 = vector.broadcast %cst_184 : f32 to vector<8x128xf32>
      %c0_185 = arith.constant 0 : index
      %c0_186 = arith.constant 0 : index
      %664 = vector.load %arg7[%c0_185, %c0_186] : memref<8x128xf32, #tpu.memory_space<vmem>>, vector<8x128xf32>
      tpu.vector_store %arg7[%c0_185, %c0_186], %663 {strides = array<i32>} : memref<8x128xf32, #tpu.memory_space<vmem>>, vector<8x128xf32>,
      %cst_187 = arith.constant 0.000000e+00 : f32
      %665 = vector.broadcast %cst_187 : f32 to vector<8x128xf32>
      %c0_188 = arith.constant 0 : index
      %c0_189 = arith.constant 0 : index
      %666 = vector.load %arg8[%c0_188, %c0_189] : memref<8x128xf32, #tpu.memory_space<vmem>>, vector<8x128xf32>
      tpu.vector_store %arg8[%c0_188, %c0_189], %665 {strides = array<i32>} : memref<8x128xf32, #tpu.memory_space<vmem>>, vector<8x128xf32>,
    } else {
    }
    %c0 = arith.constant 0 : index
    %c0_1 = arith.constant 0 : index
    %3 = vector.load %arg3[%c0, %c0_1] : memref<128x512xbf16, #tpu.memory_space<vmem>>, vector<128x512xbf16>
    %c0_2 = arith.constant 0 : index
    %c0_3 = arith.constant 0 : index
    %4 = vector.load %arg2[%c0_2, %c0_3] : memref<8x1xf32, #tpu.memory_space<vmem>>, vector<8x1xf32>
    %c16_i32 = arith.constant 16 : i32
    %5 = arith.muli %arg0, %c16_i32 : i32
    %6 = arith.sitofp %5 : i32 to f32
    %c0_4 = arith.constant 0 : index
    %c0_5 = arith.constant 0 : index
    %7 = vector.load %arg7[%c0_4, %c0_5] : memref<8x128xf32, #tpu.memory_space<vmem>>, vector<8x128xf32>
    %c0_6 = arith.constant 0 : index
    %c0_7 = arith.constant 0 : index
    %8 = vector.load %arg8[%c0_6, %c0_7] : memref<8x128xf32, #tpu.memory_space<vmem>>, vector<8x128xf32>
    %c0_8 = arith.constant 0 : index
    %c0_9 = arith.constant 0 : index
    %c0_10 = arith.constant 0 : index
    %9 = vector.load %arg1[%c0_8, %c0_9, %c0_10] : memref<16x8x512xf32, #tpu.memory_space<vmem>>, vector<1x8x512xf32>
    %10 = vector.shape_cast %9 : vector<1x8x512xf32> to vector<8x512xf32>
    %11 = arith.truncf %7 : vector<8x128xf32> to vector<8x128xbf16>
    %cst = arith.constant dense<0.000000e+00> : vector<8x512xf32>
    %12 = tpu.matmul %11, %3, %cst {dimension_numbers = #tpu.dot_dimension_numbers<[1], [0], [0], [1], [0, 0, 1, 1], [], []>} : vector<8x128xbf16>, vector<128x512xbf16>, vector<8x512xf32> -> vector<8x512xf32>
    %13 = arith.addf %10, %12 : vector<8x512xf32>
    %14 = vector.extract_strided_slice %13 {offsets = [0, 0], sizes = [8, 128], strides = [1, 1]} : vector<8x512xf32> to vector<8x128xf32>
    %15 = arith.negf %14 : vector<8x128xf32>
    %16 = math.exp %15 : vector<8x128xf32>
    %cst_11 = arith.constant 1.000000e+00 : f32
    %17 = vector.broadcast %cst_11 : f32 to vector<8x128xf32>
    %18 = arith.addf %17, %16 : vector<8x128xf32>
    %19 = arith.divf %17, %18 : vector<8x128xf32>
    %20 = vector.extract_strided_slice %13 {offsets = [0, 128], sizes = [8, 128], strides = [1, 1]} : vector<8x512xf32> to vector<8x128xf32>
    %21 = arith.negf %20 : vector<8x128xf32>
    %22 = math.exp %21 : vector<8x128xf32>
    %cst_12 = arith.constant 1.000000e+00 : f32
    %23 = vector.broadcast %cst_12 : f32 to vector<8x128xf32>
    %24 = arith.addf %23, %22 : vector<8x128xf32>
    %25 = arith.divf %23, %24 : vector<8x128xf32>
    %26 = vector.extract_strided_slice %13 {offsets = [0, 256], sizes = [8, 128], strides = [1, 1]} : vector<8x512xf32> to vector<8x128xf32>
    %27 = math.tanh %26 : vector<8x128xf32>
    %28 = vector.extract_strided_slice %13 {offsets = [0, 384], sizes = [8, 128], strides = [1, 1]} : vector<8x512xf32> to vector<8x128xf32>
    %29 = arith.negf %28 : vector<8x128xf32>
    %30 = math.exp %29 : vector<8x128xf32>
    %cst_13 = arith.constant 1.000000e+00 : f32
    %31 = vector.broadcast %cst_13 : f32 to vector<8x128xf32>
    %32 = arith.addf %31, %30 : vector<8x128xf32>
    %33 = arith.divf %31, %32 : vector<8x128xf32>
    %34 = arith.mulf %25, %8 : vector<8x128xf32>
    %35 = arith.mulf %19, %27 : vector<8x128xf32>
    %36 = arith.addf %34, %35 : vector<8x128xf32>
    %37 = math.tanh %36 : vector<8x128xf32>
    %38 = arith.mulf %33, %37 : vector<8x128xf32>
    %cst_14 = arith.constant 0.000000e+00 : f32
    %39 = arith.addf %6, %cst_14 : f32
    %40 = vector.broadcast %39 : f32 to vector<8x1xf32>
    %41 = arith.cmpf ogt, %4, %40 : vector<8x1xf32>
    %42 = arith.extui %41 : vector<8x1xi1> to vector<8x1xi32>
    %43 = arith.sitofp %42 : vector<8x1xi32> to vector<8x1xf32>
    %44 = vector.broadcast %43 : vector<8x1xf32> to vector<8x128xf32>
    %45 = arith.mulf %38, %44 : vector<8x128xf32>
    %c0_15 = arith.constant 0 : index
    %c0_16 = arith.constant 0 : index
    %c0_17 = arith.constant 0 : index
    %46 = vector.load %arg9[%c0_15, %c0_16, %c0_17] : memref<16x8x128xf32, #tpu.memory_space<vmem>>, vector<1x8x128xf32>
    %47 = vector.shape_cast %46 : vector<1x8x128xf32> to vector<8x128xf32>
    %48 = vector.shape_cast %45 : vector<8x128xf32> to vector<1x8x128xf32>
    tpu.vector_store %arg9[%c0_15, %c0_16, %c0_17], %48 {strides = array<i32>} : memref<16x8x128xf32, #tpu.memory_space<vmem>>, vector<1x8x128xf32>,
    %c1 = arith.constant 1 : index
    %c0_18 = arith.constant 0 : index
    %c0_19 = arith.constant 0 : index
    %49 = vector.load %arg1[%c1, %c0_18, %c0_19] : memref<16x8x512xf32, #tpu.memory_space<vmem>>, vector<1x8x512xf32>
    %50 = vector.shape_cast %49 : vector<1x8x512xf32> to vector<8x512xf32>
    %51 = arith.truncf %38 : vector<8x128xf32> to vector<8x128xbf16>
    %cst_20 = arith.constant dense<0.000000e+00> : vector<8x512xf32>
    %52 = tpu.matmul %51, %3, %cst_20 {dimension_numbers = #tpu.dot_dimension_numbers<[1], [0], [0], [1], [0, 0, 1, 1], [], []>} : vector<8x128xbf16>, vector<128x512xbf16>, vector<8x512xf32> -> vector<8x512xf32>
    %53 = arith.addf %50, %52 : vector<8x512xf32>
    %54 = vector.extract_strided_slice %53 {offsets = [0, 0], sizes = [8, 128], strides = [1, 1]} : vector<8x512xf32> to vector<8x128xf32>
    %55 = arith.negf %54 : vector<8x128xf32>
    %56 = math.exp %55 : vector<8x128xf32>
    %cst_21 = arith.constant 1.000000e+00 : f32
    %57 = vector.broadcast %cst_21 : f32 to vector<8x128xf32>
    %58 = arith.addf %57, %56 : vector<8x128xf32>
    %59 = arith.divf %57, %58 : vector<8x128xf32>
    %60 = vector.extract_strided_slice %53 {offsets = [0, 128], sizes = [8, 128], strides = [1, 1]} : vector<8x512xf32> to vector<8x128xf32>
    %61 = arith.negf %60 : vector<8x128xf32>
    %62 = math.exp %61 : vector<8x128xf32>
    %cst_22 = arith.constant 1.000000e+00 : f32
    %63 = vector.broadcast %cst_22 : f32 to vector<8x128xf32>
    %64 = arith.addf %63, %62 : vector<8x128xf32>
    %65 = arith.divf %63, %64 : vector<8x128xf32>
    %66 = vector.extract_strided_slice %53 {offsets = [0, 256], sizes = [8, 128], strides = [1, 1]} : vector<8x512xf32> to vector<8x128xf32>
    %67 = math.tanh %66 : vector<8x128xf32>
    %68 = vector.extract_strided_slice %53 {offsets = [0, 384], sizes = [8, 128], strides = [1, 1]} : vector<8x512xf32> to vector<8x128xf32>
    %69 = arith.negf %68 : vector<8x128xf32>
    %70 = math.exp %69 : vector<8x128xf32>
    %cst_23 = arith.constant 1.000000e+00 : f32
    %71 = vector.broadcast %cst_23 : f32 to vector<8x128xf32>
    %72 = arith.addf %71, %70 : vector<8x128xf32>
    %73 = arith.divf %71, %72 : vector<8x128xf32>
    %74 = arith.mulf %65, %36 : vector<8x128xf32>
    %75 = arith.mulf %59, %67 : vector<8x128xf32>
    %76 = arith.addf %74, %75 : vector<8x128xf32>
    %77 = math.tanh %76 : vector<8x128xf32>
    %78 = arith.mulf %73, %77 : vector<8x128xf32>
    %cst_24 = arith.constant 1.000000e+00 : f32
    %79 = arith.addf %6, %cst_24 : f32
    %80 = vector.broadcast %79 : f32 to vector<8x1xf32>
    %81 = arith.cmpf ogt, %4, %80 : vector<8x1xf32>
    %82 = arith.extui %81 : vector<8x1xi1> to vector<8x1xi32>
    %83 = arith.sitofp %82 : vector<8x1xi32> to vector<8x1xf32>
    %84 = vector.broadcast %83 : vector<8x1xf32> to vector<8x128xf32>
    %85 = arith.mulf %78, %84 : vector<8x128xf32>
    %c1_25 = arith.constant 1 : index
    %c0_26 = arith.constant 0 : index
    %c0_27 = arith.constant 0 : index
    %86 = vector.load %arg9[%c1_25, %c0_26, %c0_27] : memref<16x8x128xf32, #tpu.memory_space<vmem>>, vector<1x8x128xf32>
    %87 = vector.shape_cast %86 : vector<1x8x128xf32> to vector<8x128xf32>
    %88 = vector.shape_cast %85 : vector<8x128xf32> to vector<1x8x128xf32>
    tpu.vector_store %arg9[%c1_25, %c0_26, %c0_27], %88 {strides = array<i32>} : memref<16x8x128xf32, #tpu.memory_space<vmem>>, vector<1x8x128xf32>,
    %c2 = arith.constant 2 : index
    %c0_28 = arith.constant 0 : index
    %c0_29 = arith.constant 0 : index
    %89 = vector.load %arg1[%c2, %c0_28, %c0_29] : memref<16x8x512xf32, #tpu.memory_space<vmem>>, vector<1x8x512xf32>
    %90 = vector.shape_cast %89 : vector<1x8x512xf32> to vector<8x512xf32>
    %91 = arith.truncf %78 : vector<8x128xf32> to vector<8x128xbf16>
    %cst_30 = arith.constant dense<0.000000e+00> : vector<8x512xf32>
    %92 = tpu.matmul %91, %3, %cst_30 {dimension_numbers = #tpu.dot_dimension_numbers<[1], [0], [0], [1], [0, 0, 1, 1], [], []>} : vector<8x128xbf16>, vector<128x512xbf16>, vector<8x512xf32> -> vector<8x512xf32>
    %93 = arith.addf %90, %92 : vector<8x512xf32>
    %94 = vector.extract_strided_slice %93 {offsets = [0, 0], sizes = [8, 128], strides = [1, 1]} : vector<8x512xf32> to vector<8x128xf32>
    %95 = arith.negf %94 : vector<8x128xf32>
    %96 = math.exp %95 : vector<8x128xf32>
    %cst_31 = arith.constant 1.000000e+00 : f32
    %97 = vector.broadcast %cst_31 : f32 to vector<8x128xf32>
    %98 = arith.addf %97, %96 : vector<8x128xf32>
    %99 = arith.divf %97, %98 : vector<8x128xf32>
    %100 = vector.extract_strided_slice %93 {offsets = [0, 128], sizes = [8, 128], strides = [1, 1]} : vector<8x512xf32> to vector<8x128xf32>
    %101 = arith.negf %100 : vector<8x128xf32>
    %102 = math.exp %101 : vector<8x128xf32>
    %cst_32 = arith.constant 1.000000e+00 : f32
    %103 = vector.broadcast %cst_32 : f32 to vector<8x128xf32>
    %104 = arith.addf %103, %102 : vector<8x128xf32>
    %105 = arith.divf %103, %104 : vector<8x128xf32>
    %106 = vector.extract_strided_slice %93 {offsets = [0, 256], sizes = [8, 128], strides = [1, 1]} : vector<8x512xf32> to vector<8x128xf32>
    %107 = math.tanh %106 : vector<8x128xf32>
    %108 = vector.extract_strided_slice %93 {offsets = [0, 384], sizes = [8, 128], strides = [1, 1]} : vector<8x512xf32> to vector<8x128xf32>
    %109 = arith.negf %108 : vector<8x128xf32>
    %110 = math.exp %109 : vector<8x128xf32>
    %cst_33 = arith.constant 1.000000e+00 : f32
    %111 = vector.broadcast %cst_33 : f32 to vector<8x128xf32>
    %112 = arith.addf %111, %110 : vector<8x128xf32>
    %113 = arith.divf %111, %112 : vector<8x128xf32>
    %114 = arith.mulf %105, %76 : vector<8x128xf32>
    %115 = arith.mulf %99, %107 : vector<8x128xf32>
    %116 = arith.addf %114, %115 : vector<8x128xf32>
    %117 = math.tanh %116 : vector<8x128xf32>
    %118 = arith.mulf %113, %117 : vector<8x128xf32>
    %cst_34 = arith.constant 2.000000e+00 : f32
    %119 = arith.addf %6, %cst_34 : f32
    %120 = vector.broadcast %119 : f32 to vector<8x1xf32>
    %121 = arith.cmpf ogt, %4, %120 : vector<8x1xf32>
    %122 = arith.extui %121 : vector<8x1xi1> to vector<8x1xi32>
    %123 = arith.sitofp %122 : vector<8x1xi32> to vector<8x1xf32>
    %124 = vector.broadcast %123 : vector<8x1xf32> to vector<8x128xf32>
    %125 = arith.mulf %118, %124 : vector<8x128xf32>
    %c2_35 = arith.constant 2 : index
    %c0_36 = arith.constant 0 : index
    %c0_37 = arith.constant 0 : index
    %126 = vector.load %arg9[%c2_35, %c0_36, %c0_37] : memref<16x8x128xf32, #tpu.memory_space<vmem>>, vector<1x8x128xf32>
    %127 = vector.shape_cast %126 : vector<1x8x128xf32> to vector<8x128xf32>
    %128 = vector.shape_cast %125 : vector<8x128xf32> to vector<1x8x128xf32>
    tpu.vector_store %arg9[%c2_35, %c0_36, %c0_37], %128 {strides = array<i32>} : memref<16x8x128xf32, #tpu.memory_space<vmem>>, vector<1x8x128xf32>,
    %c3 = arith.constant 3 : index
    %c0_38 = arith.constant 0 : index
    %c0_39 = arith.constant 0 : index
    %129 = vector.load %arg1[%c3, %c0_38, %c0_39] : memref<16x8x512xf32, #tpu.memory_space<vmem>>, vector<1x8x512xf32>
    %130 = vector.shape_cast %129 : vector<1x8x512xf32> to vector<8x512xf32>
    %131 = arith.truncf %118 : vector<8x128xf32> to vector<8x128xbf16>
    %cst_40 = arith.constant dense<0.000000e+00> : vector<8x512xf32>
    %132 = tpu.matmul %131, %3, %cst_40 {dimension_numbers = #tpu.dot_dimension_numbers<[1], [0], [0], [1], [0, 0, 1, 1], [], []>} : vector<8x128xbf16>, vector<128x512xbf16>, vector<8x512xf32> -> vector<8x512xf32>
    %133 = arith.addf %130, %132 : vector<8x512xf32>
    %134 = vector.extract_strided_slice %133 {offsets = [0, 0], sizes = [8, 128], strides = [1, 1]} : vector<8x512xf32> to vector<8x128xf32>
    %135 = arith.negf %134 : vector<8x128xf32>
    %136 = math.exp %135 : vector<8x128xf32>
    %cst_41 = arith.constant 1.000000e+00 : f32
    %137 = vector.broadcast %cst_41 : f32 to vector<8x128xf32>
    %138 = arith.addf %137, %136 : vector<8x128xf32>
    %139 = arith.divf %137, %138 : vector<8x128xf32>
    %140 = vector.extract_strided_slice %133 {offsets = [0, 128], sizes = [8, 128], strides = [1, 1]} : vector<8x512xf32> to vector<8x128xf32>
    %141 = arith.negf %140 : vector<8x128xf32>
    %142 = math.exp %141 : vector<8x128xf32>
    %cst_42 = arith.constant 1.000000e+00 : f32
    %143 = vector.broadcast %cst_42 : f32 to vector<8x128xf32>
    %144 = arith.addf %143, %142 : vector<8x128xf32>
    %145 = arith.divf %143, %144 : vector<8x128xf32>
    %146 = vector.extract_strided_slice %133 {offsets = [0, 256], sizes = [8, 128], strides = [1, 1]} : vector<8x512xf32> to vector<8x128xf32>
    %147 = math.tanh %146 : vector<8x128xf32>
    %148 = vector.extract_strided_slice %133 {offsets = [0, 384], sizes = [8, 128], strides = [1, 1]} : vector<8x512xf32> to vector<8x128xf32>
    %149 = arith.negf %148 : vector<8x128xf32>
    %150 = math.exp %149 : vector<8x128xf32>
    %cst_43 = arith.constant 1.000000e+00 : f32
    %151 = vector.broadcast %cst_43 : f32 to vector<8x128xf32>
    %152 = arith.addf %151, %150 : vector<8x128xf32>
    %153 = arith.divf %151, %152 : vector<8x128xf32>
    %154 = arith.mulf %145, %116 : vector<8x128xf32>
    %155 = arith.mulf %139, %147 : vector<8x128xf32>
    %156 = arith.addf %154, %155 : vector<8x128xf32>
    %157 = math.tanh %156 : vector<8x128xf32>
    %158 = arith.mulf %153, %157 : vector<8x128xf32>
    %cst_44 = arith.constant 3.000000e+00 : f32
    %159 = arith.addf %6, %cst_44 : f32
    %160 = vector.broadcast %159 : f32 to vector<8x1xf32>
    %161 = arith.cmpf ogt, %4, %160 : vector<8x1xf32>
    %162 = arith.extui %161 : vector<8x1xi1> to vector<8x1xi32>
    %163 = arith.sitofp %162 : vector<8x1xi32> to vector<8x1xf32>
    %164 = vector.broadcast %163 : vector<8x1xf32> to vector<8x128xf32>
    %165 = arith.mulf %158, %164 : vector<8x128xf32>
    %c3_45 = arith.constant 3 : index
    %c0_46 = arith.constant 0 : index
    %c0_47 = arith.constant 0 : index
    %166 = vector.load %arg9[%c3_45, %c0_46, %c0_47] : memref<16x8x128xf32, #tpu.memory_space<vmem>>, vector<1x8x128xf32>
    %167 = vector.shape_cast %166 : vector<1x8x128xf32> to vector<8x128xf32>
    %168 = vector.shape_cast %165 : vector<8x128xf32> to vector<1x8x128xf32>
    tpu.vector_store %arg9[%c3_45, %c0_46, %c0_47], %168 {strides = array<i32>} : memref<16x8x128xf32, #tpu.memory_space<vmem>>, vector<1x8x128xf32>,
    %c4 = arith.constant 4 : index
    %c0_48 = arith.constant 0 : index
    %c0_49 = arith.constant 0 : index
    %169 = vector.load %arg1[%c4, %c0_48, %c0_49] : memref<16x8x512xf32, #tpu.memory_space<vmem>>, vector<1x8x512xf32>
    %170 = vector.shape_cast %169 : vector<1x8x512xf32> to vector<8x512xf32>
    %171 = arith.truncf %158 : vector<8x128xf32> to vector<8x128xbf16>
    %cst_50 = arith.constant dense<0.000000e+00> : vector<8x512xf32>
    %172 = tpu.matmul %171, %3, %cst_50 {dimension_numbers = #tpu.dot_dimension_numbers<[1], [0], [0], [1], [0, 0, 1, 1], [], []>} : vector<8x128xbf16>, vector<128x512xbf16>, vector<8x512xf32> -> vector<8x512xf32>
    %173 = arith.addf %170, %172 : vector<8x512xf32>
    %174 = vector.extract_strided_slice %173 {offsets = [0, 0], sizes = [8, 128], strides = [1, 1]} : vector<8x512xf32> to vector<8x128xf32>
    %175 = arith.negf %174 : vector<8x128xf32>
    %176 = math.exp %175 : vector<8x128xf32>
    %cst_51 = arith.constant 1.000000e+00 : f32
    %177 = vector.broadcast %cst_51 : f32 to vector<8x128xf32>
    %178 = arith.addf %177, %176 : vector<8x128xf32>
    %179 = arith.divf %177, %178 : vector<8x128xf32>
    %180 = vector.extract_strided_slice %173 {offsets = [0, 128], sizes = [8, 128], strides = [1, 1]} : vector<8x512xf32> to vector<8x128xf32>
    %181 = arith.negf %180 : vector<8x128xf32>
    %182 = math.exp %181 : vector<8x128xf32>
    %cst_52 = arith.constant 1.000000e+00 : f32
    %183 = vector.broadcast %cst_52 : f32 to vector<8x128xf32>
    %184 = arith.addf %183, %182 : vector<8x128xf32>
    %185 = arith.divf %183, %184 : vector<8x128xf32>
    %186 = vector.extract_strided_slice %173 {offsets = [0, 256], sizes = [8, 128], strides = [1, 1]} : vector<8x512xf32> to vector<8x128xf32>
    %187 = math.tanh %186 : vector<8x128xf32>
    %188 = vector.extract_strided_slice %173 {offsets = [0, 384], sizes = [8, 128], strides = [1, 1]} : vector<8x512xf32> to vector<8x128xf32>
    %189 = arith.negf %188 : vector<8x128xf32>
    %190 = math.exp %189 : vector<8x128xf32>
    %cst_53 = arith.constant 1.000000e+00 : f32
    %191 = vector.broadcast %cst_53 : f32 to vector<8x128xf32>
    %192 = arith.addf %191, %190 : vector<8x128xf32>
    %193 = arith.divf %191, %192 : vector<8x128xf32>
    %194 = arith.mulf %185, %156 : vector<8x128xf32>
    %195 = arith.mulf %179, %187 : vector<8x128xf32>
    %196 = arith.addf %194, %195 : vector<8x128xf32>
    %197 = math.tanh %196 : vector<8x128xf32>
    %198 = arith.mulf %193, %197 : vector<8x128xf32>
    %cst_54 = arith.constant 4.000000e+00 : f32
    %199 = arith.addf %6, %cst_54 : f32
    %200 = vector.broadcast %199 : f32 to vector<8x1xf32>
    %201 = arith.cmpf ogt, %4, %200 : vector<8x1xf32>
    %202 = arith.extui %201 : vector<8x1xi1> to vector<8x1xi32>
    %203 = arith.sitofp %202 : vector<8x1xi32> to vector<8x1xf32>
    %204 = vector.broadcast %203 : vector<8x1xf32> to vector<8x128xf32>
    %205 = arith.mulf %198, %204 : vector<8x128xf32>
    %c4_55 = arith.constant 4 : index
    %c0_56 = arith.constant 0 : index
    %c0_57 = arith.constant 0 : index
    %206 = vector.load %arg9[%c4_55, %c0_56, %c0_57] : memref<16x8x128xf32, #tpu.memory_space<vmem>>, vector<1x8x128xf32>
    %207 = vector.shape_cast %206 : vector<1x8x128xf32> to vector<8x128xf32>
    %208 = vector.shape_cast %205 : vector<8x128xf32> to vector<1x8x128xf32>
    tpu.vector_store %arg9[%c4_55, %c0_56, %c0_57], %208 {strides = array<i32>} : memref<16x8x128xf32, #tpu.memory_space<vmem>>, vector<1x8x128xf32>,
    %c5 = arith.constant 5 : index
    %c0_58 = arith.constant 0 : index
    %c0_59 = arith.constant 0 : index
    %209 = vector.load %arg1[%c5, %c0_58, %c0_59] : memref<16x8x512xf32, #tpu.memory_space<vmem>>, vector<1x8x512xf32>
    %210 = vector.shape_cast %209 : vector<1x8x512xf32> to vector<8x512xf32>
    %211 = arith.truncf %198 : vector<8x128xf32> to vector<8x128xbf16>
    %cst_60 = arith.constant dense<0.000000e+00> : vector<8x512xf32>
    %212 = tpu.matmul %211, %3, %cst_60 {dimension_numbers = #tpu.dot_dimension_numbers<[1], [0], [0], [1], [0, 0, 1, 1], [], []>} : vector<8x128xbf16>, vector<128x512xbf16>, vector<8x512xf32> -> vector<8x512xf32>
    %213 = arith.addf %210, %212 : vector<8x512xf32>
    %214 = vector.extract_strided_slice %213 {offsets = [0, 0], sizes = [8, 128], strides = [1, 1]} : vector<8x512xf32> to vector<8x128xf32>
    %215 = arith.negf %214 : vector<8x128xf32>
    %216 = math.exp %215 : vector<8x128xf32>
    %cst_61 = arith.constant 1.000000e+00 : f32
    %217 = vector.broadcast %cst_61 : f32 to vector<8x128xf32>
    %218 = arith.addf %217, %216 : vector<8x128xf32>
    %219 = arith.divf %217, %218 : vector<8x128xf32>
    %220 = vector.extract_strided_slice %213 {offsets = [0, 128], sizes = [8, 128], strides = [1, 1]} : vector<8x512xf32> to vector<8x128xf32>
    %221 = arith.negf %220 : vector<8x128xf32>
    %222 = math.exp %221 : vector<8x128xf32>
    %cst_62 = arith.constant 1.000000e+00 : f32
    %223 = vector.broadcast %cst_62 : f32 to vector<8x128xf32>
    %224 = arith.addf %223, %222 : vector<8x128xf32>
    %225 = arith.divf %223, %224 : vector<8x128xf32>
    %226 = vector.extract_strided_slice %213 {offsets = [0, 256], sizes = [8, 128], strides = [1, 1]} : vector<8x512xf32> to vector<8x128xf32>
    %227 = math.tanh %226 : vector<8x128xf32>
    %228 = vector.extract_strided_slice %213 {offsets = [0, 384], sizes = [8, 128], strides = [1, 1]} : vector<8x512xf32> to vector<8x128xf32>
    %229 = arith.negf %228 : vector<8x128xf32>
    %230 = math.exp %229 : vector<8x128xf32>
    %cst_63 = arith.constant 1.000000e+00 : f32
    %231 = vector.broadcast %cst_63 : f32 to vector<8x128xf32>
    %232 = arith.addf %231, %230 : vector<8x128xf32>
    %233 = arith.divf %231, %232 : vector<8x128xf32>
    %234 = arith.mulf %225, %196 : vector<8x128xf32>
    %235 = arith.mulf %219, %227 : vector<8x128xf32>
    %236 = arith.addf %234, %235 : vector<8x128xf32>
    %237 = math.tanh %236 : vector<8x128xf32>
    %238 = arith.mulf %233, %237 : vector<8x128xf32>
    %cst_64 = arith.constant 5.000000e+00 : f32
    %239 = arith.addf %6, %cst_64 : f32
    %240 = vector.broadcast %239 : f32 to vector<8x1xf32>
    %241 = arith.cmpf ogt, %4, %240 : vector<8x1xf32>
    %242 = arith.extui %241 : vector<8x1xi1> to vector<8x1xi32>
    %243 = arith.sitofp %242 : vector<8x1xi32> to vector<8x1xf32>
    %244 = vector.broadcast %243 : vector<8x1xf32> to vector<8x128xf32>
    %245 = arith.mulf %238, %244 : vector<8x128xf32>
    %c5_65 = arith.constant 5 : index
    %c0_66 = arith.constant 0 : index
    %c0_67 = arith.constant 0 : index
    %246 = vector.load %arg9[%c5_65, %c0_66, %c0_67] : memref<16x8x128xf32, #tpu.memory_space<vmem>>, vector<1x8x128xf32>
    %247 = vector.shape_cast %246 : vector<1x8x128xf32> to vector<8x128xf32>
    %248 = vector.shape_cast %245 : vector<8x128xf32> to vector<1x8x128xf32>
    tpu.vector_store %arg9[%c5_65, %c0_66, %c0_67], %248 {strides = array<i32>} : memref<16x8x128xf32, #tpu.memory_space<vmem>>, vector<1x8x128xf32>,
    %c6 = arith.constant 6 : index
    %c0_68 = arith.constant 0 : index
    %c0_69 = arith.constant 0 : index
    %249 = vector.load %arg1[%c6, %c0_68, %c0_69] : memref<16x8x512xf32, #tpu.memory_space<vmem>>, vector<1x8x512xf32>
    %250 = vector.shape_cast %249 : vector<1x8x512xf32> to vector<8x512xf32>
    %251 = arith.truncf %238 : vector<8x128xf32> to vector<8x128xbf16>
    %cst_70 = arith.constant dense<0.000000e+00> : vector<8x512xf32>
    %252 = tpu.matmul %251, %3, %cst_70 {dimension_numbers = #tpu.dot_dimension_numbers<[1], [0], [0], [1], [0, 0, 1, 1], [], []>} : vector<8x128xbf16>, vector<128x512xbf16>, vector<8x512xf32> -> vector<8x512xf32>
    %253 = arith.addf %250, %252 : vector<8x512xf32>
    %254 = vector.extract_strided_slice %253 {offsets = [0, 0], sizes = [8, 128], strides = [1, 1]} : vector<8x512xf32> to vector<8x128xf32>
    %255 = arith.negf %254 : vector<8x128xf32>
    %256 = math.exp %255 : vector<8x128xf32>
    %cst_71 = arith.constant 1.000000e+00 : f32
    %257 = vector.broadcast %cst_71 : f32 to vector<8x128xf32>
    %258 = arith.addf %257, %256 : vector<8x128xf32>
    %259 = arith.divf %257, %258 : vector<8x128xf32>
    %260 = vector.extract_strided_slice %253 {offsets = [0, 128], sizes = [8, 128], strides = [1, 1]} : vector<8x512xf32> to vector<8x128xf32>
    %261 = arith.negf %260 : vector<8x128xf32>
    %262 = math.exp %261 : vector<8x128xf32>
    %cst_72 = arith.constant 1.000000e+00 : f32
    %263 = vector.broadcast %cst_72 : f32 to vector<8x128xf32>
    %264 = arith.addf %263, %262 : vector<8x128xf32>
    %265 = arith.divf %263, %264 : vector<8x128xf32>
    %266 = vector.extract_strided_slice %253 {offsets = [0, 256], sizes = [8, 128], strides = [1, 1]} : vector<8x512xf32> to vector<8x128xf32>
    %267 = math.tanh %266 : vector<8x128xf32>
    %268 = vector.extract_strided_slice %253 {offsets = [0, 384], sizes = [8, 128], strides = [1, 1]} : vector<8x512xf32> to vector<8x128xf32>
    %269 = arith.negf %268 : vector<8x128xf32>
    %270 = math.exp %269 : vector<8x128xf32>
    %cst_73 = arith.constant 1.000000e+00 : f32
    %271 = vector.broadcast %cst_73 : f32 to vector<8x128xf32>
    %272 = arith.addf %271, %270 : vector<8x128xf32>
    %273 = arith.divf %271, %272 : vector<8x128xf32>
    %274 = arith.mulf %265, %236 : vector<8x128xf32>
    %275 = arith.mulf %259, %267 : vector<8x128xf32>
    %276 = arith.addf %274, %275 : vector<8x128xf32>
    %277 = math.tanh %276 : vector<8x128xf32>
    %278 = arith.mulf %273, %277 : vector<8x128xf32>
    %cst_74 = arith.constant 6.000000e+00 : f32
    %279 = arith.addf %6, %cst_74 : f32
    %280 = vector.broadcast %279 : f32 to vector<8x1xf32>
    %281 = arith.cmpf ogt, %4, %280 : vector<8x1xf32>
    %282 = arith.extui %281 : vector<8x1xi1> to vector<8x1xi32>
    %283 = arith.sitofp %282 : vector<8x1xi32> to vector<8x1xf32>
    %284 = vector.broadcast %283 : vector<8x1xf32> to vector<8x128xf32>
    %285 = arith.mulf %278, %284 : vector<8x128xf32>
    %c6_75 = arith.constant 6 : index
    %c0_76 = arith.constant 0 : index
    %c0_77 = arith.constant 0 : index
    %286 = vector.load %arg9[%c6_75, %c0_76, %c0_77] : memref<16x8x128xf32, #tpu.memory_space<vmem>>, vector<1x8x128xf32>
    %287 = vector.shape_cast %286 : vector<1x8x128xf32> to vector<8x128xf32>
    %288 = vector.shape_cast %285 : vector<8x128xf32> to vector<1x8x128xf32>
    tpu.vector_store %arg9[%c6_75, %c0_76, %c0_77], %288 {strides = array<i32>} : memref<16x8x128xf32, #tpu.memory_space<vmem>>, vector<1x8x128xf32>,
    %c7 = arith.constant 7 : index
    %c0_78 = arith.constant 0 : index
    %c0_79 = arith.constant 0 : index
    %289 = vector.load %arg1[%c7, %c0_78, %c0_79] : memref<16x8x512xf32, #tpu.memory_space<vmem>>, vector<1x8x512xf32>
    %290 = vector.shape_cast %289 : vector<1x8x512xf32> to vector<8x512xf32>
    %291 = arith.truncf %278 : vector<8x128xf32> to vector<8x128xbf16>
    %cst_80 = arith.constant dense<0.000000e+00> : vector<8x512xf32>
    %292 = tpu.matmul %291, %3, %cst_80 {dimension_numbers = #tpu.dot_dimension_numbers<[1], [0], [0], [1], [0, 0, 1, 1], [], []>} : vector<8x128xbf16>, vector<128x512xbf16>, vector<8x512xf32> -> vector<8x512xf32>
    %293 = arith.addf %290, %292 : vector<8x512xf32>
    %294 = vector.extract_strided_slice %293 {offsets = [0, 0], sizes = [8, 128], strides = [1, 1]} : vector<8x512xf32> to vector<8x128xf32>
    %295 = arith.negf %294 : vector<8x128xf32>
    %296 = math.exp %295 : vector<8x128xf32>
    %cst_81 = arith.constant 1.000000e+00 : f32
    %297 = vector.broadcast %cst_81 : f32 to vector<8x128xf32>
    %298 = arith.addf %297, %296 : vector<8x128xf32>
    %299 = arith.divf %297, %298 : vector<8x128xf32>
    %300 = vector.extract_strided_slice %293 {offsets = [0, 128], sizes = [8, 128], strides = [1, 1]} : vector<8x512xf32> to vector<8x128xf32>
    %301 = arith.negf %300 : vector<8x128xf32>
    %302 = math.exp %301 : vector<8x128xf32>
    %cst_82 = arith.constant 1.000000e+00 : f32
    %303 = vector.broadcast %cst_82 : f32 to vector<8x128xf32>
    %304 = arith.addf %303, %302 : vector<8x128xf32>
    %305 = arith.divf %303, %304 : vector<8x128xf32>
    %306 = vector.extract_strided_slice %293 {offsets = [0, 256], sizes = [8, 128], strides = [1, 1]} : vector<8x512xf32> to vector<8x128xf32>
    %307 = math.tanh %306 : vector<8x128xf32>
    %308 = vector.extract_strided_slice %293 {offsets = [0, 384], sizes = [8, 128], strides = [1, 1]} : vector<8x512xf32> to vector<8x128xf32>
    %309 = arith.negf %308 : vector<8x128xf32>
    %310 = math.exp %309 : vector<8x128xf32>
    %cst_83 = arith.constant 1.000000e+00 : f32
    %311 = vector.broadcast %cst_83 : f32 to vector<8x128xf32>
    %312 = arith.addf %311, %310 : vector<8x128xf32>
    %313 = arith.divf %311, %312 : vector<8x128xf32>
    %314 = arith.mulf %305, %276 : vector<8x128xf32>
    %315 = arith.mulf %299, %307 : vector<8x128xf32>
    %316 = arith.addf %314, %315 : vector<8x128xf32>
    %317 = math.tanh %316 : vector<8x128xf32>
    %318 = arith.mulf %313, %317 : vector<8x128xf32>
    %cst_84 = arith.constant 7.000000e+00 : f32
    %319 = arith.addf %6, %cst_84 : f32
    %320 = vector.broadcast %319 : f32 to vector<8x1xf32>
    %321 = arith.cmpf ogt, %4, %320 : vector<8x1xf32>
    %322 = arith.extui %321 : vector<8x1xi1> to vector<8x1xi32>
    %323 = arith.sitofp %322 : vector<8x1xi32> to vector<8x1xf32>
    %324 = vector.broadcast %323 : vector<8x1xf32> to vector<8x128xf32>
    %325 = arith.mulf %318, %324 : vector<8x128xf32>
    %c7_85 = arith.constant 7 : index
    %c0_86 = arith.constant 0 : index
    %c0_87 = arith.constant 0 : index
    %326 = vector.load %arg9[%c7_85, %c0_86, %c0_87] : memref<16x8x128xf32, #tpu.memory_space<vmem>>, vector<1x8x128xf32>
    %327 = vector.shape_cast %326 : vector<1x8x128xf32> to vector<8x128xf32>
    %328 = vector.shape_cast %325 : vector<8x128xf32> to vector<1x8x128xf32>
    tpu.vector_store %arg9[%c7_85, %c0_86, %c0_87], %328 {strides = array<i32>} : memref<16x8x128xf32, #tpu.memory_space<vmem>>, vector<1x8x128xf32>,
    %c8 = arith.constant 8 : index
    %c0_88 = arith.constant 0 : index
    %c0_89 = arith.constant 0 : index
    %329 = vector.load %arg1[%c8, %c0_88, %c0_89] : memref<16x8x512xf32, #tpu.memory_space<vmem>>, vector<1x8x512xf32>
    %330 = vector.shape_cast %329 : vector<1x8x512xf32> to vector<8x512xf32>
    %331 = arith.truncf %318 : vector<8x128xf32> to vector<8x128xbf16>
    %cst_90 = arith.constant dense<0.000000e+00> : vector<8x512xf32>
    %332 = tpu.matmul %331, %3, %cst_90 {dimension_numbers = #tpu.dot_dimension_numbers<[1], [0], [0], [1], [0, 0, 1, 1], [], []>} : vector<8x128xbf16>, vector<128x512xbf16>, vector<8x512xf32> -> vector<8x512xf32>
    %333 = arith.addf %330, %332 : vector<8x512xf32>
    %334 = vector.extract_strided_slice %333 {offsets = [0, 0], sizes = [8, 128], strides = [1, 1]} : vector<8x512xf32> to vector<8x128xf32>
    %335 = arith.negf %334 : vector<8x128xf32>
    %336 = math.exp %335 : vector<8x128xf32>
    %cst_91 = arith.constant 1.000000e+00 : f32
    %337 = vector.broadcast %cst_91 : f32 to vector<8x128xf32>
    %338 = arith.addf %337, %336 : vector<8x128xf32>
    %339 = arith.divf %337, %338 : vector<8x128xf32>
    %340 = vector.extract_strided_slice %333 {offsets = [0, 128], sizes = [8, 128], strides = [1, 1]} : vector<8x512xf32> to vector<8x128xf32>
    %341 = arith.negf %340 : vector<8x128xf32>
    %342 = math.exp %341 : vector<8x128xf32>
    %cst_92 = arith.constant 1.000000e+00 : f32
    %343 = vector.broadcast %cst_92 : f32 to vector<8x128xf32>
    %344 = arith.addf %343, %342 : vector<8x128xf32>
    %345 = arith.divf %343, %344 : vector<8x128xf32>
    %346 = vector.extract_strided_slice %333 {offsets = [0, 256], sizes = [8, 128], strides = [1, 1]} : vector<8x512xf32> to vector<8x128xf32>
    %347 = math.tanh %346 : vector<8x128xf32>
    %348 = vector.extract_strided_slice %333 {offsets = [0, 384], sizes = [8, 128], strides = [1, 1]} : vector<8x512xf32> to vector<8x128xf32>
    %349 = arith.negf %348 : vector<8x128xf32>
    %350 = math.exp %349 : vector<8x128xf32>
    %cst_93 = arith.constant 1.000000e+00 : f32
    %351 = vector.broadcast %cst_93 : f32 to vector<8x128xf32>
    %352 = arith.addf %351, %350 : vector<8x128xf32>
    %353 = arith.divf %351, %352 : vector<8x128xf32>
    %354 = arith.mulf %345, %316 : vector<8x128xf32>
    %355 = arith.mulf %339, %347 : vector<8x128xf32>
    %356 = arith.addf %354, %355 : vector<8x128xf32>
    %357 = math.tanh %356 : vector<8x128xf32>
    %358 = arith.mulf %353, %357 : vector<8x128xf32>
    %cst_94 = arith.constant 8.000000e+00 : f32
    %359 = arith.addf %6, %cst_94 : f32
    %360 = vector.broadcast %359 : f32 to vector<8x1xf32>
    %361 = arith.cmpf ogt, %4, %360 : vector<8x1xf32>
    %362 = arith.extui %361 : vector<8x1xi1> to vector<8x1xi32>
    %363 = arith.sitofp %362 : vector<8x1xi32> to vector<8x1xf32>
    %364 = vector.broadcast %363 : vector<8x1xf32> to vector<8x128xf32>
    %365 = arith.mulf %358, %364 : vector<8x128xf32>
    %c8_95 = arith.constant 8 : index
    %c0_96 = arith.constant 0 : index
    %c0_97 = arith.constant 0 : index
    %366 = vector.load %arg9[%c8_95, %c0_96, %c0_97] : memref<16x8x128xf32, #tpu.memory_space<vmem>>, vector<1x8x128xf32>
    %367 = vector.shape_cast %366 : vector<1x8x128xf32> to vector<8x128xf32>
    %368 = vector.shape_cast %365 : vector<8x128xf32> to vector<1x8x128xf32>
    tpu.vector_store %arg9[%c8_95, %c0_96, %c0_97], %368 {strides = array<i32>} : memref<16x8x128xf32, #tpu.memory_space<vmem>>, vector<1x8x128xf32>,
    %c9 = arith.constant 9 : index
    %c0_98 = arith.constant 0 : index
    %c0_99 = arith.constant 0 : index
    %369 = vector.load %arg1[%c9, %c0_98, %c0_99] : memref<16x8x512xf32, #tpu.memory_space<vmem>>, vector<1x8x512xf32>
    %370 = vector.shape_cast %369 : vector<1x8x512xf32> to vector<8x512xf32>
    %371 = arith.truncf %358 : vector<8x128xf32> to vector<8x128xbf16>
    %cst_100 = arith.constant dense<0.000000e+00> : vector<8x512xf32>
    %372 = tpu.matmul %371, %3, %cst_100 {dimension_numbers = #tpu.dot_dimension_numbers<[1], [0], [0], [1], [0, 0, 1, 1], [], []>} : vector<8x128xbf16>, vector<128x512xbf16>, vector<8x512xf32> -> vector<8x512xf32>
    %373 = arith.addf %370, %372 : vector<8x512xf32>
    %374 = vector.extract_strided_slice %373 {offsets = [0, 0], sizes = [8, 128], strides = [1, 1]} : vector<8x512xf32> to vector<8x128xf32>
    %375 = arith.negf %374 : vector<8x128xf32>
    %376 = math.exp %375 : vector<8x128xf32>
    %cst_101 = arith.constant 1.000000e+00 : f32
    %377 = vector.broadcast %cst_101 : f32 to vector<8x128xf32>
    %378 = arith.addf %377, %376 : vector<8x128xf32>
    %379 = arith.divf %377, %378 : vector<8x128xf32>
    %380 = vector.extract_strided_slice %373 {offsets = [0, 128], sizes = [8, 128], strides = [1, 1]} : vector<8x512xf32> to vector<8x128xf32>
    %381 = arith.negf %380 : vector<8x128xf32>
    %382 = math.exp %381 : vector<8x128xf32>
    %cst_102 = arith.constant 1.000000e+00 : f32
    %383 = vector.broadcast %cst_102 : f32 to vector<8x128xf32>
    %384 = arith.addf %383, %382 : vector<8x128xf32>
    %385 = arith.divf %383, %384 : vector<8x128xf32>
    %386 = vector.extract_strided_slice %373 {offsets = [0, 256], sizes = [8, 128], strides = [1, 1]} : vector<8x512xf32> to vector<8x128xf32>
    %387 = math.tanh %386 : vector<8x128xf32>
    %388 = vector.extract_strided_slice %373 {offsets = [0, 384], sizes = [8, 128], strides = [1, 1]} : vector<8x512xf32> to vector<8x128xf32>
    %389 = arith.negf %388 : vector<8x128xf32>
    %390 = math.exp %389 : vector<8x128xf32>
    %cst_103 = arith.constant 1.000000e+00 : f32
    %391 = vector.broadcast %cst_103 : f32 to vector<8x128xf32>
    %392 = arith.addf %391, %390 : vector<8x128xf32>
    %393 = arith.divf %391, %392 : vector<8x128xf32>
    %394 = arith.mulf %385, %356 : vector<8x128xf32>
    %395 = arith.mulf %379, %387 : vector<8x128xf32>
    %396 = arith.addf %394, %395 : vector<8x128xf32>
    %397 = math.tanh %396 : vector<8x128xf32>
    %398 = arith.mulf %393, %397 : vector<8x128xf32>
    %cst_104 = arith.constant 9.000000e+00 : f32
    %399 = arith.addf %6, %cst_104 : f32
    %400 = vector.broadcast %399 : f32 to vector<8x1xf32>
    %401 = arith.cmpf ogt, %4, %400 : vector<8x1xf32>
    %402 = arith.extui %401 : vector<8x1xi1> to vector<8x1xi32>
    %403 = arith.sitofp %402 : vector<8x1xi32> to vector<8x1xf32>
    %404 = vector.broadcast %403 : vector<8x1xf32> to vector<8x128xf32>
    %405 = arith.mulf %398, %404 : vector<8x128xf32>
    %c9_105 = arith.constant 9 : index
    %c0_106 = arith.constant 0 : index
    %c0_107 = arith.constant 0 : index
    %406 = vector.load %arg9[%c9_105, %c0_106, %c0_107] : memref<16x8x128xf32, #tpu.memory_space<vmem>>, vector<1x8x128xf32>
    %407 = vector.shape_cast %406 : vector<1x8x128xf32> to vector<8x128xf32>
    %408 = vector.shape_cast %405 : vector<8x128xf32> to vector<1x8x128xf32>
    tpu.vector_store %arg9[%c9_105, %c0_106, %c0_107], %408 {strides = array<i32>} : memref<16x8x128xf32, #tpu.memory_space<vmem>>, vector<1x8x128xf32>,
    %c10 = arith.constant 10 : index
    %c0_108 = arith.constant 0 : index
    %c0_109 = arith.constant 0 : index
    %409 = vector.load %arg1[%c10, %c0_108, %c0_109] : memref<16x8x512xf32, #tpu.memory_space<vmem>>, vector<1x8x512xf32>
    %410 = vector.shape_cast %409 : vector<1x8x512xf32> to vector<8x512xf32>
    %411 = arith.truncf %398 : vector<8x128xf32> to vector<8x128xbf16>
    %cst_110 = arith.constant dense<0.000000e+00> : vector<8x512xf32>
    %412 = tpu.matmul %411, %3, %cst_110 {dimension_numbers = #tpu.dot_dimension_numbers<[1], [0], [0], [1], [0, 0, 1, 1], [], []>} : vector<8x128xbf16>, vector<128x512xbf16>, vector<8x512xf32> -> vector<8x512xf32>
    %413 = arith.addf %410, %412 : vector<8x512xf32>
    %414 = vector.extract_strided_slice %413 {offsets = [0, 0], sizes = [8, 128], strides = [1, 1]} : vector<8x512xf32> to vector<8x128xf32>
    %415 = arith.negf %414 : vector<8x128xf32>
    %416 = math.exp %415 : vector<8x128xf32>
    %cst_111 = arith.constant 1.000000e+00 : f32
    %417 = vector.broadcast %cst_111 : f32 to vector<8x128xf32>
    %418 = arith.addf %417, %416 : vector<8x128xf32>
    %419 = arith.divf %417, %418 : vector<8x128xf32>
    %420 = vector.extract_strided_slice %413 {offsets = [0, 128], sizes = [8, 128], strides = [1, 1]} : vector<8x512xf32> to vector<8x128xf32>
    %421 = arith.negf %420 : vector<8x128xf32>
    %422 = math.exp %421 : vector<8x128xf32>
    %cst_112 = arith.constant 1.000000e+00 : f32
    %423 = vector.broadcast %cst_112 : f32 to vector<8x128xf32>
    %424 = arith.addf %423, %422 : vector<8x128xf32>
    %425 = arith.divf %423, %424 : vector<8x128xf32>
    %426 = vector.extract_strided_slice %413 {offsets = [0, 256], sizes = [8, 128], strides = [1, 1]} : vector<8x512xf32> to vector<8x128xf32>
    %427 = math.tanh %426 : vector<8x128xf32>
    %428 = vector.extract_strided_slice %413 {offsets = [0, 384], sizes = [8, 128], strides = [1, 1]} : vector<8x512xf32> to vector<8x128xf32>
    %429 = arith.negf %428 : vector<8x128xf32>
    %430 = math.exp %429 : vector<8x128xf32>
    %cst_113 = arith.constant 1.000000e+00 : f32
    %431 = vector.broadcast %cst_113 : f32 to vector<8x128xf32>
    %432 = arith.addf %431, %430 : vector<8x128xf32>
    %433 = arith.divf %431, %432 : vector<8x128xf32>
    %434 = arith.mulf %425, %396 : vector<8x128xf32>
    %435 = arith.mulf %419, %427 : vector<8x128xf32>
    %436 = arith.addf %434, %435 : vector<8x128xf32>
    %437 = math.tanh %436 : vector<8x128xf32>
    %438 = arith.mulf %433, %437 : vector<8x128xf32>
    %cst_114 = arith.constant 1.000000e+01 : f32
    %439 = arith.addf %6, %cst_114 : f32
    %440 = vector.broadcast %439 : f32 to vector<8x1xf32>
    %441 = arith.cmpf ogt, %4, %440 : vector<8x1xf32>
    %442 = arith.extui %441 : vector<8x1xi1> to vector<8x1xi32>
    %443 = arith.sitofp %442 : vector<8x1xi32> to vector<8x1xf32>
    %444 = vector.broadcast %443 : vector<8x1xf32> to vector<8x128xf32>
    %445 = arith.mulf %438, %444 : vector<8x128xf32>
    %c10_115 = arith.constant 10 : index
    %c0_116 = arith.constant 0 : index
    %c0_117 = arith.constant 0 : index
    %446 = vector.load %arg9[%c10_115, %c0_116, %c0_117] : memref<16x8x128xf32, #tpu.memory_space<vmem>>, vector<1x8x128xf32>
    %447 = vector.shape_cast %446 : vector<1x8x128xf32> to vector<8x128xf32>
    %448 = vector.shape_cast %445 : vector<8x128xf32> to vector<1x8x128xf32>
    tpu.vector_store %arg9[%c10_115, %c0_116, %c0_117], %448 {strides = array<i32>} : memref<16x8x128xf32, #tpu.memory_space<vmem>>, vector<1x8x128xf32>,
    %c11 = arith.constant 11 : index
    %c0_118 = arith.constant 0 : index
    %c0_119 = arith.constant 0 : index
    %449 = vector.load %arg1[%c11, %c0_118, %c0_119] : memref<16x8x512xf32, #tpu.memory_space<vmem>>, vector<1x8x512xf32>
    %450 = vector.shape_cast %449 : vector<1x8x512xf32> to vector<8x512xf32>
    %451 = arith.truncf %438 : vector<8x128xf32> to vector<8x128xbf16>
    %cst_120 = arith.constant dense<0.000000e+00> : vector<8x512xf32>
    %452 = tpu.matmul %451, %3, %cst_120 {dimension_numbers = #tpu.dot_dimension_numbers<[1], [0], [0], [1], [0, 0, 1, 1], [], []>} : vector<8x128xbf16>, vector<128x512xbf16>, vector<8x512xf32> -> vector<8x512xf32>
    %453 = arith.addf %450, %452 : vector<8x512xf32>
    %454 = vector.extract_strided_slice %453 {offsets = [0, 0], sizes = [8, 128], strides = [1, 1]} : vector<8x512xf32> to vector<8x128xf32>
    %455 = arith.negf %454 : vector<8x128xf32>
    %456 = math.exp %455 : vector<8x128xf32>
    %cst_121 = arith.constant 1.000000e+00 : f32
    %457 = vector.broadcast %cst_121 : f32 to vector<8x128xf32>
    %458 = arith.addf %457, %456 : vector<8x128xf32>
    %459 = arith.divf %457, %458 : vector<8x128xf32>
    %460 = vector.extract_strided_slice %453 {offsets = [0, 128], sizes = [8, 128], strides = [1, 1]} : vector<8x512xf32> to vector<8x128xf32>
    %461 = arith.negf %460 : vector<8x128xf32>
    %462 = math.exp %461 : vector<8x128xf32>
    %cst_122 = arith.constant 1.000000e+00 : f32
    %463 = vector.broadcast %cst_122 : f32 to vector<8x128xf32>
    %464 = arith.addf %463, %462 : vector<8x128xf32>
    %465 = arith.divf %463, %464 : vector<8x128xf32>
    %466 = vector.extract_strided_slice %453 {offsets = [0, 256], sizes = [8, 128], strides = [1, 1]} : vector<8x512xf32> to vector<8x128xf32>
    %467 = math.tanh %466 : vector<8x128xf32>
    %468 = vector.extract_strided_slice %453 {offsets = [0, 384], sizes = [8, 128], strides = [1, 1]} : vector<8x512xf32> to vector<8x128xf32>
    %469 = arith.negf %468 : vector<8x128xf32>
    %470 = math.exp %469 : vector<8x128xf32>
    %cst_123 = arith.constant 1.000000e+00 : f32
    %471 = vector.broadcast %cst_123 : f32 to vector<8x128xf32>
    %472 = arith.addf %471, %470 : vector<8x128xf32>
    %473 = arith.divf %471, %472 : vector<8x128xf32>
    %474 = arith.mulf %465, %436 : vector<8x128xf32>
    %475 = arith.mulf %459, %467 : vector<8x128xf32>
    %476 = arith.addf %474, %475 : vector<8x128xf32>
    %477 = math.tanh %476 : vector<8x128xf32>
    %478 = arith.mulf %473, %477 : vector<8x128xf32>
    %cst_124 = arith.constant 1.100000e+01 : f32
    %479 = arith.addf %6, %cst_124 : f32
    %480 = vector.broadcast %479 : f32 to vector<8x1xf32>
    %481 = arith.cmpf ogt, %4, %480 : vector<8x1xf32>
    %482 = arith.extui %481 : vector<8x1xi1> to vector<8x1xi32>
    %483 = arith.sitofp %482 : vector<8x1xi32> to vector<8x1xf32>
    %484 = vector.broadcast %483 : vector<8x1xf32> to vector<8x128xf32>
    %485 = arith.mulf %478, %484 : vector<8x128xf32>
    %c11_125 = arith.constant 11 : index
    %c0_126 = arith.constant 0 : index
    %c0_127 = arith.constant 0 : index
    %486 = vector.load %arg9[%c11_125, %c0_126, %c0_127] : memref<16x8x128xf32, #tpu.memory_space<vmem>>, vector<1x8x128xf32>
    %487 = vector.shape_cast %486 : vector<1x8x128xf32> to vector<8x128xf32>
    %488 = vector.shape_cast %485 : vector<8x128xf32> to vector<1x8x128xf32>
    tpu.vector_store %arg9[%c11_125, %c0_126, %c0_127], %488 {strides = array<i32>} : memref<16x8x128xf32, #tpu.memory_space<vmem>>, vector<1x8x128xf32>,
    %c12 = arith.constant 12 : index
    %c0_128 = arith.constant 0 : index
    %c0_129 = arith.constant 0 : index
    %489 = vector.load %arg1[%c12, %c0_128, %c0_129] : memref<16x8x512xf32, #tpu.memory_space<vmem>>, vector<1x8x512xf32>
    %490 = vector.shape_cast %489 : vector<1x8x512xf32> to vector<8x512xf32>
    %491 = arith.truncf %478 : vector<8x128xf32> to vector<8x128xbf16>
    %cst_130 = arith.constant dense<0.000000e+00> : vector<8x512xf32>
    %492 = tpu.matmul %491, %3, %cst_130 {dimension_numbers = #tpu.dot_dimension_numbers<[1], [0], [0], [1], [0, 0, 1, 1], [], []>} : vector<8x128xbf16>, vector<128x512xbf16>, vector<8x512xf32> -> vector<8x512xf32>
    %493 = arith.addf %490, %492 : vector<8x512xf32>
    %494 = vector.extract_strided_slice %493 {offsets = [0, 0], sizes = [8, 128], strides = [1, 1]} : vector<8x512xf32> to vector<8x128xf32>
    %495 = arith.negf %494 : vector<8x128xf32>
    %496 = math.exp %495 : vector<8x128xf32>
    %cst_131 = arith.constant 1.000000e+00 : f32
    %497 = vector.broadcast %cst_131 : f32 to vector<8x128xf32>
    %498 = arith.addf %497, %496 : vector<8x128xf32>
    %499 = arith.divf %497, %498 : vector<8x128xf32>
    %500 = vector.extract_strided_slice %493 {offsets = [0, 128], sizes = [8, 128], strides = [1, 1]} : vector<8x512xf32> to vector<8x128xf32>
    %501 = arith.negf %500 : vector<8x128xf32>
    %502 = math.exp %501 : vector<8x128xf32>
    %cst_132 = arith.constant 1.000000e+00 : f32
    %503 = vector.broadcast %cst_132 : f32 to vector<8x128xf32>
    %504 = arith.addf %503, %502 : vector<8x128xf32>
    %505 = arith.divf %503, %504 : vector<8x128xf32>
    %506 = vector.extract_strided_slice %493 {offsets = [0, 256], sizes = [8, 128], strides = [1, 1]} : vector<8x512xf32> to vector<8x128xf32>
    %507 = math.tanh %506 : vector<8x128xf32>
    %508 = vector.extract_strided_slice %493 {offsets = [0, 384], sizes = [8, 128], strides = [1, 1]} : vector<8x512xf32> to vector<8x128xf32>
    %509 = arith.negf %508 : vector<8x128xf32>
    %510 = math.exp %509 : vector<8x128xf32>
    %cst_133 = arith.constant 1.000000e+00 : f32
    %511 = vector.broadcast %cst_133 : f32 to vector<8x128xf32>
    %512 = arith.addf %511, %510 : vector<8x128xf32>
    %513 = arith.divf %511, %512 : vector<8x128xf32>
    %514 = arith.mulf %505, %476 : vector<8x128xf32>
    %515 = arith.mulf %499, %507 : vector<8x128xf32>
    %516 = arith.addf %514, %515 : vector<8x128xf32>
    %517 = math.tanh %516 : vector<8x128xf32>
    %518 = arith.mulf %513, %517 : vector<8x128xf32>
    %cst_134 = arith.constant 1.200000e+01 : f32
    %519 = arith.addf %6, %cst_134 : f32
    %520 = vector.broadcast %519 : f32 to vector<8x1xf32>
    %521 = arith.cmpf ogt, %4, %520 : vector<8x1xf32>
    %522 = arith.extui %521 : vector<8x1xi1> to vector<8x1xi32>
    %523 = arith.sitofp %522 : vector<8x1xi32> to vector<8x1xf32>
    %524 = vector.broadcast %523 : vector<8x1xf32> to vector<8x128xf32>
    %525 = arith.mulf %518, %524 : vector<8x128xf32>
    %c12_135 = arith.constant 12 : index
    %c0_136 = arith.constant 0 : index
    %c0_137 = arith.constant 0 : index
    %526 = vector.load %arg9[%c12_135, %c0_136, %c0_137] : memref<16x8x128xf32, #tpu.memory_space<vmem>>, vector<1x8x128xf32>
    %527 = vector.shape_cast %526 : vector<1x8x128xf32> to vector<8x128xf32>
    %528 = vector.shape_cast %525 : vector<8x128xf32> to vector<1x8x128xf32>
    tpu.vector_store %arg9[%c12_135, %c0_136, %c0_137], %528 {strides = array<i32>} : memref<16x8x128xf32, #tpu.memory_space<vmem>>, vector<1x8x128xf32>,
    %c13 = arith.constant 13 : index
    %c0_138 = arith.constant 0 : index
    %c0_139 = arith.constant 0 : index
    %529 = vector.load %arg1[%c13, %c0_138, %c0_139] : memref<16x8x512xf32, #tpu.memory_space<vmem>>, vector<1x8x512xf32>
    %530 = vector.shape_cast %529 : vector<1x8x512xf32> to vector<8x512xf32>
    %531 = arith.truncf %518 : vector<8x128xf32> to vector<8x128xbf16>
    %cst_140 = arith.constant dense<0.000000e+00> : vector<8x512xf32>
    %532 = tpu.matmul %531, %3, %cst_140 {dimension_numbers = #tpu.dot_dimension_numbers<[1], [0], [0], [1], [0, 0, 1, 1], [], []>} : vector<8x128xbf16>, vector<128x512xbf16>, vector<8x512xf32> -> vector<8x512xf32>
    %533 = arith.addf %530, %532 : vector<8x512xf32>
    %534 = vector.extract_strided_slice %533 {offsets = [0, 0], sizes = [8, 128], strides = [1, 1]} : vector<8x512xf32> to vector<8x128xf32>
    %535 = arith.negf %534 : vector<8x128xf32>
    %536 = math.exp %535 : vector<8x128xf32>
    %cst_141 = arith.constant 1.000000e+00 : f32
    %537 = vector.broadcast %cst_141 : f32 to vector<8x128xf32>
    %538 = arith.addf %537, %536 : vector<8x128xf32>
    %539 = arith.divf %537, %538 : vector<8x128xf32>
    %540 = vector.extract_strided_slice %533 {offsets = [0, 128], sizes = [8, 128], strides = [1, 1]} : vector<8x512xf32> to vector<8x128xf32>
    %541 = arith.negf %540 : vector<8x128xf32>
    %542 = math.exp %541 : vector<8x128xf32>
    %cst_142 = arith.constant 1.000000e+00 : f32
    %543 = vector.broadcast %cst_142 : f32 to vector<8x128xf32>
    %544 = arith.addf %543, %542 : vector<8x128xf32>
    %545 = arith.divf %543, %544 : vector<8x128xf32>
    %546 = vector.extract_strided_slice %533 {offsets = [0, 256], sizes = [8, 128], strides = [1, 1]} : vector<8x512xf32> to vector<8x128xf32>
    %547 = math.tanh %546 : vector<8x128xf32>
    %548 = vector.extract_strided_slice %533 {offsets = [0, 384], sizes = [8, 128], strides = [1, 1]} : vector<8x512xf32> to vector<8x128xf32>
    %549 = arith.negf %548 : vector<8x128xf32>
    %550 = math.exp %549 : vector<8x128xf32>
    %cst_143 = arith.constant 1.000000e+00 : f32
    %551 = vector.broadcast %cst_143 : f32 to vector<8x128xf32>
    %552 = arith.addf %551, %550 : vector<8x128xf32>
    %553 = arith.divf %551, %552 : vector<8x128xf32>
    %554 = arith.mulf %545, %516 : vector<8x128xf32>
    %555 = arith.mulf %539, %547 : vector<8x128xf32>
    %556 = arith.addf %554, %555 : vector<8x128xf32>
    %557 = math.tanh %556 : vector<8x128xf32>
    %558 = arith.mulf %553, %557 : vector<8x128xf32>
    %cst_144 = arith.constant 1.300000e+01 : f32
    %559 = arith.addf %6, %cst_144 : f32
    %560 = vector.broadcast %559 : f32 to vector<8x1xf32>
    %561 = arith.cmpf ogt, %4, %560 : vector<8x1xf32>
    %562 = arith.extui %561 : vector<8x1xi1> to vector<8x1xi32>
    %563 = arith.sitofp %562 : vector<8x1xi32> to vector<8x1xf32>
    %564 = vector.broadcast %563 : vector<8x1xf32> to vector<8x128xf32>
    %565 = arith.mulf %558, %564 : vector<8x128xf32>
    %c13_145 = arith.constant 13 : index
    %c0_146 = arith.constant 0 : index
    %c0_147 = arith.constant 0 : index
    %566 = vector.load %arg9[%c13_145, %c0_146, %c0_147] : memref<16x8x128xf32, #tpu.memory_space<vmem>>, vector<1x8x128xf32>
    %567 = vector.shape_cast %566 : vector<1x8x128xf32> to vector<8x128xf32>
    %568 = vector.shape_cast %565 : vector<8x128xf32> to vector<1x8x128xf32>
    tpu.vector_store %arg9[%c13_145, %c0_146, %c0_147], %568 {strides = array<i32>} : memref<16x8x128xf32, #tpu.memory_space<vmem>>, vector<1x8x128xf32>,
    %c14 = arith.constant 14 : index
    %c0_148 = arith.constant 0 : index
    %c0_149 = arith.constant 0 : index
    %569 = vector.load %arg1[%c14, %c0_148, %c0_149] : memref<16x8x512xf32, #tpu.memory_space<vmem>>, vector<1x8x512xf32>
    %570 = vector.shape_cast %569 : vector<1x8x512xf32> to vector<8x512xf32>
    %571 = arith.truncf %558 : vector<8x128xf32> to vector<8x128xbf16>
    %cst_150 = arith.constant dense<0.000000e+00> : vector<8x512xf32>
    %572 = tpu.matmul %571, %3, %cst_150 {dimension_numbers = #tpu.dot_dimension_numbers<[1], [0], [0], [1], [0, 0, 1, 1], [], []>} : vector<8x128xbf16>, vector<128x512xbf16>, vector<8x512xf32> -> vector<8x512xf32>
    %573 = arith.addf %570, %572 : vector<8x512xf32>
    %574 = vector.extract_strided_slice %573 {offsets = [0, 0], sizes = [8, 128], strides = [1, 1]} : vector<8x512xf32> to vector<8x128xf32>
    %575 = arith.negf %574 : vector<8x128xf32>
    %576 = math.exp %575 : vector<8x128xf32>
    %cst_151 = arith.constant 1.000000e+00 : f32
    %577 = vector.broadcast %cst_151 : f32 to vector<8x128xf32>
    %578 = arith.addf %577, %576 : vector<8x128xf32>
    %579 = arith.divf %577, %578 : vector<8x128xf32>
    %580 = vector.extract_strided_slice %573 {offsets = [0, 128], sizes = [8, 128], strides = [1, 1]} : vector<8x512xf32> to vector<8x128xf32>
    %581 = arith.negf %580 : vector<8x128xf32>
    %582 = math.exp %581 : vector<8x128xf32>
    %cst_152 = arith.constant 1.000000e+00 : f32
    %583 = vector.broadcast %cst_152 : f32 to vector<8x128xf32>
    %584 = arith.addf %583, %582 : vector<8x128xf32>
    %585 = arith.divf %583, %584 : vector<8x128xf32>
    %586 = vector.extract_strided_slice %573 {offsets = [0, 256], sizes = [8, 128], strides = [1, 1]} : vector<8x512xf32> to vector<8x128xf32>
    %587 = math.tanh %586 : vector<8x128xf32>
    %588 = vector.extract_strided_slice %573 {offsets = [0, 384], sizes = [8, 128], strides = [1, 1]} : vector<8x512xf32> to vector<8x128xf32>
    %589 = arith.negf %588 : vector<8x128xf32>
    %590 = math.exp %589 : vector<8x128xf32>
    %cst_153 = arith.constant 1.000000e+00 : f32
    %591 = vector.broadcast %cst_153 : f32 to vector<8x128xf32>
    %592 = arith.addf %591, %590 : vector<8x128xf32>
    %593 = arith.divf %591, %592 : vector<8x128xf32>
    %594 = arith.mulf %585, %556 : vector<8x128xf32>
    %595 = arith.mulf %579, %587 : vector<8x128xf32>
    %596 = arith.addf %594, %595 : vector<8x128xf32>
    %597 = math.tanh %596 : vector<8x128xf32>
    %598 = arith.mulf %593, %597 : vector<8x128xf32>
    %cst_154 = arith.constant 1.400000e+01 : f32
    %599 = arith.addf %6, %cst_154 : f32
    %600 = vector.broadcast %599 : f32 to vector<8x1xf32>
    %601 = arith.cmpf ogt, %4, %600 : vector<8x1xf32>
    %602 = arith.extui %601 : vector<8x1xi1> to vector<8x1xi32>
    %603 = arith.sitofp %602 : vector<8x1xi32> to vector<8x1xf32>
    %604 = vector.broadcast %603 : vector<8x1xf32> to vector<8x128xf32>
    %605 = arith.mulf %598, %604 : vector<8x128xf32>
    %c14_155 = arith.constant 14 : index
    %c0_156 = arith.constant 0 : index
    %c0_157 = arith.constant 0 : index
    %606 = vector.load %arg9[%c14_155, %c0_156, %c0_157] : memref<16x8x128xf32, #tpu.memory_space<vmem>>, vector<1x8x128xf32>
    %607 = vector.shape_cast %606 : vector<1x8x128xf32> to vector<8x128xf32>
    %608 = vector.shape_cast %605 : vector<8x128xf32> to vector<1x8x128xf32>
    tpu.vector_store %arg9[%c14_155, %c0_156, %c0_157], %608 {strides = array<i32>} : memref<16x8x128xf32, #tpu.memory_space<vmem>>, vector<1x8x128xf32>,
    %c15 = arith.constant 15 : index
    %c0_158 = arith.constant 0 : index
    %c0_159 = arith.constant 0 : index
    %609 = vector.load %arg1[%c15, %c0_158, %c0_159] : memref<16x8x512xf32, #tpu.memory_space<vmem>>, vector<1x8x512xf32>
    %610 = vector.shape_cast %609 : vector<1x8x512xf32> to vector<8x512xf32>
    %611 = arith.truncf %598 : vector<8x128xf32> to vector<8x128xbf16>
    %cst_160 = arith.constant dense<0.000000e+00> : vector<8x512xf32>
    %612 = tpu.matmul %611, %3, %cst_160 {dimension_numbers = #tpu.dot_dimension_numbers<[1], [0], [0], [1], [0, 0, 1, 1], [], []>} : vector<8x128xbf16>, vector<128x512xbf16>, vector<8x512xf32> -> vector<8x512xf32>
    %613 = arith.addf %610, %612 : vector<8x512xf32>
    %614 = vector.extract_strided_slice %613 {offsets = [0, 0], sizes = [8, 128], strides = [1, 1]} : vector<8x512xf32> to vector<8x128xf32>
    %615 = arith.negf %614 : vector<8x128xf32>
    %616 = math.exp %615 : vector<8x128xf32>
    %cst_161 = arith.constant 1.000000e+00 : f32
    %617 = vector.broadcast %cst_161 : f32 to vector<8x128xf32>
    %618 = arith.addf %617, %616 : vector<8x128xf32>
    %619 = arith.divf %617, %618 : vector<8x128xf32>
    %620 = vector.extract_strided_slice %613 {offsets = [0, 128], sizes = [8, 128], strides = [1, 1]} : vector<8x512xf32> to vector<8x128xf32>
    %621 = arith.negf %620 : vector<8x128xf32>
    %622 = math.exp %621 : vector<8x128xf32>
    %cst_162 = arith.constant 1.000000e+00 : f32
    %623 = vector.broadcast %cst_162 : f32 to vector<8x128xf32>
    %624 = arith.addf %623, %622 : vector<8x128xf32>
    %625 = arith.divf %623, %624 : vector<8x128xf32>
    %626 = vector.extract_strided_slice %613 {offsets = [0, 256], sizes = [8, 128], strides = [1, 1]} : vector<8x512xf32> to vector<8x128xf32>
    %627 = math.tanh %626 : vector<8x128xf32>
    %628 = vector.extract_strided_slice %613 {offsets = [0, 384], sizes = [8, 128], strides = [1, 1]} : vector<8x512xf32> to vector<8x128xf32>
    %629 = arith.negf %628 : vector<8x128xf32>
    %630 = math.exp %629 : vector<8x128xf32>
    %cst_163 = arith.constant 1.000000e+00 : f32
    %631 = vector.broadcast %cst_163 : f32 to vector<8x128xf32>
    %632 = arith.addf %631, %630 : vector<8x128xf32>
    %633 = arith.divf %631, %632 : vector<8x128xf32>
    %634 = arith.mulf %625, %596 : vector<8x128xf32>
    %635 = arith.mulf %619, %627 : vector<8x128xf32>
    %636 = arith.addf %634, %635 : vector<8x128xf32>
    %637 = math.tanh %636 : vector<8x128xf32>
    %638 = arith.mulf %633, %637 : vector<8x128xf32>
    %cst_164 = arith.constant 1.500000e+01 : f32
    %639 = arith.addf %6, %cst_164 : f32
    %640 = vector.broadcast %639 : f32 to vector<8x1xf32>
    %641 = arith.cmpf ogt, %4, %640 : vector<8x1xf32>
    %642 = arith.extui %641 : vector<8x1xi1> to vector<8x1xi32>
    %643 = arith.sitofp %642 : vector<8x1xi32> to vector<8x1xf32>
    %644 = vector.broadcast %643 : vector<8x1xf32> to vector<8x128xf32>
    %645 = arith.mulf %638, %644 : vector<8x128xf32>
    %c15_165 = arith.constant 15 : index
    %c0_166 = arith.constant 0 : index
    %c0_167 = arith.constant 0 : index
    %646 = vector.load %arg9[%c15_165, %c0_166, %c0_167] : memref<16x8x128xf32, #tpu.memory_space<vmem>>, vector<1x8x128xf32>
    %647 = vector.shape_cast %646 : vector<1x8x128xf32> to vector<8x128xf32>
    %648 = vector.shape_cast %645 : vector<8x128xf32> to vector<1x8x128xf32>
    tpu.vector_store %arg9[%c15_165, %c0_166, %c0_167], %648 {strides = array<i32>} : memref<16x8x128xf32, #tpu.memory_space<vmem>>, vector<1x8x128xf32>,
    %c0_168 = arith.constant 0 : index
    %c0_169 = arith.constant 0 : index
    %649 = vector.load %arg7[%c0_168, %c0_169] : memref<8x128xf32, #tpu.memory_space<vmem>>, vector<8x128xf32>
    tpu.vector_store %arg7[%c0_168, %c0_169], %638 {strides = array<i32>} : memref<8x128xf32, #tpu.memory_space<vmem>>, vector<8x128xf32>,
    %c0_170 = arith.constant 0 : index
    %c0_171 = arith.constant 0 : index
    %650 = vector.load %arg8[%c0_170, %c0_171] : memref<8x128xf32, #tpu.memory_space<vmem>>, vector<8x128xf32>
    tpu.vector_store %arg8[%c0_170, %c0_171], %636 {strides = array<i32>} : memref<8x128xf32, #tpu.memory_space<vmem>>, vector<8x128xf32>,
    %c0_172 = arith.constant 0 : index
    %c0_173 = arith.constant 0 : index
    %c0_174 = arith.constant 0 : index
    %651 = vector.load %arg9[%c0_172, %c0_173, %c0_174] : memref<16x8x128xf32, #tpu.memory_space<vmem>>, vector<16x8x128xf32>
    %652 = vector.shape_cast %651 : vector<16x8x128xf32> to vector<128x128xf32>
    %653 = arith.truncf %652 : vector<128x128xf32> to vector<128x128xbf16>
    %c0_175 = arith.constant 0 : index
    %c0_176 = arith.constant 0 : index
    %654 = vector.load %arg4[%c0_175, %c0_176] : memref<128x128xbf16, #tpu.memory_space<vmem>>, vector<128x128xbf16>
    %cst_177 = arith.constant dense<0.000000e+00> : vector<128x128xf32>
    %655 = tpu.matmul %653, %654, %cst_177 {dimension_numbers = #tpu.dot_dimension_numbers<[1], [0], [0], [1], [0, 0, 1, 1], [], []>} : vector<128x128xbf16>, vector<128x128xbf16>, vector<128x128xf32> -> vector<128x128xf32>
    %c0_178 = arith.constant 0 : index
    %c0_179 = arith.constant 0 : index
    %656 = vector.load %arg5[%c0_178, %c0_179] : memref<1x128xf32, #tpu.memory_space<vmem>>, vector<1x128xf32>
    %657 = vector.broadcast %656 : vector<1x128xf32> to vector<128x128xf32>
    %658 = arith.addf %655, %657 : vector<128x128xf32>
    %cst_180 = arith.constant 0.000000e+00 : f32
    %659 = vector.broadcast %cst_180 : f32 to vector<128x128xf32>
    %660 = arith.maximumf %658, %659 : vector<128x128xf32>
    %661 = vector.shape_cast %660 : vector<128x128xf32> to vector<16x8x128xf32>
    %c0_181 = arith.constant 0 : index
    %c0_182 = arith.constant 0 : index
    %c0_183 = arith.constant 0 : index
    %662 = vector.load %arg6[%c0_181, %c0_182, %c0_183] : memref<16x8x128xf32, #tpu.memory_space<vmem>>, vector<16x8x128xf32>
    tpu.vector_store %arg6[%c0_181, %c0_182, %c0_183], %661 {strides = array<i32>} : memref<16x8x128xf32, #tpu.memory_space<vmem>>, vector<16x8x128xf32>,
    return
  }
  func.func @transform_0(%arg0: i32) -> (i32, i32, i32) {
    %c0_i32 = arith.constant 0 : i32
    %c0_i32_0 = arith.constant 0 : i32
    %c0_i32_1 = arith.constant 0 : i32
    return %arg0, %c0_i32, %c0_i32_0 : i32, i32, i32
  }
  func.func @transform_1(%arg0: i32) -> (i32, i32) {
    %c0_i32 = arith.constant 0 : i32
    %c0_i32_0 = arith.constant 0 : i32
    %c0_i32_1 = arith.constant 0 : i32
    return %c0_i32, %c0_i32_0 : i32, i32
  }
  func.func @transform_2(%arg0: i32) -> (i32, i32) {
    %c0_i32 = arith.constant 0 : i32
    %c0_i32_0 = arith.constant 0 : i32
    %c0_i32_1 = arith.constant 0 : i32
    return %c0_i32, %c0_i32_0 : i32, i32
  }
  func.func @transform_3(%arg0: i32) -> (i32, i32) {
    %c0_i32 = arith.constant 0 : i32
    %c0_i32_0 = arith.constant 0 : i32
    %c0_i32_1 = arith.constant 0 : i32
    return %c0_i32, %c0_i32_0 : i32, i32
  }
  func.func @transform_4(%arg0: i32) -> (i32, i32) {
    %c0_i32 = arith.constant 0 : i32
    %c0_i32_0 = arith.constant 0 : i32
    %c0_i32_1 = arith.constant 0 : i32
    return %c0_i32, %c0_i32_0 : i32, i32
  }
  func.func @transform_5(%arg0: i32) -> (i32, i32, i32) {
    %c0_i32 = arith.constant 0 : i32
    %c0_i32_0 = arith.constant 0 : i32
    %c0_i32_1 = arith.constant 0 : i32
    return %arg0, %c0_i32, %c0_i32_0 : i32, i32, i32
  }
}

module attributes {stable_mosaic.version = 11 : i64} {
  func.func @_bilinear_kernel(%arg0: i32, %arg1: memref<24x256xbf16, #tpu.memory_space<vmem>>, %arg2: memref<24x256xbf16, #tpu.memory_space<vmem>>, %arg3: memref<256x1024xbf16, #tpu.memory_space<vmem>>, %arg4: memref<1x4xf32, #tpu.memory_space<vmem>>, %arg5: memref<24x4xf32, #tpu.memory_space<vmem>>) attributes {dimension_semantics = [#tpu.dimension_semantics<parallel>], iteration_bounds = array<i64: 1>, scalar_prefetch = 0 : i64, scratch_operands = 0 : i64, tpu.core_type = #tpu.core_type<tc>, window_params = [{transform_indices = @transform_0, window_bounds = array<i64: 24, 256>}, {transform_indices = @transform_1, window_bounds = array<i64: 24, 256>}, {pipeline_mode = #tpu.pipeline_mode<synchronous>, transform_indices = @transform_2, window_bounds = array<i64: 256, 1024>}, {pipeline_mode = #tpu.pipeline_mode<synchronous>, transform_indices = @transform_3, window_bounds = array<i64: 1, 4>}, {transform_indices = @transform_4, window_bounds = array<i64: 24, 4>}]} {
    %c0 = arith.constant 0 : index
    %c0_0 = arith.constant 0 : index
    %0 = vector.load %arg1[%c0, %c0_0] : memref<24x256xbf16, #tpu.memory_space<vmem>>, vector<24x256xbf16>
    %c0_1 = arith.constant 0 : index
    %c0_2 = arith.constant 0 : index
    %1 = vector.load %arg3[%c0_1, %c0_2] : memref<256x1024xbf16, #tpu.memory_space<vmem>>, vector<256x1024xbf16>
    %cst = arith.constant dense<0.000000e+00> : vector<24x1024xf32>
    %2 = tpu.matmul %0, %1, %cst {dimension_numbers = #tpu.dot_dimension_numbers<[1], [0], [0], [1], [0, 0, 1, 1], [], []>} : vector<24x256xbf16>, vector<256x1024xbf16>, vector<24x1024xf32> -> vector<24x1024xf32>
    %c0_3 = arith.constant 0 : index
    %c0_4 = arith.constant 0 : index
    %3 = vector.load %arg2[%c0_3, %c0_4] : memref<24x256xbf16, #tpu.memory_space<vmem>>, vector<24x256xbf16>
    %4 = arith.extf %3 : vector<24x256xbf16> to vector<24x256xf32>
    %5 = vector.extract_strided_slice %2 {offsets = [0, 0], sizes = [24, 256], strides = [1, 1]} : vector<24x1024xf32> to vector<24x256xf32>
    %6 = arith.mulf %5, %4 : vector<24x256xf32>
    %cst_5 = arith.constant dense<0.000000e+00> : vector<24xf32>
    %7 = vector.multi_reduction <add>, %6, %cst_5 [1] : vector<24x256xf32> to vector<24xf32>
    %8 = vector.shape_cast %7 : vector<24xf32> to vector<24x1xf32>
    %9 = vector.extract_strided_slice %2 {offsets = [0, 256], sizes = [24, 256], strides = [1, 1]} : vector<24x1024xf32> to vector<24x256xf32>
    %10 = arith.mulf %9, %4 : vector<24x256xf32>
    %cst_6 = arith.constant dense<0.000000e+00> : vector<24xf32>
    %11 = vector.multi_reduction <add>, %10, %cst_6 [1] : vector<24x256xf32> to vector<24xf32>
    %12 = vector.shape_cast %11 : vector<24xf32> to vector<24x1xf32>
    %13 = vector.extract_strided_slice %2 {offsets = [0, 512], sizes = [24, 256], strides = [1, 1]} : vector<24x1024xf32> to vector<24x256xf32>
    %14 = arith.mulf %13, %4 : vector<24x256xf32>
    %cst_7 = arith.constant dense<0.000000e+00> : vector<24xf32>
    %15 = vector.multi_reduction <add>, %14, %cst_7 [1] : vector<24x256xf32> to vector<24xf32>
    %16 = vector.shape_cast %15 : vector<24xf32> to vector<24x1xf32>
    %17 = vector.extract_strided_slice %2 {offsets = [0, 768], sizes = [24, 256], strides = [1, 1]} : vector<24x1024xf32> to vector<24x256xf32>
    %18 = arith.mulf %17, %4 : vector<24x256xf32>
    %cst_8 = arith.constant dense<0.000000e+00> : vector<24xf32>
    %19 = vector.multi_reduction <add>, %18, %cst_8 [1] : vector<24x256xf32> to vector<24xf32>
    %20 = vector.shape_cast %19 : vector<24xf32> to vector<24x1xf32>
    %21 = tpu.concatenate %8, %12, %16, %20 in 1 : vector<24x1xf32>, vector<24x1xf32>, vector<24x1xf32>, vector<24x1xf32> -> vector<24x4xf32>
    %c0_9 = arith.constant 0 : index
    %c0_10 = arith.constant 0 : index
    %22 = vector.load %arg4[%c0_9, %c0_10] : memref<1x4xf32, #tpu.memory_space<vmem>>, vector<1x4xf32>
    %23 = vector.broadcast %22 : vector<1x4xf32> to vector<24x4xf32>
    %24 = arith.addf %21, %23 : vector<24x4xf32>
    %c0_11 = arith.constant 0 : index
    %c0_12 = arith.constant 0 : index
    %25 = vector.load %arg5[%c0_11, %c0_12] : memref<24x4xf32, #tpu.memory_space<vmem>>, vector<24x4xf32>
    tpu.vector_store %arg5[%c0_11, %c0_12], %24 {strides = array<i32>} : memref<24x4xf32, #tpu.memory_space<vmem>>, vector<24x4xf32>,
    return
  }
  func.func @transform_0(%arg0: i32) -> (i32, i32) {
    %c0_i32 = arith.constant 0 : i32
    %c0_i32_0 = arith.constant 0 : i32
    return %arg0, %c0_i32 : i32, i32
  }
  func.func @transform_1(%arg0: i32) -> (i32, i32) {
    %c0_i32 = arith.constant 0 : i32
    %c0_i32_0 = arith.constant 0 : i32
    return %arg0, %c0_i32 : i32, i32
  }
  func.func @transform_2(%arg0: i32) -> (i32, i32) {
    %c0_i32 = arith.constant 0 : i32
    %c0_i32_0 = arith.constant 0 : i32
    %c0_i32_1 = arith.constant 0 : i32
    return %c0_i32, %c0_i32_0 : i32, i32
  }
  func.func @transform_3(%arg0: i32) -> (i32, i32) {
    %c0_i32 = arith.constant 0 : i32
    %c0_i32_0 = arith.constant 0 : i32
    %c0_i32_1 = arith.constant 0 : i32
    return %c0_i32, %c0_i32_0 : i32, i32
  }
  func.func @transform_4(%arg0: i32) -> (i32, i32) {
    %c0_i32 = arith.constant 0 : i32
    %c0_i32_0 = arith.constant 0 : i32
    return %arg0, %c0_i32 : i32, i32
  }
}

</mosaic_0001>

<llo_original>
// kernel: _lambda_.5
$region0: #{_lambda_.5}
  #allocation0 [shape = 'u32[]', space=smem, size = 0x4, offset = 0x4, fixed_abs, tag = 'smem constant byte address 0x4 - core index']
  #allocation1 [shape = 'u32[72,128]{1,0:T(1,128)}', space=vmem, size = 0x9000, scoped, tag = 'internal scratch']
  %s0 = inlined_call_operand.vmem [shape: bf16[32,128], index: 0, kind: input, shape index: {}]
  %s1 = inlined_call_operand.vmem [shape: bf16[80,128], index: 1, kind: input, shape index: {}]
  %s2 = inlined_call_operand.vmem [shape: f32[1,128], index: 2, kind: input, shape index: {}]
  %s3 = inlined_call_operand.vmem [shape: f32[32,128], index: 3, kind: output, shape index: {}]
  %s4 = sld [smem:[#allocation0]]
  $region22: #{_lambda_.5} parent=0
    _
  %s6 = ssub.s32 1, %s4
  %s7 = scalar_select 0, %s6, %s4
  // Predicated region
  $region2: #{_lambda_.5} parent=0 // pred_check
    _
  $region3: #{_lambda_.5} parent=0 // pred_check_branch
    %9 = sbr.rel (0) target = $region5
  $region4: #{_lambda_.5} parent=0 // pred_region
    _
  $region5: #{_lambda_.5} parent=0 // pred_fallthru
    _
  // Predicated region
  $region6: #{_lambda_.5} parent=0 // pred_check
    _
  $region7: #{_lambda_.5} parent=0 // pred_check_branch
    %11 = sbr.rel (0) target = $region9
  $region8: #{_lambda_.5} parent=0 // pred_region
    _
  $region9: #{_lambda_.5} parent=0 // pred_fallthru
    _
  // Predicated region
  $region10: #{_lambda_.5} parent=0 // pred_check
    _
  $region11: #{_lambda_.5} parent=0 // pred_check_branch
    %13 = sbr.rel (0) target = $region13
  $region12: #{_lambda_.5} parent=0 // pred_region
    _
  $region13: #{_lambda_.5} parent=0 // pred_fallthru
    _
  %v15 = vld [vmem:[%s0] sm:$0xf]
  %v16 = vld [vmem:[%s0 + $0x4] sm:$0xf]
  %v17 = vld [vmem:[%s0 + $0x8] sm:$0xf]
  %v18 = vld [vmem:[%s0 + $0xc] sm:$0xf]
  %v19 = vld [vmem:[%s1] sm:$0xf]
  %v20 = vld [vmem:[%s1 + $0x4] sm:$0xf]
  %v21 = vld [vmem:[%s1 + $0x8] sm:$0xf]
  %v22 = vld [vmem:[%s1 + $0xc] sm:$0xf]
  %v23 = vld [vmem:[%s1 + $0x10] sm:$0xf]
  %v24 = vld [vmem:[%s1 + $0x14] sm:$0xf]
  %v25 = vld [vmem:[%s1 + $0x18] sm:$0xf]
  %v26 = vld [vmem:[%s1 + $0x1c] sm:$0xf]
  %v27 = vld [vmem:[%s1 + $0x20] sm:$0xf]
  %v28 = vld [vmem:[%s1 + $0x24] sm:$0xf]
  %v33 = vunpack.c.l.b16 %v15
  %v34 = vunpack.c.l.b16 %v16
  %v35 = vunpack.c.l.b16 %v17
  %v36 = vunpack.c.l.b16 %v18
  %v37 = vpack.c.b16 %v34, %v33
  %v38 = vpack.c.b16 %v36, %v35
  %v49 = vunpack.c.l.b16 %v19
  %v50 = vunpack.c.l.b16 %v20
  %v51 = vunpack.c.l.b16 %v21
  %v52 = vunpack.c.l.b16 %v22
  %v53 = vunpack.c.l.b16 %v23
  %v54 = vunpack.c.l.b16 %v24
  %v55 = vunpack.c.l.b16 %v25
  %v56 = vunpack.c.l.b16 %v26
  %v57 = vunpack.c.l.b16 %v27
  %v58 = vunpack.c.l.b16 %v28
  %v59 = vpack.c.b16 %v50, %v49
  %v60 = vpack.c.b16 %v52, %v51
  %v61 = vpack.c.b16 %v54, %v53
  %v62 = vpack.c.b16 %v56, %v55
  %v63 = vpack.c.b16 %v58, %v57
  %vm69 = vcmask 654336
  %v71 = vsel %vm69, %v37, 0
  %v74 = vsel %vm69, %v38, 0
  %76 = vmatpush.bf16.msra.mxu0 0
  %77 = vmatpush.bf16.msra.mxu0 0
  %78 = vmatpush.bf16.msra.mxu0 0
  %79 = vmatpush.bf16.msra.mxu0 %v63
  %80 = vmatpush.bf16.msra.mxu0 %v62
  %81 = vmatpush.bf16.msra.mxu0 %v61
  %82 = vmatpush.bf16.msra.mxu0 %v60
  %83 = vmatpush.bf16.msra.mxu0 %v59
  %84 = vmatmul.bf16.gmra.mxu0 %v71
  %v85 = vpop.f32.mrf.mxu0
  %v86 = vadd.f32 0.0, %v85
  %v87 = vpop.f32.mrf.mxu0
  %v88 = vadd.f32 0.0, %v87
  %89 = vmatmul.bf16.gmra.mxu0 %v74
  %v90 = vpop.f32.mrf.mxu0
  %v91 = vadd.f32 0.0, %v90
  %v92 = vpop.f32.mrf.mxu0
  %v93 = vadd.f32 0.0, %v92
  %94 = vdwg.mxu0
  %95 = vrot.lane.b32.xlu0 %v37, 112
  %v96 = vpop.permute.xlu0 %95
  %97 = vrot.lane.b32.xlu0 %v38, 112
  %v98 = vpop.permute.xlu0 %97
  %v100 = vsel %vm69, %v96, 0
  %v103 = vsel %vm69, %v98, 0
  %105 = vmatpush.bf16.msra.mxu0 0
  %106 = vmatpush.bf16.msra.mxu0 0
  %107 = vmatpush.bf16.msra.mxu0 0
  %108 = vmatpush.bf16.msra.mxu0 %v63
  %109 = vmatpush.bf16.msra.mxu0 %v62
  %110 = vmatpush.bf16.msra.mxu0 %v61
  %111 = vmatpush.bf16.msra.mxu0 %v60
  %112 = vmatpush.bf16.msra.mxu0 %v59
  %113 = vmatmul.bf16.gmra.mxu0 %v100
  %v114 = vpop.f32.mrf.mxu0
  %v115 = vadd.f32 0.0, %v114
  %v116 = vpop.f32.mrf.mxu0
  %v117 = vadd.f32 0.0, %v116
  %118 = vmatmul.bf16.gmra.mxu0 %v103
  %v119 = vpop.f32.mrf.mxu0
  %v120 = vadd.f32 0.0, %v119
  %v121 = vpop.f32.mrf.mxu0
  %v122 = vadd.f32 0.0, %v121
  %123 = vdwg.mxu0
  %v124 = vmax.f32 %v86, %v115
  %v125 = vmax.f32 %v88, %v117
  %v126 = vmax.f32 %v91, %v120
  %v127 = vmax.f32 %v93, %v122
  %128 = vrot.lane.b32.xlu0 %v37, 96
  %v129 = vpop.permute.xlu0 %128
  %130 = vrot.lane.b32.xlu0 %v38, 96
  %v131 = vpop.permute.xlu0 %130
  %v133 = vsel %vm69, %v129, 0
  %v136 = vsel %vm69, %v131, 0
  %138 = vmatpush.bf16.msra.mxu0 0
  %139 = vmatpush.bf16.msra.mxu0 0
  %140 = vmatpush.bf16.msra.mxu0 0
  %141 = vmatpush.bf16.msra.mxu0 %v63
  %142 = vmatpush.bf16.msra.mxu0 %v62
  %143 = vmatpush.bf16.msra.mxu0 %v61
  %144 = vmatpush.bf16.msra.mxu0 %v60
  %145 = vmatpush.bf16.msra.mxu0 %v59
  %146 = vmatmul.bf16.gmra.mxu0 %v133
  %v147 = vpop.f32.mrf.mxu0
  %v148 = vadd.f32 0.0, %v147
  %v149 = vpop.f32.mrf.mxu0
  %v150 = vadd.f32 0.0, %v149
  %151 = vmatmul.bf16.gmra.mxu0 %v136
  %v152 = vpop.f32.mrf.mxu0
  %v153 = vadd.f32 0.0, %v152
  %v154 = vpop.f32.mrf.mxu0
  %v155 = vadd.f32 0.0, %v154
  %156 = vdwg.mxu0
  %v157 = vmax.f32 %v124, %v148
  %v158 = vmax.f32 %v125, %v150
  %v159 = vmax.f32 %v126, %v153
  %v160 = vmax.f32 %v127, %v155
  %161 = vrot.lane.b32.xlu0 %v37, 80
  %v162 = vpop.permute.xlu0 %161
  %163 = vrot.lane.b32.xlu0 %v38, 80
  %v164 = vpop.permute.xlu0 %163
  %v166 = vsel %vm69, %v162, 0
  %v169 = vsel %vm69, %v164, 0
  %171 = vmatpush.bf16.msra.mxu0 0
  %172 = vmatpush.bf16.msra.mxu0 0
  %173 = vmatpush.bf16.msra.mxu0 0
  %174 = vmatpush.bf16.msra.mxu0 %v63
  %175 = vmatpush.bf16.msra.mxu0 %v62
  %176 = vmatpush.bf16.msra.mxu0 %v61
  %177 = vmatpush.bf16.msra.mxu0 %v60
  %178 = vmatpush.bf16.msra.mxu0 %v59
  %179 = vmatmul.bf16.gmra.mxu0 %v166
  %v180 = vpop.f32.mrf.mxu0
  %v181 = vadd.f32 0.0, %v180
  %v182 = vpop.f32.mrf.mxu0
  %v183 = vadd.f32 0.0, %v182
  %184 = vmatmul.bf16.gmra.mxu0 %v169
  %v185 = vpop.f32.mrf.mxu0
  %v186 = vadd.f32 0.0, %v185
  %v187 = vpop.f32.mrf.mxu0
  %v188 = vadd.f32 0.0, %v187
  %189 = vdwg.mxu0
  %v190 = vmax.f32 %v157, %v181
  %v191 = vmax.f32 %v158, %v183
  %v192 = vmax.f32 %v159, %v186
  %v193 = vmax.f32 %v160, %v188
  %v194 = vld [vmem:[%s2] sm:$0x1]
  %v196 = vperm.slane %v194, 0
  %v198 = vadd.f32 %v190, %v196
  %v199 = vadd.f32 %v191, %v196
  %v200 = vadd.f32 %v192, %v196
  %v201 = vadd.f32 %v193, %v196
  %202 = vst [vmem:[%s3] sm:$0xff] %v198
  %203 = vst [vmem:[%s3 + $0x8] sm:$0xff] %v199
  %204 = vst [vmem:[%s3 + $0x10] sm:$0xff] %v200
  %205 = vst [vmem:[%s3 + $0x18] sm:$0xff] %v201
  // Predicated region
  $region14: #{_lambda_.5} parent=0 // pred_check
    _
  $region15: #{_lambda_.5} parent=0 // pred_check_branch
    %207 = sbr.rel (0) target = $region17
  $region16: #{_lambda_.5} parent=0 // pred_region
    _
  $region17: #{_lambda_.5} parent=0 // pred_fallthru
    _
  // Predicated region
  $region18: #{_lambda_.5} parent=0 // pred_check
    _
  $region19: #{_lambda_.5} parent=0 // pred_check_branch
    %209 = sbr.rel (0) target = $region21
  $region20: #{_lambda_.5} parent=0 // pred_region
    _
  $region21: #{_lambda_.5} parent=0 // pred_fallthru
    _

// kernel: _lambda_.6
$region0: #{_lambda_.6}
  #allocation0 [shape = 'u32[]', space=smem, size = 0x4, offset = 0x4, fixed_abs, tag = 'smem constant byte address 0x4 - core index']
  #allocation1 [shape = 'u32[72,128]{1,0:T(1,128)}', space=vmem, size = 0x9000, scoped, tag = 'internal scratch']
  %s0 = inlined_call_operand.vmem [shape: bf16[32,148], index: 0, kind: input, shape index: {}]
  %s1 = inlined_call_operand.vmem [shape: bf16[148,512], index: 1, kind: input, shape index: {}]
  %s2 = inlined_call_operand.vmem [shape: f32[1,512], index: 2, kind: input, shape index: {}]
  %s3 = inlined_call_operand.vmem [shape: f32[32,512], index: 3, kind: output, shape index: {}]
  %s4 = sld [smem:[#allocation0]]
  $region22: #{_lambda_.6} parent=0
    _
  %s6 = ssub.s32 1, %s4
  %s7 = scalar_select 0, %s6, %s4
  // Predicated region
  $region2: #{_lambda_.6} parent=0 // pred_check
    _
  $region3: #{_lambda_.6} parent=0 // pred_check_branch
    %9 = sbr.rel (0) target = $region5
  $region4: #{_lambda_.6} parent=0 // pred_region
    _
  $region5: #{_lambda_.6} parent=0 // pred_fallthru
    _
  // Predicated region
  $region6: #{_lambda_.6} parent=0 // pred_check
    _
  $region7: #{_lambda_.6} parent=0 // pred_check_branch
    %11 = sbr.rel (0) target = $region9
  $region8: #{_lambda_.6} parent=0 // pred_region
    _
  $region9: #{_lambda_.6} parent=0 // pred_fallthru
    _
  // Predicated region
  $region10: #{_lambda_.6} parent=0 // pred_check
    _
  $region11: #{_lambda_.6} parent=0 // pred_check_branch
    %13 = sbr.rel (0) target = $region13
  $region12: #{_lambda_.6} parent=0 // pred_region
    _
  $region13: #{_lambda_.6} parent=0 // pred_fallthru
    _
  %v15 = vld [vmem:[%s0] sm:$0xff]
  %v16 = vld [vmem:[%s0 + $0x8] sm:$0xff]
  %v17 = vld [vmem:[%s0 + $0x10] sm:$0xff]
  %v18 = vld [vmem:[%s0 + $0x18] sm:$0xff]
  %v19 = vld [vmem:[%s1] sm:$0xff]
  %v20 = vld [vmem:[%s1 + $0x8] sm:$0xff]
  %v21 = vld [vmem:[%s1 + $0x10] sm:$0xff]
  %v22 = vld [vmem:[%s1 + $0x18] sm:$0xff]
  %v23 = vld [vmem:[%s1 + $0x20] sm:$0xff]
  %v24 = vld [vmem:[%s1 + $0x28] sm:$0xff]
  %v25 = vld [vmem:[%s1 + $0x30] sm:$0xff]
  %v26 = vld [vmem:[%s1 + $0x38] sm:$0xff]
  %v27 = vld [vmem:[%s1 + $0x40] sm:$0xff]
  %v28 = vld [vmem:[%s1 + $0x48] sm:$0xff]
  %v29 = vld [vmem:[%s1 + $0x50] sm:$0xff]
  %v30 = vld [vmem:[%s1 + $0x58] sm:$0xff]
  %v31 = vld [vmem:[%s1 + $0x60] sm:$0xff]
  %v32 = vld [vmem:[%s1 + $0x68] sm:$0xff]
  %v33 = vld [vmem:[%s1 + $0x70] sm:$0xff]
  %v34 = vld [vmem:[%s1 + $0x78] sm:$0xff]
  %v35 = vld [vmem:[%s1 + $0x80] sm:$0xff]
  %v36 = vld [vmem:[%s1 + $0x88] sm:$0xff]
  %v37 = vld [vmem:[%s1 + $0x90] sm:$0xff]
  %v38 = vld [vmem:[%s1 + $0x98] sm:$0xff]
  %v39 = vld [vmem:[%s1 + $0xa0] sm:$0xff]
  %v40 = vld [vmem:[%s1 + $0xa8] sm:$0xff]
  %v41 = vld [vmem:[%s1 + $0xb0] sm:$0xff]
  %v42 = vld [vmem:[%s1 + $0xb8] sm:$0xff]
  %v43 = vld [vmem:[%s1 + $0xc0] sm:$0xff]
  %v44 = vld [vmem:[%s1 + $0xc8] sm:$0xff]
  %v45 = vld [vmem:[%s1 + $0xd0] sm:$0xff]
  %v46 = vld [vmem:[%s1 + $0xd8] sm:$0xff]
  %v47 = vld [vmem:[%s1 + $0xe0] sm:$0xff]
  %v48 = vld [vmem:[%s1 + $0xe8] sm:$0xff]
  %v49 = vld [vmem:[%s1 + $0xf0] sm:$0xff]
  %v50 = vld [vmem:[%s1 + $0xf8] sm:$0xff]
  %v51 = vld [vmem:[%s1 + $0x100] sm:$0xff]
  %v52 = vld [vmem:[%s1 + $0x108] sm:$0xff]
  %v53 = vld [vmem:[%s1 + $0x110] sm:$0xff]
  %v54 = vld [vmem:[%s1 + $0x118] sm:$0xff]
  %v55 = vld [vmem:[%s1 + $0x120] sm:$0x33]
  %v56 = vld [vmem:[%s1 + $0x128] sm:$0x33]
  %v57 = vld [vmem:[%s2] sm:$0xf]
  %v59 = vperm.slane %v57, 0
  %v60 = vperm.slane %v57, 1
  %v61 = vperm.slane %v57, 2
  %v62 = vperm.slane %v57, 3
  %v71 = vunpack.c.l.b16 %v15
  %v72 = vunpack.c.h.b16 %v15
  %v73 = vunpack.c.l.b16 %v16
  %v74 = vunpack.c.h.b16 %v16
  %v75 = vunpack.c.l.b16 %v17
  %v76 = vunpack.c.h.b16 %v17
  %v77 = vunpack.c.l.b16 %v18
  %v78 = vunpack.c.h.b16 %v18
  %v79 = vpack.c.b16 %v73, %v71
  %v80 = vpack.c.b16 %v74, %v72
  %v81 = vpack.c.b16 %v77, %v75
  %v82 = vpack.c.b16 %v78, %v76
  %v123 = vunpack.c.l.b16 %v19
  %v124 = vunpack.c.h.b16 %v19
  %v125 = vunpack.c.l.b16 %v20
  %v126 = vunpack.c.h.b16 %v20
  %v127 = vunpack.c.l.b16 %v21
  %v128 = vunpack.c.h.b16 %v21
  %v129 = vunpack.c.l.b16 %v22
  %v130 = vunpack.c.h.b16 %v22
  %v131 = vunpack.c.l.b16 %v23
  %v132 = vunpack.c.h.b16 %v23
  %v133 = vunpack.c.l.b16 %v24
  %v134 = vunpack.c.h.b16 %v24
  %v135 = vunpack.c.l.b16 %v25
  %v136 = vunpack.c.h.b16 %v25
  %v137 = vunpack.c.l.b16 %v26
  %v138 = vunpack.c.h.b16 %v26
  %v139 = vunpack.c.l.b16 %v27
  %v140 = vunpack.c.h.b16 %v27
  %v141 = vunpack.c.l.b16 %v28
  %v142 = vunpack.c.h.b16 %v28
  %v143 = vunpack.c.l.b16 %v29
  %v144 = vunpack.c.h.b16 %v29
  %v145 = vunpack.c.l.b16 %v30
  %v146 = vunpack.c.h.b16 %v30
  %v147 = vunpack.c.l.b16 %v31
  %v148 = vunpack.c.h.b16 %v31
  %v149 = vunpack.c.l.b16 %v32
  %v150 = vunpack.c.h.b16 %v32
  %v151 = vunpack.c.l.b16 %v33
  %v152 = vunpack.c.h.b16 %v33
  %v153 = vunpack.c.l.b16 %v34
  %v154 = vunpack.c.h.b16 %v34
  %v155 = vunpack.c.l.b16 %v35
  %v156 = vunpack.c.h.b16 %v35
  %v157 = vunpack.c.l.b16 %v36
  %v158 = vunpack.c.h.b16 %v36
  %v159 = vunpack.c.l.b16 %v37
  %v160 = vunpack.c.h.b16 %v37
  %v161 = vunpack.c.l.b16 %v38
  %v162 = vunpack.c.h.b16 %v38
  %v163 = vunpack.c.l.b16 %v39
  %v164 = vunpack.c.h.b16 %v39
  %v165 = vunpack.c.l.b16 %v40
  %v166 = vunpack.c.h.b16 %v40
  %v167 = vunpack.c.l.b16 %v41
  %v168 = vunpack.c.h.b16 %v41
  %v169 = vunpack.c.l.b16 %v42
  %v170 = vunpack.c.h.b16 %v42
  %v171 = vunpack.c.l.b16 %v43
  %v172 = vunpack.c.h.b16 %v43
  %v173 = vunpack.c.l.b16 %v44
  %v174 = vunpack.c.h.b16 %v44
  %v175 = vunpack.c.l.b16 %v45
  %v176 = vunpack.c.h.b16 %v45
  %v177 = vunpack.c.l.b16 %v46
  %v178 = vunpack.c.h.b16 %v46
  %v179 = vunpack.c.l.b16 %v47
  %v180 = vunpack.c.h.b16 %v47
  %v181 = vunpack.c.l.b16 %v48
  %v182 = vunpack.c.h.b16 %v48
  %v183 = vunpack.c.l.b16 %v49
  %v184 = vunpack.c.h.b16 %v49
  %v185 = vunpack.c.l.b16 %v50
  %v186 = vunpack.c.h.b16 %v50
  %v187 = vunpack.c.l.b16 %v51
  %v188 = vunpack.c.h.b16 %v51
  %v189 = vunpack.c.l.b16 %v52
  %v190 = vunpack.c.h.b16 %v52
  %v191 = vunpack.c.l.b16 %v53
  %v192 = vunpack.c.h.b16 %v53
  %v193 = vunpack.c.l.b16 %v54
  %v194 = vunpack.c.h.b16 %v54
  %v195 = vunpack.c.l.b16 %v55
  %v196 = vunpack.c.h.b16 %v55
  %v197 = vunpack.c.l.b16 %v56
  %v198 = vunpack.c.h.b16 %v56
  %v199 = vpack.c.b16 %v127, %v123
  %v200 = vpack.c.b16 %v128, %v124
  %v201 = vpack.c.b16 %v129, %v125
  %v202 = vpack.c.b16 %v130, %v126
  %v203 = vpack.c.b16 %v135, %v131
  %v204 = vpack.c.b16 %v136, %v132
  %v205 = vpack.c.b16 %v137, %v133
  %v206 = vpack.c.b16 %v138, %v134
  %v207 = vpack.c.b16 %v143, %v139
  %v208 = vpack.c.b16 %v144, %v140
  %v209 = vpack.c.b16 %v145, %v141
  %v210 = vpack.c.b16 %v146, %v142
  %v211 = vpack.c.b16 %v151, %v147
  %v212 = vpack.c.b16 %v152, %v148
  %v213 = vpack.c.b16 %v153, %v149
  %v214 = vpack.c.b16 %v154, %v150
  %v215 = vpack.c.b16 %v159, %v155
  %v216 = vpack.c.b16 %v160, %v156
  %v217 = vpack.c.b16 %v161, %v157
  %v218 = vpack.c.b16 %v162, %v158
  %v219 = vpack.c.b16 %v167, %v163
  %v220 = vpack.c.b16 %v168, %v164
  %v221 = vpack.c.b16 %v169, %v165
  %v222 = vpack.c.b16 %v170, %v166
  %v223 = vpack.c.b16 %v175, %v171
  %v224 = vpack.c.b16 %v176, %v172
  %v225 = vpack.c.b16 %v177, %v173
  %v226 = vpack.c.b16 %v178, %v174
  %v227 = vpack.c.b16 %v183, %v179
  %v228 = vpack.c.b16 %v184, %v180
  %v229 = vpack.c.b16 %v185, %v181
  %v230 = vpack.c.b16 %v186, %v182
  %v231 = vpack.c.b16 %v191, %v187
  %v232 = vpack.c.b16 %v192, %v188
  %v233 = vpack.c.b16 %v193, %v189
  %v234 = vpack.c.b16 %v194, %v190
  %v235 = vpack.c.b16 %v195, %v195
  %v236 = vpack.c.b16 %v196, %v196
  %v237 = vpack.c.b16 %v197, %v197
  %v238 = vpack.c.b16 %v198, %v198
  %vm275 = vcmask 162816
  %v277 = vsel %vm275, %v80, 0
  %v280 = vsel %vm275, %v82, 0
  %vm282 = vcmask 1041408
  %v284 = vsel %vm282, %v235, 0
  %v287 = vsel %vm282, %v236, 0
  %v290 = vsel %vm282, %v237, 0
  %v293 = vsel %vm282, %v238, 0
  %295 = vmatpush.bf16.msra.mxu0 %v227
  %296 = vmatpush.bf16.msra.mxu0 %v223
  %297 = vmatpush.bf16.msra.mxu0 %v219
  %298 = vmatpush.bf16.msra.mxu0 %v215
  %299 = vmatpush.bf16.msra.mxu0 %v211
  %300 = vmatpush.bf16.msra.mxu0 %v207
  %301 = vmatpush.bf16.msra.mxu0 %v203
  %302 = vmatpush.bf16.msra.mxu0 %v199
  %303 = vmatmul.bf16.gmra.mxu0 %v79
  %v304 = vpop.f32.mrf.mxu0
  %v305 = vadd.f32 %v59, %v304
  %v306 = vpop.f32.mrf.mxu0
  %v307 = vadd.f32 %v59, %v306
  %308 = vmatmul.bf16.gmra.mxu0 %v81
  %v309 = vpop.f32.mrf.mxu0
  %v310 = vadd.f32 %v59, %v309
  %v311 = vpop.f32.mrf.mxu0
  %v312 = vadd.f32 %v59, %v311
  %313 = vdwg.mxu0
  %314 = vmatpush.bf16.msra.mxu0 0
  %315 = vmatpush.bf16.msra.mxu0 0
  %316 = vmatpush.bf16.msra.mxu0 0
  %317 = vmatpush.bf16.msra.mxu0 0
  %318 = vmatpush.bf16.msra.mxu0 0
  %319 = vmatpush.bf16.msra.mxu0 0
  %320 = vmatpush.bf16.msra.mxu0 %v284
  %321 = vmatpush.bf16.msra.mxu0 %v231
  %322 = vmatmul.bf16.gmra.mxu0 %v277
  %v323 = vpop.f32.mrf.mxu0
  %v324 = vadd.f32 %v305, %v323
  %v325 = vpop.f32.mrf.mxu0
  %v326 = vadd.f32 %v307, %v325
  %327 = vmatmul.bf16.gmra.mxu0 %v280
  %v328 = vpop.f32.mrf.mxu0
  %v329 = vadd.f32 %v310, %v328
  %v330 = vpop.f32.mrf.mxu0
  %v331 = vadd.f32 %v312, %v330
  %332 = vdwg.mxu0
  %333 = vmatpush.bf16.msra.mxu0 %v228
  %334 = vmatpush.bf16.msra.mxu0 %v224
  %335 = vmatpush.bf16.msra.mxu0 %v220
  %336 = vmatpush.bf16.msra.mxu0 %v216
  %337 = vmatpush.bf16.msra.mxu0 %v212
  %338 = vmatpush.bf16.msra.mxu0 %v208
  %339 = vmatpush.bf16.msra.mxu0 %v204
  %340 = vmatpush.bf16.msra.mxu0 %v200
  %341 = vmatmul.bf16.gmra.mxu0 %v79
  %v342 = vpop.f32.mrf.mxu0
  %v343 = vadd.f32 %v60, %v342
  %v344 = vpop.f32.mrf.mxu0
  %v345 = vadd.f32 %v60, %v344
  %346 = vmatmul.bf16.gmra.mxu0 %v81
  %v347 = vpop.f32.mrf.mxu0
  %v348 = vadd.f32 %v60, %v347
  %v349 = vpop.f32.mrf.mxu0
  %v350 = vadd.f32 %v60, %v349
  %351 = vdwg.mxu0
  %352 = vmatpush.bf16.msra.mxu0 0
  %353 = vmatpush.bf16.msra.mxu0 0
  %354 = vmatpush.bf16.msra.mxu0 0
  %355 = vmatpush.bf16.msra.mxu0 0
  %356 = vmatpush.bf16.msra.mxu0 0
  %357 = vmatpush.bf16.msra.mxu0 0
  %358 = vmatpush.bf16.msra.mxu0 %v287
  %359 = vmatpush.bf16.msra.mxu0 %v232
  %360 = vmatmul.bf16.gmra.mxu0 %v277
  %v361 = vpop.f32.mrf.mxu0
  %v362 = vadd.f32 %v343, %v361
  %v363 = vpop.f32.mrf.mxu0
  %v364 = vadd.f32 %v345, %v363
  %365 = vmatmul.bf16.gmra.mxu0 %v280
  %v366 = vpop.f32.mrf.mxu0
  %v367 = vadd.f32 %v348, %v366
  %v368 = vpop.f32.mrf.mxu0
  %v369 = vadd.f32 %v350, %v368
  %370 = vdwg.mxu0
  %371 = vmatpush.bf16.msra.mxu0 %v229
  %372 = vmatpush.bf16.msra.mxu0 %v225
  %373 = vmatpush.bf16.msra.mxu0 %v221
  %374 = vmatpush.bf16.msra.mxu0 %v217
  %375 = vmatpush.bf16.msra.mxu0 %v213
  %376 = vmatpush.bf16.msra.mxu0 %v209
  %377 = vmatpush.bf16.msra.mxu0 %v205
  %378 = vmatpush.bf16.msra.mxu0 %v201
  %379 = vmatmul.bf16.gmra.mxu0 %v79
  %v380 = vpop.f32.mrf.mxu0
  %v381 = vadd.f32 %v61, %v380
  %v382 = vpop.f32.mrf.mxu0
  %v383 = vadd.f32 %v61, %v382
  %384 = vmatmul.bf16.gmra.mxu0 %v81
  %v385 = vpop.f32.mrf.mxu0
  %v386 = vadd.f32 %v61, %v385
  %v387 = vpop.f32.mrf.mxu0
  %v388 = vadd.f32 %v61, %v387
  %389 = vdwg.mxu0
  %390 = vmatpush.bf16.msra.mxu0 0
  %391 = vmatpush.bf16.msra.mxu0 0
  %392 = vmatpush.bf16.msra.mxu0 0
  %393 = vmatpush.bf16.msra.mxu0 0
  %394 = vmatpush.bf16.msra.mxu0 0
  %395 = vmatpush.bf16.msra.mxu0 0
  %396 = vmatpush.bf16.msra.mxu0 %v290
  %397 = vmatpush.bf16.msra.mxu0 %v233
  %398 = vmatmul.bf16.gmra.mxu0 %v277
  %v399 = vpop.f32.mrf.mxu0
  %v400 = vadd.f32 %v381, %v399
  %v401 = vpop.f32.mrf.mxu0
  %v402 = vadd.f32 %v383, %v401
  %403 = vmatmul.bf16.gmra.mxu0 %v280
  %v404 = vpop.f32.mrf.mxu0
  %v405 = vadd.f32 %v386, %v404
  %v406 = vpop.f32.mrf.mxu0
  %v407 = vadd.f32 %v388, %v406
  %408 = vdwg.mxu0
  %409 = vmatpush.bf16.msra.mxu0 %v230
  %410 = vmatpush.bf16.msra.mxu0 %v226
  %411 = vmatpush.bf16.msra.mxu0 %v222
  %412 = vmatpush.bf16.msra.mxu0 %v218
  %413 = vmatpush.bf16.msra.mxu0 %v214
  %414 = vmatpush.bf16.msra.mxu0 %v210
  %415 = vmatpush.bf16.msra.mxu0 %v206
  %416 = vmatpush.bf16.msra.mxu0 %v202
  %417 = vmatmul.bf16.gmra.mxu0 %v79
  %v418 = vpop.f32.mrf.mxu0
  %v419 = vadd.f32 %v62, %v418
  %v420 = vpop.f32.mrf.mxu0
  %v421 = vadd.f32 %v62, %v420
  %422 = vmatmul.bf16.gmra.mxu0 %v81
  %v423 = vpop.f32.mrf.mxu0
  %v424 = vadd.f32 %v62, %v423
  %v425 = vpop.f32.mrf.mxu0
  %v426 = vadd.f32 %v62, %v425
  %427 = vdwg.mxu0
  %428 = vmatpush.bf16.msra.mxu0 0
  %429 = vmatpush.bf16.msra.mxu0 0
  %430 = vmatpush.bf16.msra.mxu0 0
  %431 = vmatpush.bf16.msra.mxu0 0
  %432 = vmatpush.bf16.msra.mxu0 0
  %433 = vmatpush.bf16.msra.mxu0 0
  %434 = vmatpush.bf16.msra.mxu0 %v293
  %435 = vmatpush.bf16.msra.mxu0 %v234
  %436 = vmatmul.bf16.gmra.mxu0 %v277
  %v437 = vpop.f32.mrf.mxu0
  %v438 = vadd.f32 %v419, %v437
  %v439 = vpop.f32.mrf.mxu0
  %v440 = vadd.f32 %v421, %v439
  %441 = vmatmul.bf16.gmra.mxu0 %v280
  %v442 = vpop.f32.mrf.mxu0
  %v443 = vadd.f32 %v424, %v442
  %v444 = vpop.f32.mrf.mxu0
  %v445 = vadd.f32 %v426, %v444
  %446 = vdwg.mxu0
  %447 = vst [vmem:[%s3] sm:$0xff] %v324
  %448 = vst [vmem:[%s3 + $0x8] sm:$0xff] %v362
  %449 = vst [vmem:[%s3 + $0x10] sm:$0xff] %v400
  %450 = vst [vmem:[%s3 + $0x18] sm:$0xff] %v438
  %451 = vst [vmem:[%s3 + $0x20] sm:$0xff] %v326
  %452 = vst [vmem:[%s3 + $0x28] sm:$0xff] %v364
  %453 = vst [vmem:[%s3 + $0x30] sm:$0xff] %v402
  %454 = vst [vmem:[%s3 + $0x38] sm:$0xff] %v440
  %455 = vst [vmem:[%s3 + $0x40] sm:$0xff] %v329
  %456 = vst [vmem:[%s3 + $0x48] sm:$0xff] %v367
  %457 = vst [vmem:[%s3 + $0x50] sm:$0xff] %v405
  %458 = vst [vmem:[%s3 + $0x58] sm:$0xff] %v443
  %459 = vst [vmem:[%s3 + $0x60] sm:$0xff] %v331
  %460 = vst [vmem:[%s3 + $0x68] sm:$0xff] %v369
  %461 = vst [vmem:[%s3 + $0x70] sm:$0xff] %v407
  %462 = vst [vmem:[%s3 + $0x78] sm:$0xff] %v445
  // Predicated region
  $region14: #{_lambda_.6} parent=0 // pred_check
    _
  $region15: #{_lambda_.6} parent=0 // pred_check_branch
    %464 = sbr.rel (0) target = $region17
  $region16: #{_lambda_.6} parent=0 // pred_region
    _
  $region17: #{_lambda_.6} parent=0 // pred_fallthru
    _
  // Predicated region
  $region18: #{_lambda_.6} parent=0 // pred_check
    _
  $region19: #{_lambda_.6} parent=0 // pred_check_branch
    %466 = sbr.rel (0) target = $region21
  $region20: #{_lambda_.6} parent=0 // pred_region
    _
  $region21: #{_lambda_.6} parent=0 // pred_fallthru
    _

// kernel: _lambda_.8
$region0: #{_lambda_.8}
  #allocation0 [shape = 'u32[]', space=smem, size = 0x4, offset = 0x4, fixed_abs, tag = 'smem constant byte address 0x4 - core index']
  #allocation1 [shape = 'u32[72,128]{1,0:T(1,128)}', space=vmem, size = 0x9000, scoped, tag = 'internal scratch']
  %s0 = inlined_call_operand.vmem [shape: bf16[2,24,16], index: 0, kind: input, shape index: {}]
  %s1 = inlined_call_operand.vmem [shape: bf16[2,16,128], index: 1, kind: input, shape index: {}]
  %s2 = inlined_call_operand.vmem [shape: f32[2,24,128], index: 2, kind: output, shape index: {}]
  %s3 = sld [smem:[#allocation0]]
  $region41: #{_lambda_.8} parent=0
    _
  %s5 = ssub.s32 1, %s3
  %s6 = scalar_select 0, %s5, %s3
  loop: start=0, step=1, limit=4
  $region2: #{_lambda_.8} parent=0 // loop_pre_header
    _
  $region3: #{_lambda_.8} parent=0 // loop_header
    %s8 = sphi 0, %s12
    %p9 = scmp.ge.s32.totalorder %s8, 4
    %s18 = sphi 0, %s20
    %s21 = sphi 0, %s18
    %s22 = sphi 0, %s21
    %s38 = sphi 0, %s22
    %s44 = sphi 0, %s46
    %s47 = sphi 0, %s44
    %s48 = sphi 0, %s47
    %s64 = sphi 0, %s48
    %s70 = sphi 0, %s72
    %s73 = sphi 0, %s70
    %s74 = sphi 0, %s73
    %s90 = sphi 0, %s74
  $region4: #{_lambda_.8} parent=0 // loop_header_branch
    %11 = sbr.rel (%p9) target = $region8
  $region5: #{_lambda_.8} parent=0 // loop_body
    %s13 = ssub.s32 %s8, 1
    %s14 = ssub.s32 %s8, 2
    %s15 = sadd.s32 %s8, 1
    %s16 = ssub.s32 %s8, %s15
    %p17 = scmp.eq.s32.totalorder %s16, 0
    %s19 = sadd.s32 %s18, 1
    %s20 = scalar_select %p17, %s18, %s19
    %p23 = pneg %p17
    %p24 = scmp.eq.s32.totalorder %s8, 1
    %p25 = por %p23, %p24
    %p26 = scmp.ne.s32.totalorder %s18, %s21
    %p27 = scmp.eq.s32.totalorder %s8, 0
    %p28 = por %p26, %p27
    %p29 = scmp.ne.s32.totalorder %s18, %s21
    %p30 = scmp.eq.s32.totalorder %s13, 1
    %p31 = por %p29, %p30
    %p32 = scmp.ne.s32.totalorder %s21, %s22
    %p33 = scmp.eq.s32.totalorder %s13, 0
    %p34 = por %p32, %p33
    %p35 = scmp.ne.s32.totalorder %s21, %s22
    %p36 = scmp.eq.s32.totalorder %s14, 1
    %p37 = por %p35, %p36
    %p39 = scmp.ne.s32.totalorder %s22, %s38
    %p40 = scmp.eq.s32.totalorder %s14, 0
    %p41 = por %p39, %p40
    %s42 = ssub.s32 %s8, %s15
    %p43 = scmp.eq.s32.totalorder %s42, 0
    %s45 = sadd.s32 %s44, 1
    %s46 = scalar_select %p43, %s44, %s45
    %p49 = pneg %p43
    %p50 = scmp.eq.s32.totalorder %s8, 1
    %p51 = por %p49, %p50
    %p52 = scmp.ne.s32.totalorder %s44, %s47
    %p53 = scmp.eq.s32.totalorder %s8, 0
    %p54 = por %p52, %p53
    %p55 = scmp.ne.s32.totalorder %s44, %s47
    %p56 = scmp.eq.s32.totalorder %s13, 1
    %p57 = por %p55, %p56
    %p58 = scmp.ne.s32.totalorder %s47, %s48
    %p59 = scmp.eq.s32.totalorder %s13, 0
    %p60 = por %p58, %p59
    %p61 = scmp.ne.s32.totalorder %s47, %s48
    %p62 = scmp.eq.s32.totalorder %s14, 1
    %p63 = por %p61, %p62
    %p65 = scmp.ne.s32.totalorder %s48, %s64
    %p66 = scmp.eq.s32.totalorder %s14, 0
    %p67 = por %p65, %p66
    %s68 = ssub.s32 %s8, %s15
    %p69 = scmp.eq.s32.totalorder %s68, 0
    %s71 = sadd.s32 %s70, 1
    %s72 = scalar_select %p69, %s70, %s71
    %p75 = pneg %p69
    %p76 = scmp.eq.s32.totalorder %s8, 1
    %p77 = por %p75, %p76
    %p78 = scmp.ne.s32.totalorder %s70, %s73
    %p79 = scmp.eq.s32.totalorder %s8, 0
    %p80 = por %p78, %p79
    %p81 = scmp.ne.s32.totalorder %s70, %s73
    %p82 = scmp.eq.s32.totalorder %s13, 1
    %p83 = por %p81, %p82
    %p84 = scmp.ne.s32.totalorder %s73, %s74
    %p85 = scmp.eq.s32.totalorder %s13, 0
    %p86 = por %p84, %p85
    %p87 = scmp.ne.s32.totalorder %s73, %s74
    %p88 = scmp.eq.s32.totalorder %s14, 1
    %p89 = por %p87, %p88
    %p91 = scmp.ne.s32.totalorder %s74, %s90
    %p92 = scmp.eq.s32.totalorder %s14, 0
    %p93 = por %p91, %p92
    %p94 = scmp.le.s32.totalorder 1, %s8
    %p95 = scmp.lt.s32.totalorder %s8, 3
    %p96 = pnand %p94, %p95
    %p97 = pneg %p96
    // Predicated region
    $region9: #{_lambda_.8} parent=5 // pred_check
      _
    $region10: #{_lambda_.8} parent=5 // pred_check_branch
      %99 = sbr.rel (%p96) target = $region12
    $region11: #{_lambda_.8} parent=5 // pred_region
      %s100 = ssub.s32 %s8, 1
    $region12: #{_lambda_.8} parent=5 // pred_fallthru
      _
    %p101 = scmp.lt.s32.totalorder %s8, 2
    // Predicated region
    $region13: #{_lambda_.8} parent=5 // pred_check
      %p102 = pneg %p101
    $region14: #{_lambda_.8} parent=5 // pred_check_branch
      %104 = sbr.rel (%p102) target = $region16
    $region15: #{_lambda_.8} parent=5 // pred_region
      // Predicated region
      $region17: #{_lambda_.8} parent=15 // pred_check
        %p105 = pneg %p28
      $region18: #{_lambda_.8} parent=15 // pred_check_branch
        %107 = sbr.rel (%p105) target = $region20
      $region19: #{_lambda_.8} parent=15 // pred_region
        %p108 = scmp.lt.s32.totalorder %s8, 1
        %s109 = scalar_select %p108, %s8, 1
        %s110 = smul.addr %s109, 3
        %s111 = smul.addr %s110, 4
        %s112 = scalar_lea.vmem %s0, %s111
      $region20: #{_lambda_.8} parent=15 // pred_fallthru
        _
      // Predicated region
      $region21: #{_lambda_.8} parent=15 // pred_check
        %p113 = pneg %p54
      $region22: #{_lambda_.8} parent=15 // pred_check_branch
        %115 = sbr.rel (%p113) target = $region24
      $region23: #{_lambda_.8} parent=15 // pred_region
        %p116 = scmp.lt.s32.totalorder %s8, 1
        %s117 = scalar_select %p116, %s8, 1
        %s118 = smul.addr %s117, 2
        %s119 = smul.addr %s118, 4
        %s120 = scalar_lea.vmem %s1, %s119
      $region24: #{_lambda_.8} parent=15 // pred_fallthru
        _
    $region16: #{_lambda_.8} parent=5 // pred_fallthru
      _
    %p121 = scmp.le.s32.totalorder 1, %s8
    %p122 = scmp.lt.s32.totalorder %s8, 3
    %p123 = pnand %p121, %p122
    %p124 = pneg %p123
    // Predicated region
    $region25: #{_lambda_.8} parent=5 // pred_check
      _
    $region26: #{_lambda_.8} parent=5 // pred_check_branch
      %126 = sbr.rel (%p123) target = $region28
    $region27: #{_lambda_.8} parent=5 // pred_region
      %s127 = ssub.s32 %s8, 1
      %p128 = scmp.lt.s32.totalorder %s13, 1
      %s129 = scalar_select %p128, %s13, 1
      %s130 = smul.addr %s129, 3
      %s131 = smul.addr %s130, 4
      %s132 = scalar_lea.vmem %s0, %s131
      %p133 = pneg %p34
      %p134 = pneg %p31
      %p135 = scmp.lt.s32.totalorder %s13, 1
      %s136 = scalar_select %p135, %s13, 1
      %s137 = smul.addr %s136, 2
      %s138 = smul.addr %s137, 4
      %s139 = scalar_lea.vmem %s1, %s138
      %p140 = pneg %p60
      %p141 = pneg %p57
      %p142 = pneg %p86
      %p143 = pneg %p83
      %p144 = scmp.lt.s32.totalorder %s13, 1
      %s145 = scalar_select %p144, %s13, 1
      %s146 = smul.addr %s145, 3
      %s147 = smul.addr %s146, 8
      %s148 = scalar_lea.vmem %s2, %s147
      %p149 = scmp.lt.s32.totalorder %s13, 1
      %s150 = scalar_select %p149, %s13, 1
      %s151 = smul.addr %s150, 3
      %s152 = smul.addr %s151, 4
      %s153 = scalar_lea.vmem %s0, %s152
      %p154 = scmp.lt.s32.totalorder %s13, 1
      %s155 = scalar_select %p154, %s13, 1
      %s156 = smul.addr %s155, 2
      %s157 = smul.addr %s156, 4
      %s158 = scalar_lea.vmem %s1, %s157
      %p159 = scmp.lt.s32.totalorder %s13, 1
      %s160 = scalar_select %p159, %s13, 1
      %s161 = smul.addr %s160, 3
      %s162 = smul.addr %s161, 8
      %s163 = scalar_lea.vmem %s2, %s162
      %v165 = vld [vmem:[%s153] sm:$0xf]
      %v166 = vld [vmem:[%s153 + $0x4] sm:$0xf]
      %v167 = vld [vmem:[%s153 + $0x8] sm:$0xf]
      %v168 = vld [vmem:[%s158] sm:$0xf]
      %v169 = vld [vmem:[%s158 + $0x4] sm:$0xf]
      %v173 = vunpack.c.l.b16 %v165
      %v174 = vunpack.c.l.b16 %v166
      %v175 = vunpack.c.l.b16 %v167
      %v176 = vpack.c.b16 %v174, %v173
      %v177 = vpack.c.b16 %v175, %v175
      %v180 = vunpack.c.l.b16 %v168
      %v181 = vunpack.c.l.b16 %v169
      %v182 = vpack.c.b16 %v181, %v180
      %vm184 = vcmask 130048
      %v186 = vsel %vm184, %v176, 0
      %v189 = vsel %vm184, %v177, 0
      %191 = vmatpush.bf16.msra.mxu0 0
      %192 = vmatpush.bf16.msra.mxu0 0
      %193 = vmatpush.bf16.msra.mxu0 0
      %194 = vmatpush.bf16.msra.mxu0 0
      %195 = vmatpush.bf16.msra.mxu0 0
      %196 = vmatpush.bf16.msra.mxu0 0
      %197 = vmatpush.bf16.msra.mxu0 0
      %198 = vmatpush.bf16.msra.mxu0 %v182
      %199 = vmatmul.bf16.gmra.mxu0 %v186
      %v200 = vpop.f32.mrf.mxu0
      %v201 = vadd.f32 0.0, %v200
      %v202 = vpop.f32.mrf.mxu0
      %v203 = vadd.f32 0.0, %v202
      %204 = vmatmul.bf16.gmra.mxu0 %v189
      %v205 = vpop.f32.mrf.mxu0
      %v206 = vadd.f32 0.0, %v205
      %v207 = vpop.f32.mrf.mxu0
      %208 = vdwg.mxu0
      %209 = vst [vmem:[%s163] sm:$0xff] %v201
      %210 = vst [vmem:[%s163 + $0x8] sm:$0xff] %v203
      %211 = vst [vmem:[%s163 + $0x10] sm:$0xff] %v206
      %p212 = scmp.lt.s32.totalorder %s13, 1
      %s213 = scalar_select %p212, %s13, 1
      %s214 = smul.addr %s213, 3
      %s215 = smul.addr %s214, 8
      %s216 = scalar_lea.vmem %s2, %s215
      // Predicated region
      $region29: #{_lambda_.8} parent=27 // pred_check
        %p217 = pneg %p83
      $region30: #{_lambda_.8} parent=27 // pred_check_branch
        %219 = sbr.rel (%p217) target = $region32
      $region31: #{_lambda_.8} parent=27 // pred_region
        _
      $region32: #{_lambda_.8} parent=27 // pred_fallthru
        _
    $region28: #{_lambda_.8} parent=5 // pred_fallthru
      _
    %p220 = scmp.le.s32.totalorder 2, %s8
    // Predicated region
    $region33: #{_lambda_.8} parent=5 // pred_check
      %p221 = pneg %p220
    $region34: #{_lambda_.8} parent=5 // pred_check_branch
      %223 = sbr.rel (%p221) target = $region36
    $region35: #{_lambda_.8} parent=5 // pred_region
      %s224 = ssub.s32 %s8, 2
      // Predicated region
      $region37: #{_lambda_.8} parent=35 // pred_check
        %p225 = pneg %p89
      $region38: #{_lambda_.8} parent=35 // pred_check_branch
        %227 = sbr.rel (%p225) target = $region40
      $region39: #{_lambda_.8} parent=35 // pred_region
        %p228 = scmp.lt.s32.totalorder %s14, 1
        %s229 = scalar_select %p228, %s14, 1
        %s230 = smul.addr %s229, 3
        %s231 = smul.addr %s230, 8
        %s232 = scalar_lea.vmem %s2, %s231
      $region40: #{_lambda_.8} parent=35 // pred_fallthru
        _
    $region36: #{_lambda_.8} parent=5 // pred_fallthru
      _
  $region6: #{_lambda_.8} parent=0 // loop_footer
    %s12 = sadd.s32 1, %s8
  $region7: #{_lambda_.8} parent=0 // loop_footer_branch
    %7 = sbr.rel target = $region3
  $region8: #{_lambda_.8} parent=0 // loop_exit
    _

// kernel: _lambda_.9
$region0: #{_lambda_.9}
  #allocation0 [shape = 'u32[]', space=smem, size = 0x4, offset = 0x4, fixed_abs, tag = 'smem constant byte address 0x4 - core index']
  #allocation1 [shape = 'u32[72,128]{1,0:T(1,128)}', space=vmem, size = 0x9000, scoped, tag = 'internal scratch']
  %s0 = inlined_call_operand.vmem [shape: bf16[24,256], index: 0, kind: input, shape index: {}]
  %s1 = inlined_call_operand.vmem [shape: bf16[24,256], index: 1, kind: input, shape index: {}]
  %s2 = inlined_call_operand.vmem [shape: bf16[256,1024], index: 2, kind: input, shape index: {}]
  %s3 = inlined_call_operand.vmem [shape: f32[1,4], index: 3, kind: input, shape index: {}]
  %s4 = inlined_call_operand.vmem [shape: f32[24,4], index: 4, kind: output, shape index: {}]
  %s5 = sld [smem:[#allocation0]]
  $region26: #{_lambda_.9} parent=0
    _
  %s7 = ssub.s32 1, %s5
  %s8 = scalar_select 0, %s7, %s5
  // Predicated region
  $region2: #{_lambda_.9} parent=0 // pred_check
    _
  $region3: #{_lambda_.9} parent=0 // pred_check_branch
    %10 = sbr.rel (0) target = $region5
  $region4: #{_lambda_.9} parent=0 // pred_region
    _
  $region5: #{_lambda_.9} parent=0 // pred_fallthru
    _
  // Predicated region
  $region6: #{_lambda_.9} parent=0 // pred_check
    _
  $region7: #{_lambda_.9} parent=0 // pred_check_branch
    %12 = sbr.rel (0) target = $region9
  $region8: #{_lambda_.9} parent=0 // pred_region
    _
  $region9: #{_lambda_.9} parent=0 // pred_fallthru
    _
  // Predicated region
  $region10: #{_lambda_.9} parent=0 // pred_check
    _
  $region11: #{_lambda_.9} parent=0 // pred_check_branch
    %14 = sbr.rel (0) target = $region13
  $region12: #{_lambda_.9} parent=0 // pred_region
    _
  $region13: #{_lambda_.9} parent=0 // pred_fallthru
    _
  // Predicated region
  $region14: #{_lambda_.9} parent=0 // pred_check
    _
  $region15: #{_lambda_.9} parent=0 // pred_check_branch
    %16 = sbr.rel (0) target = $region17
  $region16: #{_lambda_.9} parent=0 // pred_region
    _
  $region17: #{_lambda_.9} parent=0 // pred_fallthru
    _
  %v17 = vld [vmem:[%s0] sm:$0xff]
  %v18 = vld [vmem:[%s0 + $0x8] sm:$0xff]
  %v19 = vld [vmem:[%s0 + $0x10] sm:$0xff]
  %v20 = vld [vmem:[%s2] sm:$0xff]
  %v21 = vld [vmem:[%s2 + $0x8] sm:$0xff]
  %v22 = vld [vmem:[%s2 + $0x10] sm:$0xff]
  %v23 = vld [vmem:[%s2 + $0x18] sm:$0xff]
  %v24 = vld [vmem:[%s2 + $0x20] sm:$0xff]
  %v25 = vld [vmem:[%s2 + $0x28] sm:$0xff]
  %v26 = vld [vmem:[%s2 + $0x30] sm:$0xff]
  %v27 = vld [vmem:[%s2 + $0x38] sm:$0xff]
  %v28 = vld [vmem:[%s2 + $0x40] sm:$0xff]
  %v29 = vld [vmem:[%s2 + $0x48] sm:$0xff]
  %v30 = vld [vmem:[%s2 + $0x50] sm:$0xff]
  %v31 = vld [vmem:[%s2 + $0x58] sm:$0xff]
  %v32 = vld [vmem:[%s2 + $0x60] sm:$0xff]
  %v33 = vld [vmem:[%s2 + $0x68] sm:$0xff]
  %v34 = vld [vmem:[%s2 + $0x70] sm:$0xff]
  %v35 = vld [vmem:[%s2 + $0x78] sm:$0xff]
  %v36 = vld [vmem:[%s2 + $0x80] sm:$0xff]
  %v37 = vld [vmem:[%s2 + $0x88] sm:$0xff]
  %v38 = vld [vmem:[%s2 + $0x90] sm:$0xff]
  %v39 = vld [vmem:[%s2 + $0x98] sm:$0xff]
  %v40 = vld [vmem:[%s2 + $0xa0] sm:$0xff]
  %v41 = vld [vmem:[%s2 + $0xa8] sm:$0xff]
  %v42 = vld [vmem:[%s2 + $0xb0] sm:$0xff]
  %v43 = vld [vmem:[%s2 + $0xb8] sm:$0xff]
  %v44 = vld [vmem:[%s2 + $0xc0] sm:$0xff]
  %v45 = vld [vmem:[%s2 + $0xc8] sm:$0xff]
  %v46 = vld [vmem:[%s2 + $0xd0] sm:$0xff]
  %v47 = vld [vmem:[%s2 + $0xd8] sm:$0xff]
  %v48 = vld [vmem:[%s2 + $0xe0] sm:$0xff]
  %v49 = vld [vmem:[%s2 + $0xe8] sm:$0xff]
  %v50 = vld [vmem:[%s2 + $0xf0] sm:$0xff]
  %v51 = vld [vmem:[%s2 + $0xf8] sm:$0xff]
  %v52 = vld [vmem:[%s2 + $0x100] sm:$0xff]
  %v53 = vld [vmem:[%s2 + $0x108] sm:$0xff]
  %v54 = vld [vmem:[%s2 + $0x110] sm:$0xff]
  %v55 = vld [vmem:[%s2 + $0x118] sm:$0xff]
  %v56 = vld [vmem:[%s2 + $0x120] sm:$0xff]
  %v57 = vld [vmem:[%s2 + $0x128] sm:$0xff]
  %v58 = vld [vmem:[%s2 + $0x130] sm:$0xff]
  %v59 = vld [vmem:[%s2 + $0x138] sm:$0xff]
  %v60 = vld [vmem:[%s2 + $0x140] sm:$0xff]
  %v61 = vld [vmem:[%s2 + $0x148] sm:$0xff]
  %v62 = vld [vmem:[%s2 + $0x150] sm:$0xff]
  %v63 = vld [vmem:[%s2 + $0x158] sm:$0xff]
  %v64 = vld [vmem:[%s2 + $0x160] sm:$0xff]
  %v65 = vld [vmem:[%s2 + $0x168] sm:$0xff]
  %v66 = vld [vmem:[%s2 + $0x170] sm:$0xff]
  %v67 = vld [vmem:[%s2 + $0x178] sm:$0xff]
  %v68 = vld [vmem:[%s2 + $0x180] sm:$0xff]
  %v69 = vld [vmem:[%s2 + $0x188] sm:$0xff]
  %v70 = vld [vmem:[%s2 + $0x190] sm:$0xff]
  %v71 = vld [vmem:[%s2 + $0x198] sm:$0xff]
  %v72 = vld [vmem:[%s2 + $0x1a0] sm:$0xff]
  %v73 = vld [vmem:[%s2 + $0x1a8] sm:$0xff]
  %v74 = vld [vmem:[%s2 + $0x1b0] sm:$0xff]
  %v75 = vld [vmem:[%s2 + $0x1b8] sm:$0xff]
  %v76 = vld [vmem:[%s2 + $0x1c0] sm:$0xff]
  %v77 = vld [vmem:[%s2 + $0x1c8] sm:$0xff]
  %v78 = vld [vmem:[%s2 + $0x1d0] sm:$0xff]
  %v79 = vld [vmem:[%s2 + $0x1d8] sm:$0xff]
  %v80 = vld [vmem:[%s2 + $0x1e0] sm:$0xff]
  %v81 = vld [vmem:[%s2 + $0x1e8] sm:$0xff]
  %v82 = vld [vmem:[%s2 + $0x1f0] sm:$0xff]
  %v83 = vld [vmem:[%s2 + $0x1f8] sm:$0xff]
  %v84 = vld [vmem:[%s2 + $0x200] sm:$0xff]
  %v85 = vld [vmem:[%s2 + $0x208] sm:$0xff]
  %v86 = vld [vmem:[%s2 + $0x210] sm:$0xff]
  %v87 = vld [vmem:[%s2 + $0x218] sm:$0xff]
  %v88 = vld [vmem:[%s2 + $0x220] sm:$0xff]
  %v89 = vld [vmem:[%s2 + $0x228] sm:$0xff]
  %v90 = vld [vmem:[%s2 + $0x230] sm:$0xff]
  %v91 = vld [vmem:[%s2 + $0x238] sm:$0xff]
  %v92 = vld [vmem:[%s2 + $0x240] sm:$0xff]
  %v93 = vld [vmem:[%s2 + $0x248] sm:$0xff]
  %v94 = vld [vmem:[%s2 + $0x250] sm:$0xff]
  %v95 = vld [vmem:[%s2 + $0x258] sm:$0xff]
  %v96 = vld [vmem:[%s2 + $0x260] sm:$0xff]
  %v97 = vld [vmem:[%s2 + $0x268] sm:$0xff]
  %v98 = vld [vmem:[%s2 + $0x270] sm:$0xff]
  %v99 = vld [vmem:[%s2 + $0x278] sm:$0xff]
  %v100 = vld [vmem:[%s2 + $0x280] sm:$0xff]
  %v101 = vld [vmem:[%s2 + $0x288] sm:$0xff]
  %v102 = vld [vmem:[%s2 + $0x290] sm:$0xff]
  %v103 = vld [vmem:[%s2 + $0x298] sm:$0xff]
  %v104 = vld [vmem:[%s2 + $0x2a0] sm:$0xff]
  %v105 = vld [vmem:[%s2 + $0x2a8] sm:$0xff]
  %v106 = vld [vmem:[%s2 + $0x2b0] sm:$0xff]
  %v107 = vld [vmem:[%s2 + $0x2b8] sm:$0xff]
  %v108 = vld [vmem:[%s2 + $0x2c0] sm:$0xff]
  %v109 = vld [vmem:[%s2 + $0x2c8] sm:$0xff]
  %v110 = vld [vmem:[%s2 + $0x2d0] sm:$0xff]
  %v111 = vld [vmem:[%s2 + $0x2d8] sm:$0xff]
  %v112 = vld [vmem:[%s2 + $0x2e0] sm:$0xff]
  %v113 = vld [vmem:[%s2 + $0x2e8] sm:$0xff]
  %v114 = vld [vmem:[%s2 + $0x2f0] sm:$0xff]
  %v115 = vld [vmem:[%s2 + $0x2f8] sm:$0xff]
  %v116 = vld [vmem:[%s2 + $0x300] sm:$0xff]
  %v117 = vld [vmem:[%s2 + $0x308] sm:$0xff]
  %v118 = vld [vmem:[%s2 + $0x310] sm:$0xff]
  %v119 = vld [vmem:[%s2 + $0x318] sm:$0xff]
  %v120 = vld [vmem:[%s2 + $0x320] sm:$0xff]
  %v121 = vld [vmem:[%s2 + $0x328] sm:$0xff]
  %v122 = vld [vmem:[%s2 + $0x330] sm:$0xff]
  %v123 = vld [vmem:[%s2 + $0x338] sm:$0xff]
  %v124 = vld [vmem:[%s2 + $0x340] sm:$0xff]
  %v125 = vld [vmem:[%s2 + $0x348] sm:$0xff]
  %v126 = vld [vmem:[%s2 + $0x350] sm:$0xff]
  %v127 = vld [vmem:[%s2 + $0x358] sm:$0xff]
  %v128 = vld [vmem:[%s2 + $0x360] sm:$0xff]
  %v129 = vld [vmem:[%s2 + $0x368] sm:$0xff]
  %v130 = vld [vmem:[%s2 + $0x370] sm:$0xff]
  %v131 = vld [vmem:[%s2 + $0x378] sm:$0xff]
  %v132 = vld [vmem:[%s2 + $0x380] sm:$0xff]
  %v133 = vld [vmem:[%s2 + $0x388] sm:$0xff]
  %v134 = vld [vmem:[%s2 + $0x390] sm:$0xff]
  %v135 = vld [vmem:[%s2 + $0x398] sm:$0xff]
  %v136 = vld [vmem:[%s2 + $0x3a0] sm:$0xff]
  %v137 = vld [vmem:[%s2 + $0x3a8] sm:$0xff]
  %v138 = vld [vmem:[%s2 + $0x3b0] sm:$0xff]
  %v139 = vld [vmem:[%s2 + $0x3b8] sm:$0xff]
  %v140 = vld [vmem:[%s2 + $0x3c0] sm:$0xff]
  %v141 = vld [vmem:[%s2 + $0x3c8] sm:$0xff]
  %v142 = vld [vmem:[%s2 + $0x3d0] sm:$0xff]
  %v143 = vld [vmem:[%s2 + $0x3d8] sm:$0xff]
  %v144 = vld [vmem:[%s2 + $0x3e0] sm:$0xff]
  %v145 = vld [vmem:[%s2 + $0x3e8] sm:$0xff]
  %v146 = vld [vmem:[%s2 + $0x3f0] sm:$0xff]
  %v147 = vld [vmem:[%s2 + $0x3f8] sm:$0xff]
  %v151 = vunpack.c.l.b16 %v17
  %v152 = vunpack.c.h.b16 %v17
  %v153 = vunpack.c.l.b16 %v18
  %v154 = vunpack.c.h.b16 %v18
  %v155 = vunpack.c.l.b16 %v19
  %v156 = vunpack.c.h.b16 %v19
  %v157 = vpack.c.b16 %v153, %v151
  %v158 = vpack.c.b16 %v154, %v152
  %v159 = vpack.c.b16 %v155, %v155
  %v160 = vpack.c.b16 %v156, %v156
  %v293 = vunpack.c.l.b16 %v20
  %v294 = vunpack.c.h.b16 %v20
  %v295 = vunpack.c.l.b16 %v21
  %v296 = vunpack.c.h.b16 %v21
  %v297 = vunpack.c.l.b16 %v22
  %v298 = vunpack.c.h.b16 %v22
  %v299 = vunpack.c.l.b16 %v23
  %v300 = vunpack.c.h.b16 %v23
  %v301 = vunpack.c.l.b16 %v24
  %v302 = vunpack.c.h.b16 %v24
  %v303 = vunpack.c.l.b16 %v25
  %v304 = vunpack.c.h.b16 %v25
  %v305 = vunpack.c.l.b16 %v26
  %v306 = vunpack.c.h.b16 %v26
  %v307 = vunpack.c.l.b16 %v27
  %v308 = vunpack.c.h.b16 %v27
  %v309 = vunpack.c.l.b16 %v28
  %v310 = vunpack.c.h.b16 %v28
  %v311 = vunpack.c.l.b16 %v29
  %v312 = vunpack.c.h.b16 %v29
  %v313 = vunpack.c.l.b16 %v30
  %v314 = vunpack.c.h.b16 %v30
  %v315 = vunpack.c.l.b16 %v31
  %v316 = vunpack.c.h.b16 %v31
  %v317 = vunpack.c.l.b16 %v32
  %v318 = vunpack.c.h.b16 %v32
  %v319 = vunpack.c.l.b16 %v33
  %v320 = vunpack.c.h.b16 %v33
  %v321 = vunpack.c.l.b16 %v34
  %v322 = vunpack.c.h.b16 %v34
  %v323 = vunpack.c.l.b16 %v35
  %v324 = vunpack.c.h.b16 %v35
  %v325 = vunpack.c.l.b16 %v36
  %v326 = vunpack.c.h.b16 %v36
  %v327 = vunpack.c.l.b16 %v37
  %v328 = vunpack.c.h.b16 %v37
  %v329 = vunpack.c.l.b16 %v38
  %v330 = vunpack.c.h.b16 %v38
  %v331 = vunpack.c.l.b16 %v39
  %v332 = vunpack.c.h.b16 %v39
  %v333 = vunpack.c.l.b16 %v40
  %v334 = vunpack.c.h.b16 %v40
  %v335 = vunpack.c.l.b16 %v41
  %v336 = vunpack.c.h.b16 %v41
  %v337 = vunpack.c.l.b16 %v42
  %v338 = vunpack.c.h.b16 %v42
  %v339 = vunpack.c.l.b16 %v43
  %v340 = vunpack.c.h.b16 %v43
  %v341 = vunpack.c.l.b16 %v44
  %v342 = vunpack.c.h.b16 %v44
  %v343 = vunpack.c.l.b16 %v45
  %v344 = vunpack.c.h.b16 %v45
  %v345 = vunpack.c.l.b16 %v46
  %v346 = vunpack.c.h.b16 %v46
  %v347 = vunpack.c.l.b16 %v47
  %v348 = vunpack.c.h.b16 %v47
  %v349 = vunpack.c.l.b16 %v48
  %v350 = vunpack.c.h.b16 %v48
  %v351 = vunpack.c.l.b16 %v49
  %v352 = vunpack.c.h.b16 %v49
  %v353 = vunpack.c.l.b16 %v50
  %v354 = vunpack.c.h.b16 %v50
  %v355 = vunpack.c.l.b16 %v51
  %v356 = vunpack.c.h.b16 %v51
  %v357 = vunpack.c.l.b16 %v52
  %v358 = vunpack.c.h.b16 %v52
  %v359 = vunpack.c.l.b16 %v53
  %v360 = vunpack.c.h.b16 %v53
  %v361 = vunpack.c.l.b16 %v54
  %v362 = vunpack.c.h.b16 %v54
  %v363 = vunpack.c.l.b16 %v55
  %v364 = vunpack.c.h.b16 %v55
  %v365 = vunpack.c.l.b16 %v56
  %v366 = vunpack.c.h.b16 %v56
  %v367 = vunpack.c.l.b16 %v57
  %v368 = vunpack.c.h.b16 %v57
  %v369 = vunpack.c.l.b16 %v58
  %v370 = vunpack.c.h.b16 %v58
  %v371 = vunpack.c.l.b16 %v59
  %v372 = vunpack.c.h.b16 %v59
  %v373 = vunpack.c.l.b16 %v60
  %v374 = vunpack.c.h.b16 %v60
  %v375 = vunpack.c.l.b16 %v61
  %v376 = vunpack.c.h.b16 %v61
  %v377 = vunpack.c.l.b16 %v62
  %v378 = vunpack.c.h.b16 %v62
  %v379 = vunpack.c.l.b16 %v63
  %v380 = vunpack.c.h.b16 %v63
  %v381 = vunpack.c.l.b16 %v64
  %v382 = vunpack.c.h.b16 %v64
  %v383 = vunpack.c.l.b16 %v65
  %v384 = vunpack.c.h.b16 %v65
  %v385 = vunpack.c.l.b16 %v66
  %v386 = vunpack.c.h.b16 %v66
  %v387 = vunpack.c.l.b16 %v67
  %v388 = vunpack.c.h.b16 %v67
  %v389 = vunpack.c.l.b16 %v68
  %v390 = vunpack.c.h.b16 %v68
  %v391 = vunpack.c.l.b16 %v69
  %v392 = vunpack.c.h.b16 %v69
  %v393 = vunpack.c.l.b16 %v70
  %v394 = vunpack.c.h.b16 %v70
  %v395 = vunpack.c.l.b16 %v71
  %v396 = vunpack.c.h.b16 %v71
  %v397 = vunpack.c.l.b16 %v72
  %v398 = vunpack.c.h.b16 %v72
  %v399 = vunpack.c.l.b16 %v73
  %v400 = vunpack.c.h.b16 %v73
  %v401 = vunpack.c.l.b16 %v74
  %v402 = vunpack.c.h.b16 %v74
  %v403 = vunpack.c.l.b16 %v75
  %v404 = vunpack.c.h.b16 %v75
  %v405 = vunpack.c.l.b16 %v76
  %v406 = vunpack.c.h.b16 %v76
  %v407 = vunpack.c.l.b16 %v77
  %v408 = vunpack.c.h.b16 %v77
  %v409 = vunpack.c.l.b16 %v78
  %v410 = vunpack.c.h.b16 %v78
  %v411 = vunpack.c.l.b16 %v79
  %v412 = vunpack.c.h.b16 %v79
  %v413 = vunpack.c.l.b16 %v80
  %v414 = vunpack.c.h.b16 %v80
  %v415 = vunpack.c.l.b16 %v81
  %v416 = vunpack.c.h.b16 %v81
  %v417 = vunpack.c.l.b16 %v82
  %v418 = vunpack.c.h.b16 %v82
  %v419 = vunpack.c.l.b16 %v83
  %v420 = vunpack.c.h.b16 %v83
  %v421 = vunpack.c.l.b16 %v84
  %v422 = vunpack.c.h.b16 %v84
  %v423 = vunpack.c.l.b16 %v85
  %v424 = vunpack.c.h.b16 %v85
  %v425 = vunpack.c.l.b16 %v86
  %v426 = vunpack.c.h.b16 %v86
  %v427 = vunpack.c.l.b16 %v87
  %v428 = vunpack.c.h.b16 %v87
  %v429 = vunpack.c.l.b16 %v88
  %v430 = vunpack.c.h.b16 %v88
  %v431 = vunpack.c.l.b16 %v89
  %v432 = vunpack.c.h.b16 %v89
  %v433 = vunpack.c.l.b16 %v90
  %v434 = vunpack.c.h.b16 %v90
  %v435 = vunpack.c.l.b16 %v91
  %v436 = vunpack.c.h.b16 %v91
  %v437 = vunpack.c.l.b16 %v92
  %v438 = vunpack.c.h.b16 %v92
  %v439 = vunpack.c.l.b16 %v93
  %v440 = vunpack.c.h.b16 %v93
  %v441 = vunpack.c.l.b16 %v94
  %v442 = vunpack.c.h.b16 %v94
  %v443 = vunpack.c.l.b16 %v95
  %v444 = vunpack.c.h.b16 %v95
  %v445 = vunpack.c.l.b16 %v96
  %v446 = vunpack.c.h.b16 %v96
  %v447 = vunpack.c.l.b16 %v97
  %v448 = vunpack.c.h.b16 %v97
  %v449 = vunpack.c.l.b16 %v98
  %v450 = vunpack.c.h.b16 %v98
  %v451 = vunpack.c.l.b16 %v99
  %v452 = vunpack.c.h.b16 %v99
  %v453 = vunpack.c.l.b16 %v100
  %v454 = vunpack.c.h.b16 %v100
  %v455 = vunpack.c.l.b16 %v101
  %v456 = vunpack.c.h.b16 %v101
  %v457 = vunpack.c.l.b16 %v102
  %v458 = vunpack.c.h.b16 %v102
  %v459 = vunpack.c.l.b16 %v103
  %v460 = vunpack.c.h.b16 %v103
  %v461 = vunpack.c.l.b16 %v104
  %v462 = vunpack.c.h.b16 %v104
  %v463 = vunpack.c.l.b16 %v105
  %v464 = vunpack.c.h.b16 %v105
  %v465 = vunpack.c.l.b16 %v106
  %v466 = vunpack.c.h.b16 %v106
  %v467 = vunpack.c.l.b16 %v107
  %v468 = vunpack.c.h.b16 %v107
  %v469 = vunpack.c.l.b16 %v108
  %v470 = vunpack.c.h.b16 %v108
  %v471 = vunpack.c.l.b16 %v109
  %v472 = vunpack.c.h.b16 %v109
  %v473 = vunpack.c.l.b16 %v110
  %v474 = vunpack.c.h.b16 %v110
  %v475 = vunpack.c.l.b16 %v111
  %v476 = vunpack.c.h.b16 %v111
  %v477 = vunpack.c.l.b16 %v112
  %v478 = vunpack.c.h.b16 %v112
  %v479 = vunpack.c.l.b16 %v113
  %v480 = vunpack.c.h.b16 %v113
  %v481 = vunpack.c.l.b16 %v114
  %v482 = vunpack.c.h.b16 %v114
  %v483 = vunpack.c.l.b16 %v115
  %v484 = vunpack.c.h.b16 %v115
  %v485 = vunpack.c.l.b16 %v116
  %v486 = vunpack.c.h.b16 %v116
  %v487 = vunpack.c.l.b16 %v117
  %v488 = vunpack.c.h.b16 %v117
  %v489 = vunpack.c.l.b16 %v118
  %v490 = vunpack.c.h.b16 %v118
  %v491 = vunpack.c.l.b16 %v119
  %v492 = vunpack.c.h.b16 %v119
  %v493 = vunpack.c.l.b16 %v120
  %v494 = vunpack.c.h.b16 %v120
  %v495 = vunpack.c.l.b16 %v121
  %v496 = vunpack.c.h.b16 %v121
  %v497 = vunpack.c.l.b16 %v122
  %v498 = vunpack.c.h.b16 %v122
  %v499 = vunpack.c.l.b16 %v123
  %v500 = vunpack.c.h.b16 %v123
  %v501 = vunpack.c.l.b16 %v124
  %v502 = vunpack.c.h.b16 %v124
  %v503 = vunpack.c.l.b16 %v125
  %v504 = vunpack.c.h.b16 %v125
  %v505 = vunpack.c.l.b16 %v126
  %v506 = vunpack.c.h.b16 %v126
  %v507 = vunpack.c.l.b16 %v127
  %v508 = vunpack.c.h.b16 %v127
  %v509 = vunpack.c.l.b16 %v128
  %v510 = vunpack.c.h.b16 %v128
  %v511 = vunpack.c.l.b16 %v129
  %v512 = vunpack.c.h.b16 %v129
  %v513 = vunpack.c.l.b16 %v130
  %v514 = vunpack.c.h.b16 %v130
  %v515 = vunpack.c.l.b16 %v131
  %v516 = vunpack.c.h.b16 %v131
  %v517 = vunpack.c.l.b16 %v132
  %v518 = vunpack.c.h.b16 %v132
  %v519 = vunpack.c.l.b16 %v133
  %v520 = vunpack.c.h.b16 %v133
  %v521 = vunpack.c.l.b16 %v134
  %v522 = vunpack.c.h.b16 %v134
  %v523 = vunpack.c.l.b16 %v135
  %v524 = vunpack.c.h.b16 %v135
  %v525 = vunpack.c.l.b16 %v136
  %v526 = vunpack.c.h.b16 %v136
  %v527 = vunpack.c.l.b16 %v137
  %v528 = vunpack.c.h.b16 %v137
  %v529 = vunpack.c.l.b16 %v138
  %v530 = vunpack.c.h.b16 %v138
  %v531 = vunpack.c.l.b16 %v139
  %v532 = vunpack.c.h.b16 %v139
  %v533 = vunpack.c.l.b16 %v140
  %v534 = vunpack.c.h.b16 %v140
  %v535 = vunpack.c.l.b16 %v141
  %v536 = vunpack.c.h.b16 %v141
  %v537 = vunpack.c.l.b16 %v142
  %v538 = vunpack.c.h.b16 %v142
  %v539 = vunpack.c.l.b16 %v143
  %v540 = vunpack.c.h.b16 %v143
  %v541 = vunpack.c.l.b16 %v144
  %v542 = vunpack.c.h.b16 %v144
  %v543 = vunpack.c.l.b16 %v145
  %v544 = vunpack.c.h.b16 %v145
  %v545 = vunpack.c.l.b16 %v146
  %v546 = vunpack.c.h.b16 %v146
  %v547 = vunpack.c.l.b16 %v147
  %v548 = vunpack.c.h.b16 %v147
  %v549 = vpack.c.b16 %v301, %v293
  %v550 = vpack.c.b16 %v302, %v294
  %v551 = vpack.c.b16 %v303, %v295
  %v552 = vpack.c.b16 %v304, %v296
  %v553 = vpack.c.b16 %v305, %v297
  %v554 = vpack.c.b16 %v306, %v298
  %v555 = vpack.c.b16 %v307, %v299
  %v556 = vpack.c.b16 %v308, %v300
  %v557 = vpack.c.b16 %v317, %v309
  %v558 = vpack.c.b16 %v318, %v310
  %v559 = vpack.c.b16 %v319, %v311
  %v560 = vpack.c.b16 %v320, %v312
  %v561 = vpack.c.b16 %v321, %v313
  %v562 = vpack.c.b16 %v322, %v314
  %v563 = vpack.c.b16 %v323, %v315
  %v564 = vpack.c.b16 %v324, %v316
  %v565 = vpack.c.b16 %v333, %v325
  %v566 = vpack.c.b16 %v334, %v326
  %v567 = vpack.c.b16 %v335, %v327
  %v568 = vpack.c.b16 %v336, %v328
  %v569 = vpack.c.b16 %v337, %v329
  %v570 = vpack.c.b16 %v338, %v330
  %v571 = vpack.c.b16 %v339, %v331
  %v572 = vpack.c.b16 %v340, %v332
  %v573 = vpack.c.b16 %v349, %v341
  %v574 = vpack.c.b16 %v350, %v342
  %v575 = vpack.c.b16 %v351, %v343
  %v576 = vpack.c.b16 %v352, %v344
  %v577 = vpack.c.b16 %v353, %v345
  %v578 = vpack.c.b16 %v354, %v346
  %v579 = vpack.c.b16 %v355, %v347
  %v580 = vpack.c.b16 %v356, %v348
  %v581 = vpack.c.b16 %v365, %v357
  %v582 = vpack.c.b16 %v366, %v358
  %v583 = vpack.c.b16 %v367, %v359
  %v584 = vpack.c.b16 %v368, %v360
  %v585 = vpack.c.b16 %v369, %v361
  %v586 = vpack.c.b16 %v370, %v362
  %v587 = vpack.c.b16 %v371, %v363
  %v588 = vpack.c.b16 %v372, %v364
  %v589 = vpack.c.b16 %v381, %v373
  %v590 = vpack.c.b16 %v382, %v374
  %v591 = vpack.c.b16 %v383, %v375
  %v592 = vpack.c.b16 %v384, %v376
  %v593 = vpack.c.b16 %v385, %v377
  %v594 = vpack.c.b16 %v386, %v378
  %v595 = vpack.c.b16 %v387, %v379
  %v596 = vpack.c.b16 %v388, %v380
  %v597 = vpack.c.b16 %v397, %v389
  %v598 = vpack.c.b16 %v398, %v390
  %v599 = vpack.c.b16 %v399, %v391
  %v600 = vpack.c.b16 %v400, %v392
  %v601 = vpack.c.b16 %v401, %v393
  %v602 = vpack.c.b16 %v402, %v394
  %v603 = vpack.c.b16 %v403, %v395
  %v604 = vpack.c.b16 %v404, %v396
  %v605 = vpack.c.b16 %v413, %v405
  %v606 = vpack.c.b16 %v414, %v406
  %v607 = vpack.c.b16 %v415, %v407
  %v608 = vpack.c.b16 %v416, %v408
  %v609 = vpack.c.b16 %v417, %v409
  %v610 = vpack.c.b16 %v418, %v410
  %v611 = vpack.c.b16 %v419, %v411
  %v612 = vpack.c.b16 %v420, %v412
  %v613 = vpack.c.b16 %v429, %v421
  %v614 = vpack.c.b16 %v430, %v422
  %v615 = vpack.c.b16 %v431, %v423
  %v616 = vpack.c.b16 %v432, %v424
  %v617 = vpack.c.b16 %v433, %v425
  %v618 = vpack.c.b16 %v434, %v426
  %v619 = vpack.c.b16 %v435, %v427
  %v620 = vpack.c.b16 %v436, %v428
  %v621 = vpack.c.b16 %v445, %v437
  %v622 = vpack.c.b16 %v446, %v438
  %v623 = vpack.c.b16 %v447, %v439
  %v624 = vpack.c.b16 %v448, %v440
  %v625 = vpack.c.b16 %v449, %v441
  %v626 = vpack.c.b16 %v450, %v442
  %v627 = vpack.c.b16 %v451, %v443
  %v628 = vpack.c.b16 %v452, %v444
  %v629 = vpack.c.b16 %v461, %v453
  %v630 = vpack.c.b16 %v462, %v454
  %v631 = vpack.c.b16 %v463, %v455
  %v632 = vpack.c.b16 %v464, %v456
  %v633 = vpack.c.b16 %v465, %v457
  %v634 = vpack.c.b16 %v466, %v458
  %v635 = vpack.c.b16 %v467, %v459
  %v636 = vpack.c.b16 %v468, %v460
  %v637 = vpack.c.b16 %v477, %v469
  %v638 = vpack.c.b16 %v478, %v470
  %v639 = vpack.c.b16 %v479, %v471
  %v640 = vpack.c.b16 %v480, %v472
  %v641 = vpack.c.b16 %v481, %v473
  %v642 = vpack.c.b16 %v482, %v474
  %v643 = vpack.c.b16 %v483, %v475
  %v644 = vpack.c.b16 %v484, %v476
  %v645 = vpack.c.b16 %v493, %v485
  %v646 = vpack.c.b16 %v494, %v486
  %v647 = vpack.c.b16 %v495, %v487
  %v648 = vpack.c.b16 %v496, %v488
  %v649 = vpack.c.b16 %v497, %v489
  %v650 = vpack.c.b16 %v498, %v490
  %v651 = vpack.c.b16 %v499, %v491
  %v652 = vpack.c.b16 %v500, %v492
  %v653 = vpack.c.b16 %v509, %v501
  %v654 = vpack.c.b16 %v510, %v502
  %v655 = vpack.c.b16 %v511, %v503
  %v656 = vpack.c.b16 %v512, %v504
  %v657 = vpack.c.b16 %v513, %v505
  %v658 = vpack.c.b16 %v514, %v506
  %v659 = vpack.c.b16 %v515, %v507
  %v660 = vpack.c.b16 %v516, %v508
  %v661 = vpack.c.b16 %v525, %v517
  %v662 = vpack.c.b16 %v526, %v518
  %v663 = vpack.c.b16 %v527, %v519
  %v664 = vpack.c.b16 %v528, %v520
  %v665 = vpack.c.b16 %v529, %v521
  %v666 = vpack.c.b16 %v530, %v522
  %v667 = vpack.c.b16 %v531, %v523
  %v668 = vpack.c.b16 %v532, %v524
  %v669 = vpack.c.b16 %v541, %v533
  %v670 = vpack.c.b16 %v542, %v534
  %v671 = vpack.c.b16 %v543, %v535
  %v672 = vpack.c.b16 %v544, %v536
  %v673 = vpack.c.b16 %v545, %v537
  %v674 = vpack.c.b16 %v546, %v538
  %v675 = vpack.c.b16 %v547, %v539
  %v676 = vpack.c.b16 %v548, %v540
  %805 = vmatpush.bf16.msra.mxu0 %v605
  %806 = vmatpush.bf16.msra.mxu0 %v597
  %807 = vmatpush.bf16.msra.mxu0 %v589
  %808 = vmatpush.bf16.msra.mxu0 %v581
  %809 = vmatpush.bf16.msra.mxu0 %v573
  %810 = vmatpush.bf16.msra.mxu0 %v565
  %811 = vmatpush.bf16.msra.mxu0 %v557
  %812 = vmatpush.bf16.msra.mxu0 %v549
  %813 = vmatmul.bf16.gmra.mxu0 %v157
  %v814 = vpop.f32.mrf.mxu0
  %v815 = vadd.f32 0.0, %v814
  %v816 = vpop.f32.mrf.mxu0
  %v817 = vadd.f32 0.0, %v816
  %818 = vmatmul.bf16.gmra.mxu0 %v159
  %v819 = vpop.f32.mrf.mxu0
  %v820 = vadd.f32 0.0, %v819
  %v821 = vpop.f32.mrf.mxu0
  %822 = vdwg.mxu0
  %823 = vmatpush.bf16.msra.mxu0 %v669
  %824 = vmatpush.bf16.msra.mxu0 %v661
  %825 = vmatpush.bf16.msra.mxu0 %v653
  %826 = vmatpush.bf16.msra.mxu0 %v645
  %827 = vmatpush.bf16.msra.mxu0 %v637
  %828 = vmatpush.bf16.msra.mxu0 %v629
  %829 = vmatpush.bf16.msra.mxu0 %v621
  %830 = vmatpush.bf16.msra.mxu0 %v613
  %831 = vmatmul.bf16.gmra.mxu0 %v158
  %v832 = vpop.f32.mrf.mxu0
  %v833 = vadd.f32 %v815, %v832
  %v834 = vpop.f32.mrf.mxu0
  %v835 = vadd.f32 %v817, %v834
  %836 = vmatmul.bf16.gmra.mxu0 %v160
  %v837 = vpop.f32.mrf.mxu0
  %v838 = vadd.f32 %v820, %v837
  %v839 = vpop.f32.mrf.mxu0
  %840 = vdwg.mxu0
  %841 = vmatpush.bf16.msra.mxu0 %v606
  %842 = vmatpush.bf16.msra.mxu0 %v598
  %843 = vmatpush.bf16.msra.mxu0 %v590
  %844 = vmatpush.bf16.msra.mxu0 %v582
  %845 = vmatpush.bf16.msra.mxu0 %v574
  %846 = vmatpush.bf16.msra.mxu0 %v566
  %847 = vmatpush.bf16.msra.mxu0 %v558
  %848 = vmatpush.bf16.msra.mxu0 %v550
  %849 = vmatmul.bf16.gmra.mxu0 %v157
  %v850 = vpop.f32.mrf.mxu0
  %v851 = vadd.f32 0.0, %v850
  %v852 = vpop.f32.mrf.mxu0
  %v853 = vadd.f32 0.0, %v852
  %854 = vmatmul.bf16.gmra.mxu0 %v159
  %v855 = vpop.f32.mrf.mxu0
  %v856 = vadd.f32 0.0, %v855
  %v857 = vpop.f32.mrf.mxu0
  %858 = vdwg.mxu0
  %859 = vmatpush.bf16.msra.mxu0 %v670
  %860 = vmatpush.bf16.msra.mxu0 %v662
  %861 = vmatpush.bf16.msra.mxu0 %v654
  %862 = vmatpush.bf16.msra.mxu0 %v646
  %863 = vmatpush.bf16.msra.mxu0 %v638
  %864 = vmatpush.bf16.msra.mxu0 %v630
  %865 = vmatpush.bf16.msra.mxu0 %v622
  %866 = vmatpush.bf16.msra.mxu0 %v614
  %867 = vmatmul.bf16.gmra.mxu0 %v158
  %v868 = vpop.f32.mrf.mxu0
  %v869 = vadd.f32 %v851, %v868
  %v870 = vpop.f32.mrf.mxu0
  %v871 = vadd.f32 %v853, %v870
  %872 = vmatmul.bf16.gmra.mxu0 %v160
  %v873 = vpop.f32.mrf.mxu0
  %v874 = vadd.f32 %v856, %v873
  %v875 = vpop.f32.mrf.mxu0
  %876 = vdwg.mxu0
  %877 = vmatpush.bf16.msra.mxu0 %v607
  %878 = vmatpush.bf16.msra.mxu0 %v599
  %879 = vmatpush.bf16.msra.mxu0 %v591
  %880 = vmatpush.bf16.msra.mxu0 %v583
  %881 = vmatpush.bf16.msra.mxu0 %v575
  %882 = vmatpush.bf16.msra.mxu0 %v567
  %883 = vmatpush.bf16.msra.mxu0 %v559
  %884 = vmatpush.bf16.msra.mxu0 %v551
  %885 = vmatmul.bf16.gmra.mxu0 %v157
  %v886 = vpop.f32.mrf.mxu0
  %v887 = vadd.f32 0.0, %v886
  %v888 = vpop.f32.mrf.mxu0
  %v889 = vadd.f32 0.0, %v888
  %890 = vmatmul.bf16.gmra.mxu0 %v159
  %v891 = vpop.f32.mrf.mxu0
  %v892 = vadd.f32 0.0, %v891
  %v893 = vpop.f32.mrf.mxu0
  %894 = vdwg.mxu0
  %895 = vmatpush.bf16.msra.mxu0 %v671
  %896 = vmatpush.bf16.msra.mxu0 %v663
  %897 = vmatpush.bf16.msra.mxu0 %v655
  %898 = vmatpush.bf16.msra.mxu0 %v647
  %899 = vmatpush.bf16.msra.mxu0 %v639
  %900 = vmatpush.bf16.msra.mxu0 %v631
  %901 = vmatpush.bf16.msra.mxu0 %v623
  %902 = vmatpush.bf16.msra.mxu0 %v615
  %903 = vmatmul.bf16.gmra.mxu0 %v158
  %v904 = vpop.f32.mrf.mxu0
  %v905 = vadd.f32 %v887, %v904
  %v906 = vpop.f32.mrf.mxu0
  %v907 = vadd.f32 %v889, %v906
  %908 = vmatmul.bf16.gmra.mxu0 %v160
  %v909 = vpop.f32.mrf.mxu0
  %v910 = vadd.f32 %v892, %v909
  %v911 = vpop.f32.mrf.mxu0
  %912 = vdwg.mxu0
  %913 = vmatpush.bf16.msra.mxu0 %v608
  %914 = vmatpush.bf16.msra.mxu0 %v600
  %915 = vmatpush.bf16.msra.mxu0 %v592
  %916 = vmatpush.bf16.msra.mxu0 %v584
  %917 = vmatpush.bf16.msra.mxu0 %v576
  %918 = vmatpush.bf16.msra.mxu0 %v568
  %919 = vmatpush.bf16.msra.mxu0 %v560
  %920 = vmatpush.bf16.msra.mxu0 %v552
  %921 = vmatmul.bf16.gmra.mxu0 %v157
  %v922 = vpop.f32.mrf.mxu0
  %v923 = vadd.f32 0.0, %v922
  %v924 = vpop.f32.mrf.mxu0
  %v925 = vadd.f32 0.0, %v924
  %926 = vmatmul.bf16.gmra.mxu0 %v159
  %v927 = vpop.f32.mrf.mxu0
  %v928 = vadd.f32 0.0, %v927
  %v929 = vpop.f32.mrf.mxu0
  %930 = vdwg.mxu0
  %931 = vmatpush.bf16.msra.mxu0 %v672
  %932 = vmatpush.bf16.msra.mxu0 %v664
  %933 = vmatpush.bf16.msra.mxu0 %v656
  %934 = vmatpush.bf16.msra.mxu0 %v648
  %935 = vmatpush.bf16.msra.mxu0 %v640
  %936 = vmatpush.bf16.msra.mxu0 %v632
  %937 = vmatpush.bf16.msra.mxu0 %v624
  %938 = vmatpush.bf16.msra.mxu0 %v616
  %939 = vmatmul.bf16.gmra.mxu0 %v158
  %v940 = vpop.f32.mrf.mxu0
  %v941 = vadd.f32 %v923, %v940
  %v942 = vpop.f32.mrf.mxu0
  %v943 = vadd.f32 %v925, %v942
  %944 = vmatmul.bf16.gmra.mxu0 %v160
  %v945 = vpop.f32.mrf.mxu0
  %v946 = vadd.f32 %v928, %v945
  %v947 = vpop.f32.mrf.mxu0
  %948 = vdwg.mxu0
  %949 = vmatpush.bf16.msra.mxu0 %v609
  %950 = vmatpush.bf16.msra.mxu0 %v601
  %951 = vmatpush.bf16.msra.mxu0 %v593
  %952 = vmatpush.bf16.msra.mxu0 %v585
  %953 = vmatpush.bf16.msra.mxu0 %v577
  %954 = vmatpush.bf16.msra.mxu0 %v569
  %955 = vmatpush.bf16.msra.mxu0 %v561
  %956 = vmatpush.bf16.msra.mxu0 %v553
  %957 = vmatmul.bf16.gmra.mxu0 %v157
  %v958 = vpop.f32.mrf.mxu0
  %v959 = vadd.f32 0.0, %v958
  %v960 = vpop.f32.mrf.mxu0
  %v961 = vadd.f32 0.0, %v960
  %962 = vmatmul.bf16.gmra.mxu0 %v159
  %v963 = vpop.f32.mrf.mxu0
  %v964 = vadd.f32 0.0, %v963
  %v965 = vpop.f32.mrf.mxu0
  %966 = vdwg.mxu0
  %967 = vmatpush.bf16.msra.mxu0 %v673
  %968 = vmatpush.bf16.msra.mxu0 %v665
  %969 = vmatpush.bf16.msra.mxu0 %v657
  %970 = vmatpush.bf16.msra.mxu0 %v649
  %971 = vmatpush.bf16.msra.mxu0 %v641
  %972 = vmatpush.bf16.msra.mxu0 %v633
  %973 = vmatpush.bf16.msra.mxu0 %v625
  %974 = vmatpush.bf16.msra.mxu0 %v617
  %975 = vmatmul.bf16.gmra.mxu0 %v158
  %v976 = vpop.f32.mrf.mxu0
  %v977 = vadd.f32 %v959, %v976
  %v978 = vpop.f32.mrf.mxu0
  %v979 = vadd.f32 %v961, %v978
  %980 = vmatmul.bf16.gmra.mxu0 %v160
  %v981 = vpop.f32.mrf.mxu0
  %v982 = vadd.f32 %v964, %v981
  %v983 = vpop.f32.mrf.mxu0
  %984 = vdwg.mxu0
  %985 = vmatpush.bf16.msra.mxu0 %v610
  %986 = vmatpush.bf16.msra.mxu0 %v602
  %987 = vmatpush.bf16.msra.mxu0 %v594
  %988 = vmatpush.bf16.msra.mxu0 %v586
  %989 = vmatpush.bf16.msra.mxu0 %v578
  %990 = vmatpush.bf16.msra.mxu0 %v570
  %991 = vmatpush.bf16.msra.mxu0 %v562
  %992 = vmatpush.bf16.msra.mxu0 %v554
  %993 = vmatmul.bf16.gmra.mxu0 %v157
  %v994 = vpop.f32.mrf.mxu0
  %v995 = vadd.f32 0.0, %v994
  %v996 = vpop.f32.mrf.mxu0
  %v997 = vadd.f32 0.0, %v996
  %998 = vmatmul.bf16.gmra.mxu0 %v159
  %v999 = vpop.f32.mrf.mxu0
  %v1000 = vadd.f32 0.0, %v999
  %v1001 = vpop.f32.mrf.mxu0
  %1002 = vdwg.mxu0
  %1003 = vmatpush.bf16.msra.mxu0 %v674
  %1004 = vmatpush.bf16.msra.mxu0 %v666
  %1005 = vmatpush.bf16.msra.mxu0 %v658
  %1006 = vmatpush.bf16.msra.mxu0 %v650
  %1007 = vmatpush.bf16.msra.mxu0 %v642
  %1008 = vmatpush.bf16.msra.mxu0 %v634
  %1009 = vmatpush.bf16.msra.mxu0 %v626
  %1010 = vmatpush.bf16.msra.mxu0 %v618
  %1011 = vmatmul.bf16.gmra.mxu0 %v158
  %v1012 = vpop.f32.mrf.mxu0
  %v1013 = vadd.f32 %v995, %v1012
  %v1014 = vpop.f32.mrf.mxu0
  %v1015 = vadd.f32 %v997, %v1014
  %1016 = vmatmul.bf16.gmra.mxu0 %v160
  %v1017 = vpop.f32.mrf.mxu0
  %v1018 = vadd.f32 %v1000, %v1017
  %v1019 = vpop.f32.mrf.mxu0
  %1020 = vdwg.mxu0
  %1021 = vmatpush.bf16.msra.mxu0 %v611
  %1022 = vmatpush.bf16.msra.mxu0 %v603
  %1023 = vmatpush.bf16.msra.mxu0 %v595
  %1024 = vmatpush.bf16.msra.mxu0 %v587
  %1025 = vmatpush.bf16.msra.mxu0 %v579
  %1026 = vmatpush.bf16.msra.mxu0 %v571
  %1027 = vmatpush.bf16.msra.mxu0 %v563
  %1028 = vmatpush.bf16.msra.mxu0 %v555
  %1029 = vmatmul.bf16.gmra.mxu0 %v157
  %v1030 = vpop.f32.mrf.mxu0
  %v1031 = vadd.f32 0.0, %v1030
  %v1032 = vpop.f32.mrf.mxu0
  %v1033 = vadd.f32 0.0, %v1032
  %1034 = vmatmul.bf16.gmra.mxu0 %v159
  %v1035 = vpop.f32.mrf.mxu0
  %v1036 = vadd.f32 0.0, %v1035
  %v1037 = vpop.f32.mrf.mxu0
  %1038 = vdwg.mxu0
  %1039 = vmatpush.bf16.msra.mxu0 %v675
  %1040 = vmatpush.bf16.msra.mxu0 %v667
  %1041 = vmatpush.bf16.msra.mxu0 %v659
  %1042 = vmatpush.bf16.msra.mxu0 %v651
  %1043 = vmatpush.bf16.msra.mxu0 %v643
  %1044 = vmatpush.bf16.msra.mxu0 %v635
  %1045 = vmatpush.bf16.msra.mxu0 %v627
  %1046 = vmatpush.bf16.msra.mxu0 %v619
  %1047 = vmatmul.bf16.gmra.mxu0 %v158
  %v1048 = vpop.f32.mrf.mxu0
  %v1049 = vadd.f32 %v1031, %v1048
  %v1050 = vpop.f32.mrf.mxu0
  %v1051 = vadd.f32 %v1033, %v1050
  %1052 = vmatmul.bf16.gmra.mxu0 %v160
  %v1053 = vpop.f32.mrf.mxu0
  %v1054 = vadd.f32 %v1036, %v1053
  %v1055 = vpop.f32.mrf.mxu0
  %1056 = vdwg.mxu0
  %1057 = vmatpush.bf16.msra.mxu0 %v612
  %1058 = vmatpush.bf16.msra.mxu0 %v604
  %1059 = vmatpush.bf16.msra.mxu0 %v596
  %1060 = vmatpush.bf16.msra.mxu0 %v588
  %1061 = vmatpush.bf16.msra.mxu0 %v580
  %1062 = vmatpush.bf16.msra.mxu0 %v572
  %1063 = vmatpush.bf16.msra.mxu0 %v564
  %1064 = vmatpush.bf16.msra.mxu0 %v556
  %1065 = vmatmul.bf16.gmra.mxu0 %v157
  %v1066 = vpop.f32.mrf.mxu0
  %v1067 = vadd.f32 0.0, %v1066
  %v1068 = vpop.f32.mrf.mxu0
  %v1069 = vadd.f32 0.0, %v1068
  %1070 = vmatmul.bf16.gmra.mxu0 %v159
  %v1071 = vpop.f32.mrf.mxu0
  %v1072 = vadd.f32 0.0, %v1071
  %v1073 = vpop.f32.mrf.mxu0
  %1074 = vdwg.mxu0
  %1075 = vmatpush.bf16.msra.mxu0 %v676
  %1076 = vmatpush.bf16.msra.mxu0 %v668
  %1077 = vmatpush.bf16.msra.mxu0 %v660
  %1078 = vmatpush.bf16.msra.mxu0 %v652
  %1079 = vmatpush.bf16.msra.mxu0 %v644
  %1080 = vmatpush.bf16.msra.mxu0 %v636
  %1081 = vmatpush.bf16.msra.mxu0 %v628
  %1082 = vmatpush.bf16.msra.mxu0 %v620
  %1083 = vmatmul.bf16.gmra.mxu0 %v158
  %v1084 = vpop.f32.mrf.mxu0
  %v1085 = vadd.f32 %v1067, %v1084
  %v1086 = vpop.f32.mrf.mxu0
  %v1087 = vadd.f32 %v1069, %v1086
  %1088 = vmatmul.bf16.gmra.mxu0 %v160
  %v1089 = vpop.f32.mrf.mxu0
  %v1090 = vadd.f32 %v1072, %v1089
  %v1091 = vpop.f32.mrf.mxu0
  %1092 = vdwg.mxu0
  %v1093 = vld [vmem:[%s1] sm:$0xff]
  %v1094 = vld [vmem:[%s1 + $0x8] sm:$0xff]
  %v1095 = vld [vmem:[%s1 + $0x10] sm:$0xff]
  %v1096 = vunpack.c.l.bf16 %v1093
  %v1097 = vunpack.c.h.bf16 %v1093
  %v1098 = vunpack.c.l.bf16 %v1094
  %v1099 = vunpack.c.h.bf16 %v1094
  %v1100 = vunpack.c.l.bf16 %v1095
  %v1101 = vunpack.c.h.bf16 %v1095
  %v1102 = vmul.f32 %v833, %v1096
  %v1103 = vmul.f32 %v869, %v1097
  %v1104 = vmul.f32 %v835, %v1098
  %v1105 = vmul.f32 %v871, %v1099
  %v1106 = vmul.f32 %v838, %v1100
  %v1107 = vmul.f32 %v874, %v1101
  %v1108 = vadd.f32 %v1102, %v1103
  %1109 = vadd.xlane.f32.xlu0 %v1108
  %v1110 = vpop.xlane.xlu0 %1109
  %v1111 = vadd.f32 %v1104, %v1105
  %1112 = vadd.xlane.f32.xlu0 %v1111
  %v1113 = vpop.xlane.xlu0 %1112
  %v1114 = vadd.f32 %v1106, %v1107
  %1115 = vadd.xlane.f32.xlu0 %v1114
  %v1116 = vpop.xlane.xlu0 %1115
  %v1117 = vmul.f32 %v905, %v1096
  %v1118 = vmul.f32 %v941, %v1097
  %v1119 = vmul.f32 %v907, %v1098
  %v1120 = vmul.f32 %v943, %v1099
  %v1121 = vmul.f32 %v910, %v1100
  %v1122 = vmul.f32 %v946, %v1101
  %v1123 = vadd.f32 %v1117, %v1118
  %1124 = vadd.xlane.f32.xlu0 %v1123
  %v1125 = vpop.xlane.xlu0 %1124
  %v1126 = vadd.f32 %v1119, %v1120
  %1127 = vadd.xlane.f32.xlu0 %v1126
  %v1128 = vpop.xlane.xlu0 %1127
  %v1129 = vadd.f32 %v1121, %v1122
  %1130 = vadd.xlane.f32.xlu0 %v1129
  %v1131 = vpop.xlane.xlu0 %1130
  %v1132 = vmul.f32 %v977, %v1096
  %v1133 = vmul.f32 %v1013, %v1097
  %v1134 = vmul.f32 %v979, %v1098
  %v1135 = vmul.f32 %v1015, %v1099
  %v1136 = vmul.f32 %v982, %v1100
  %v1137 = vmul.f32 %v1018, %v1101
  %v1138 = vadd.f32 %v1132, %v1133
  %1139 = vadd.xlane.f32.xlu0 %v1138
  %v1140 = vpop.xlane.xlu0 %1139
  %v1141 = vadd.f32 %v1134, %v1135
  %1142 = vadd.xlane.f32.xlu0 %v1141
  %v1143 = vpop.xlane.xlu0 %1142
  %v1144 = vadd.f32 %v1136, %v1137
  %1145 = vadd.xlane.f32.xlu0 %v1144
  %v1146 = vpop.xlane.xlu0 %1145
  %v1147 = vmul.f32 %v1049, %v1096
  %v1148 = vmul.f32 %v1085, %v1097
  %v1149 = vmul.f32 %v1051, %v1098
  %v1150 = vmul.f32 %v1087, %v1099
  %v1151 = vmul.f32 %v1054, %v1100
  %v1152 = vmul.f32 %v1090, %v1101
  %v1153 = vadd.f32 %v1147, %v1148
  %1154 = vadd.xlane.f32.xlu0 %v1153
  %v1155 = vpop.xlane.xlu0 %1154
  %v1156 = vadd.f32 %v1149, %v1150
  %1157 = vadd.xlane.f32.xlu0 %v1156
  %v1158 = vpop.xlane.xlu0 %1157
  %v1159 = vadd.f32 %v1151, %v1152
  %1160 = vadd.xlane.f32.xlu0 %v1159
  %v1161 = vpop.xlane.xlu0 %1160
  %vm1162 = vcmask 7168
  %v1163 = vsel %vm1162, %v1110, %v1125
  %v1164 = vsel %vm1162, %v1113, %v1128
  %v1165 = vsel %vm1162, %v1116, %v1131
  %vm1166 = vcmask 15360
  %v1167 = vsel %vm1166, %v1163, %v1140
  %v1168 = vsel %vm1166, %v1164, %v1143
  %v1169 = vsel %vm1166, %v1165, %v1146
  %vm1170 = vcmask 23552
  %v1171 = vsel %vm1170, %v1167, %v1155
  %v1172 = vsel %vm1170, %v1168, %v1158
  %v1173 = vsel %vm1170, %v1169, %v1161
  %v1174 = vld [vmem:[%s3] sm:$0x1]
  %v1176 = vperm.slane %v1174, 0
  %v1178 = vadd.f32 %v1171, %v1176
  %v1179 = vadd.f32 %v1172, %v1176
  %v1180 = vadd.f32 %v1173, %v1176
  %vm1181 = vcmask 31744
  %1182 = vst.msk [vmem:[%s4] sm:$0xff] %vm1181, %v1178
  %1183 = vst.msk [vmem:[%s4 + $0x8] sm:$0xff] %vm1181, %v1179
  %1184 = vst.msk [vmem:[%s4 + $0x10] sm:$0xff] %vm1181, %v1180
  // Predicated region
  $region18: #{_lambda_.9} parent=0 // pred_check
    _
  $region19: #{_lambda_.9} parent=0 // pred_check_branch
    %1186 = sbr.rel (0) target = $region21
  $region20: #{_lambda_.9} parent=0 // pred_region
    _
  $region21: #{_lambda_.9} parent=0 // pred_fallthru
    _
  // Predicated region
  $region22: #{_lambda_.9} parent=0 // pred_check
    _
  $region23: #{_lambda_.9} parent=0 // pred_check_branch
    %1188 = sbr.rel (0) target = $region25
  $region24: #{_lambda_.9} parent=0 // pred_region
    _
  $region25: #{_lambda_.9} parent=0 // pred_fallthru
    _

// kernel: _lambda_.7
$region0: #{_lambda_.7}
  #allocation0 [shape = 'u32[]', space=smem, size = 0x4, offset = 0x4, fixed_abs, tag = 'smem constant byte address 0x4 - core index']
  #allocation1 [shape = 'u32[72,128]{1,0:T(1,128)}', space=vmem, size = 0x9000, scoped, tag = 'internal scratch']
  #allocation2 [shape = 'f32[8,128]{1,0:T(8,128)}', space=vmem, size = 0x1000, scoped, tag = 'scratch operand']
  #allocation3 [shape = 'f32[8,128]{1,0:T(8,128)}', space=vmem, size = 0x1000, scoped, tag = 'scratch operand']
  #allocation4 [shape = 'f32[16,8,128]{2,1,0:T(8,128)}', space=vmem, size = 0x10000, scoped, tag = 'scratch operand']
  %s0 = inlined_call_operand.vmem [shape: f32[16,8,512], index: 0, kind: input, shape index: {}]
  %s1 = inlined_call_operand.vmem [shape: f32[8,1], index: 1, kind: input, shape index: {}]
  %s2 = inlined_call_operand.vmem [shape: bf16[128,512], index: 2, kind: input, shape index: {}]
  %s3 = inlined_call_operand.vmem [shape: bf16[128,128], index: 3, kind: input, shape index: {}]
  %s4 = inlined_call_operand.vmem [shape: f32[1,128], index: 4, kind: input, shape index: {}]
  %s5 = inlined_call_operand.vmem [shape: f32[16,8,128], index: 5, kind: output, shape index: {}]
  %s6 = sld [smem:[#allocation0]]
  $region34: #{_lambda_.7} parent=0
    _
  %s8 = ssub.s32 1, %s6
  %s9 = scalar_select 0, %s8, %s6
  // Predicated region
  $region2: #{_lambda_.7} parent=0 // pred_check
    _
  $region3: #{_lambda_.7} parent=0 // pred_check_branch
    %11 = sbr.rel (0) target = $region5
  $region4: #{_lambda_.7} parent=0 // pred_region
    _
  $region5: #{_lambda_.7} parent=0 // pred_fallthru
    _
  // Predicated region
  $region6: #{_lambda_.7} parent=0 // pred_check
    _
  $region7: #{_lambda_.7} parent=0 // pred_check_branch
    %13 = sbr.rel (0) target = $region9
  $region8: #{_lambda_.7} parent=0 // pred_region
    _
  $region9: #{_lambda_.7} parent=0 // pred_fallthru
    _
  // Predicated region
  $region10: #{_lambda_.7} parent=0 // pred_check
    _
  $region11: #{_lambda_.7} parent=0 // pred_check_branch
    %15 = sbr.rel (0) target = $region13
  $region12: #{_lambda_.7} parent=0 // pred_region
    _
  $region13: #{_lambda_.7} parent=0 // pred_fallthru
    _
  // Predicated region
  $region14: #{_lambda_.7} parent=0 // pred_check
    _
  $region15: #{_lambda_.7} parent=0 // pred_check_branch
    %17 = sbr.rel (0) target = $region17
  $region16: #{_lambda_.7} parent=0 // pred_region
    _
  $region17: #{_lambda_.7} parent=0 // pred_fallthru
    _
  // Predicated region
  $region18: #{_lambda_.7} parent=0 // pred_check
    _
  $region19: #{_lambda_.7} parent=0 // pred_check_branch
    %19 = sbr.rel (0) target = $region21
  $region20: #{_lambda_.7} parent=0 // pred_region
    _
  $region21: #{_lambda_.7} parent=0 // pred_fallthru
    _
  %p20 = scmp.eq.s32.totalorder 0, 0
  // Predicated region
  $region22: #{_lambda_.7} parent=0 // pred_check
    %p21 = pneg %p20
  $region23: #{_lambda_.7} parent=0 // pred_check_branch
    %23 = sbr.rel (%p21) target = $region25
  $region24: #{_lambda_.7} parent=0 // pred_region
    %24 = vst [vmem:[#allocation2] sm:$0xff] 0.0
    %25 = vst [vmem:[#allocation3] sm:$0xff] 0.0
  $region25: #{_lambda_.7} parent=0 // pred_fallthru
    _
  %v26 = vld [vmem:[%s2] sm:$0xff]
  %v27 = vld [vmem:[%s2 + $0x8] sm:$0xff]
  %v28 = vld [vmem:[%s2 + $0x10] sm:$0xff]
  %v29 = vld [vmem:[%s2 + $0x18] sm:$0xff]
  %v30 = vld [vmem:[%s2 + $0x20] sm:$0xff]
  %v31 = vld [vmem:[%s2 + $0x28] sm:$0xff]
  %v32 = vld [vmem:[%s2 + $0x30] sm:$0xff]
  %v33 = vld [vmem:[%s2 + $0x38] sm:$0xff]
  %v34 = vld [vmem:[%s2 + $0x40] sm:$0xff]
  %v35 = vld [vmem:[%s2 + $0x48] sm:$0xff]
  %v36 = vld [vmem:[%s2 + $0x50] sm:$0xff]
  %v37 = vld [vmem:[%s2 + $0x58] sm:$0xff]
  %v38 = vld [vmem:[%s2 + $0x60] sm:$0xff]
  %v39 = vld [vmem:[%s2 + $0x68] sm:$0xff]
  %v40 = vld [vmem:[%s2 + $0x70] sm:$0xff]
  %v41 = vld [vmem:[%s2 + $0x78] sm:$0xff]
  %v42 = vld [vmem:[%s2 + $0x80] sm:$0xff]
  %v43 = vld [vmem:[%s2 + $0x88] sm:$0xff]
  %v44 = vld [vmem:[%s2 + $0x90] sm:$0xff]
  %v45 = vld [vmem:[%s2 + $0x98] sm:$0xff]
  %v46 = vld [vmem:[%s2 + $0xa0] sm:$0xff]
  %v47 = vld [vmem:[%s2 + $0xa8] sm:$0xff]
  %v48 = vld [vmem:[%s2 + $0xb0] sm:$0xff]
  %v49 = vld [vmem:[%s2 + $0xb8] sm:$0xff]
  %v50 = vld [vmem:[%s2 + $0xc0] sm:$0xff]
  %v51 = vld [vmem:[%s2 + $0xc8] sm:$0xff]
  %v52 = vld [vmem:[%s2 + $0xd0] sm:$0xff]
  %v53 = vld [vmem:[%s2 + $0xd8] sm:$0xff]
  %v54 = vld [vmem:[%s2 + $0xe0] sm:$0xff]
  %v55 = vld [vmem:[%s2 + $0xe8] sm:$0xff]
  %v56 = vld [vmem:[%s2 + $0xf0] sm:$0xff]
  %v57 = vld [vmem:[%s2 + $0xf8] sm:$0xff]
  %v58 = vld [vmem:[%s1] sm:$0xff]
  %s59 = smul.u32 0, 16
  %s60 = scvt.s32.f32 %s59
  %v61 = vld [vmem:[#allocation2] sm:$0xff]
  %v62 = vld [vmem:[#allocation3] sm:$0xff]
  %v63 = vld [vmem:[%s0] sm:$0xff]
  %v64 = vld [vmem:[%s0 + $0x8] sm:$0xff]
  %v65 = vld [vmem:[%s0 + $0x10] sm:$0xff]
  %v66 = vld [vmem:[%s0 + $0x18] sm:$0xff]
  %v67 = vpack.c.bf16 %v61, %v61
  %v100 = vunpack.c.l.b16 %v26
  %v101 = vunpack.c.h.b16 %v26
  %v102 = vunpack.c.l.b16 %v27
  %v103 = vunpack.c.h.b16 %v27
  %v104 = vunpack.c.l.b16 %v28
  %v105 = vunpack.c.h.b16 %v28
  %v106 = vunpack.c.l.b16 %v29
  %v107 = vunpack.c.h.b16 %v29
  %v108 = vunpack.c.l.b16 %v30
  %v109 = vunpack.c.h.b16 %v30
  %v110 = vunpack.c.l.b16 %v31
  %v111 = vunpack.c.h.b16 %v31
  %v112 = vunpack.c.l.b16 %v32
  %v113 = vunpack.c.h.b16 %v32
  %v114 = vunpack.c.l.b16 %v33
  %v115 = vunpack.c.h.b16 %v33
  %v116 = vunpack.c.l.b16 %v34
  %v117 = vunpack.c.h.b16 %v34
  %v118 = vunpack.c.l.b16 %v35
  %v119 = vunpack.c.h.b16 %v35
  %v120 = vunpack.c.l.b16 %v36
  %v121 = vunpack.c.h.b16 %v36
  %v122 = vunpack.c.l.b16 %v37
  %v123 = vunpack.c.h.b16 %v37
  %v124 = vunpack.c.l.b16 %v38
  %v125 = vunpack.c.h.b16 %v38
  %v126 = vunpack.c.l.b16 %v39
  %v127 = vunpack.c.h.b16 %v39
  %v128 = vunpack.c.l.b16 %v40
  %v129 = vunpack.c.h.b16 %v40
  %v130 = vunpack.c.l.b16 %v41
  %v131 = vunpack.c.h.b16 %v41
  %v132 = vunpack.c.l.b16 %v42
  %v133 = vunpack.c.h.b16 %v42
  %v134 = vunpack.c.l.b16 %v43
  %v135 = vunpack.c.h.b16 %v43
  %v136 = vunpack.c.l.b16 %v44
  %v137 = vunpack.c.h.b16 %v44
  %v138 = vunpack.c.l.b16 %v45
  %v139 = vunpack.c.h.b16 %v45
  %v140 = vunpack.c.l.b16 %v46
  %v141 = vunpack.c.h.b16 %v46
  %v142 = vunpack.c.l.b16 %v47
  %v143 = vunpack.c.h.b16 %v47
  %v144 = vunpack.c.l.b16 %v48
  %v145 = vunpack.c.h.b16 %v48
  %v146 = vunpack.c.l.b16 %v49
  %v147 = vunpack.c.h.b16 %v49
  %v148 = vunpack.c.l.b16 %v50
  %v149 = vunpack.c.h.b16 %v50
  %v150 = vunpack.c.l.b16 %v51
  %v151 = vunpack.c.h.b16 %v51
  %v152 = vunpack.c.l.b16 %v52
  %v153 = vunpack.c.h.b16 %v52
  %v154 = vunpack.c.l.b16 %v53
  %v155 = vunpack.c.h.b16 %v53
  %v156 = vunpack.c.l.b16 %v54
  %v157 = vunpack.c.h.b16 %v54
  %v158 = vunpack.c.l.b16 %v55
  %v159 = vunpack.c.h.b16 %v55
  %v160 = vunpack.c.l.b16 %v56
  %v161 = vunpack.c.h.b16 %v56
  %v162 = vunpack.c.l.b16 %v57
  %v163 = vunpack.c.h.b16 %v57
  %v164 = vpack.c.b16 %v104, %v100
  %v165 = vpack.c.b16 %v105, %v101
  %v166 = vpack.c.b16 %v106, %v102
  %v167 = vpack.c.b16 %v107, %v103
  %v168 = vpack.c.b16 %v112, %v108
  %v169 = vpack.c.b16 %v113, %v109
  %v170 = vpack.c.b16 %v114, %v110
  %v171 = vpack.c.b16 %v115, %v111
  %v172 = vpack.c.b16 %v120, %v116
  %v173 = vpack.c.b16 %v121, %v117
  %v174 = vpack.c.b16 %v122, %v118
  %v175 = vpack.c.b16 %v123, %v119
  %v176 = vpack.c.b16 %v128, %v124
  %v177 = vpack.c.b16 %v129, %v125
  %v178 = vpack.c.b16 %v130, %v126
  %v179 = vpack.c.b16 %v131, %v127
  %v180 = vpack.c.b16 %v136, %v132
  %v181 = vpack.c.b16 %v137, %v133
  %v182 = vpack.c.b16 %v138, %v134
  %v183 = vpack.c.b16 %v139, %v135
  %v184 = vpack.c.b16 %v144, %v140
  %v185 = vpack.c.b16 %v145, %v141
  %v186 = vpack.c.b16 %v146, %v142
  %v187 = vpack.c.b16 %v147, %v143
  %v188 = vpack.c.b16 %v152, %v148
  %v189 = vpack.c.b16 %v153, %v149
  %v190 = vpack.c.b16 %v154, %v150
  %v191 = vpack.c.b16 %v155, %v151
  %v192 = vpack.c.b16 %v160, %v156
  %v193 = vpack.c.b16 %v161, %v157
  %v194 = vpack.c.b16 %v162, %v158
  %v195 = vpack.c.b16 %v163, %v159
  %228 = vmatpush.bf16.msra.mxu0 %v192
  %229 = vmatpush.bf16.msra.mxu0 %v188
  %230 = vmatpush.bf16.msra.mxu0 %v184
  %231 = vmatpush.bf16.msra.mxu0 %v180
  %232 = vmatpush.bf16.msra.mxu0 %v176
  %233 = vmatpush.bf16.msra.mxu0 %v172
  %234 = vmatpush.bf16.msra.mxu0 %v168
  %235 = vmatpush.bf16.msra.mxu0 %v164
  %236 = vmatmul.bf16.gmra.mxu0 %v67
  %v237 = vpop.f32.mrf.mxu0
  %v238 = vadd.f32 0.0, %v237
  %v239 = vpop.f32.mrf.mxu0
  %240 = vdwg.mxu0
  %241 = vmatpush.bf16.msra.mxu0 %v193
  %242 = vmatpush.bf16.msra.mxu0 %v189
  %243 = vmatpush.bf16.msra.mxu0 %v185
  %244 = vmatpush.bf16.msra.mxu0 %v181
  %245 = vmatpush.bf16.msra.mxu0 %v177
  %246 = vmatpush.bf16.msra.mxu0 %v173
  %247 = vmatpush.bf16.msra.mxu0 %v169
  %248 = vmatpush.bf16.msra.mxu0 %v165
  %249 = vmatmul.bf16.gmra.mxu0 %v67
  %v250 = vpop.f32.mrf.mxu0
  %v251 = vadd.f32 0.0, %v250
  %v252 = vpop.f32.mrf.mxu0
  %253 = vdwg.mxu0
  %254 = vmatpush.bf16.msra.mxu0 %v194
  %255 = vmatpush.bf16.msra.mxu0 %v190
  %256 = vmatpush.bf16.msra.mxu0 %v186
  %257 = vmatpush.bf16.msra.mxu0 %v182
  %258 = vmatpush.bf16.msra.mxu0 %v178
  %259 = vmatpush.bf16.msra.mxu0 %v174
  %260 = vmatpush.bf16.msra.mxu0 %v170
  %261 = vmatpush.bf16.msra.mxu0 %v166
  %262 = vmatmul.bf16.gmra.mxu0 %v67
  %v263 = vpop.f32.mrf.mxu0
  %v264 = vadd.f32 0.0, %v263
  %v265 = vpop.f32.mrf.mxu0
  %266 = vdwg.mxu0
  %267 = vmatpush.bf16.msra.mxu0 %v195
  %268 = vmatpush.bf16.msra.mxu0 %v191
  %269 = vmatpush.bf16.msra.mxu0 %v187
  %270 = vmatpush.bf16.msra.mxu0 %v183
  %271 = vmatpush.bf16.msra.mxu0 %v179
  %272 = vmatpush.bf16.msra.mxu0 %v175
  %273 = vmatpush.bf16.msra.mxu0 %v171
  %274 = vmatpush.bf16.msra.mxu0 %v167
  %275 = vmatmul.bf16.gmra.mxu0 %v67
  %v276 = vpop.f32.mrf.mxu0
  %v277 = vadd.f32 0.0, %v276
  %v278 = vpop.f32.mrf.mxu0
  %279 = vdwg.mxu0
  %v280 = vadd.f32 %v63, %v238
  %v281 = vadd.f32 %v64, %v251
  %v282 = vadd.f32 %v65, %v264
  %v283 = vadd.f32 %v66, %v277
  %v284 = vxor.u32 %v280, 2147483648
  %v285 = vmul.f32 %v284, 1.442695
  %v286 = vpow.pop %v285
  %v287 = vadd.f32 %v286, 1.0
  %v288 = vrcp.pop %v287
  %v289 = vmul.f32 %v287, %v288
  %v290 = vsub.f32 1.0, %v289
  %v291 = vmul.f32 %v288, %v290
  %v292 = vadd.f32 %v288, %v291
  %vm293 = vweird.f32 %v287
  %vm294 = vweird.f32 %v288
  %vm295 = vmor %vm293, %vm294
  %v296 = vsel %vm295, %v288, %v292
  %v297 = vand.u32 2147483647, %v287
  %vm298 = vcmp.eq.f32.partialorder %v297, 8.507059e+37
  %v299 = vand.u32 %v287, 2147483648
  %v300 = vor.u32 1.1754944e-38, %v299
  %v301 = vsel %vm298, %v300, %v296
  %v302 = vmul.f32 1.0, %v301
  %v303 = vxor.u32 %v281, 2147483648
  %v304 = vmul.f32 %v303, 1.442695
  %v305 = vpow.pop %v304
  %v306 = vadd.f32 %v305, 1.0
  %v307 = vrcp.pop %v306
  %v308 = vmul.f32 %v306, %v307
  %v309 = vsub.f32 1.0, %v308
  %v310 = vmul.f32 %v307, %v309
  %v311 = vadd.f32 %v307, %v310
  %vm312 = vweird.f32 %v306
  %vm313 = vweird.f32 %v307
  %vm314 = vmor %vm312, %vm313
  %v315 = vsel %vm314, %v307, %v311
  %v316 = vand.u32 2147483647, %v306
  %vm317 = vcmp.eq.f32.partialorder %v316, 8.507059e+37
  %v318 = vand.u32 %v306, 2147483648
  %v319 = vor.u32 1.1754944e-38, %v318
  %v320 = vsel %vm317, %v319, %v315
  %v321 = vmul.f32 1.0, %v320
  %v322 = vtanh.pop %v282
  %v323 = vxor.u32 %v283, 2147483648
  %v324 = vmul.f32 %v323, 1.442695
  %v325 = vpow.pop %v324
  %v326 = vadd.f32 %v325, 1.0
  %v327 = vrcp.pop %v326
  %v328 = vmul.f32 %v326, %v327
  %v329 = vsub.f32 1.0, %v328
  %v330 = vmul.f32 %v327, %v329
  %v331 = vadd.f32 %v327, %v330
  %vm332 = vweird.f32 %v326
  %vm333 = vweird.f32 %v327
  %vm334 = vmor %vm332, %vm333
  %v335 = vsel %vm334, %v327, %v331
  %v336 = vand.u32 2147483647, %v326
  %vm337 = vcmp.eq.f32.partialorder %v336, 8.507059e+37
  %v338 = vand.u32 %v326, 2147483648
  %v339 = vor.u32 1.1754944e-38, %v338
  %v340 = vsel %vm337, %v339, %v335
  %v341 = vmul.f32 1.0, %v340
  %v342 = vmul.f32 %v321, %v62
  %v343 = vmul.f32 %v302, %v322
  %v344 = vadd.f32 %v342, %v343
  %v345 = vtanh.pop %v344
  %v346 = vmul.f32 %v341, %v345
  %s347 = sadd.f32 %s60, 0.0
  %v348 = vstv %s347
  %vm349 = vcmp.gt.f32.partialorder %v58, %v348
  %v350 = vsel %vm349, 1, 0
  %v351 = vcvt.s32.f32 %v350
  %353 = vset.pattern.permute.xlu0 0
  %354 = vperm.xlu0 %353, %v351
  %v355 = vpop.permute.xlu0 %354
  %v357 = vmul.f32 %v346, %v355
  %358 = vst [vmem:[#allocation4] sm:$0xff] %v357
  %s359 = scalar_lea.vmem %s0, 32
  %v360 = vld [vmem:[%s359] sm:$0xff]
  %v361 = vld [vmem:[%s359 + $0x8] sm:$0xff]
  %v362 = vld [vmem:[%s359 + $0x10] sm:$0xff]
  %v363 = vld [vmem:[%s359 + $0x18] sm:$0xff]
  %v364 = vpack.c.bf16 %v346, %v346
  %365 = vmatpush.bf16.msra.mxu0 %v192
  %366 = vmatpush.bf16.msra.mxu0 %v188
  %367 = vmatpush.bf16.msra.mxu0 %v184
  %368 = vmatpush.bf16.msra.mxu0 %v180
  %369 = vmatpush.bf16.msra.mxu0 %v176
  %370 = vmatpush.bf16.msra.mxu0 %v172
  %371 = vmatpush.bf16.msra.mxu0 %v168
  %372 = vmatpush.bf16.msra.mxu0 %v164
  %373 = vmatmul.bf16.gmra.mxu0 %v364
  %v374 = vpop.f32.mrf.mxu0
  %v375 = vadd.f32 0.0, %v374
  %v376 = vpop.f32.mrf.mxu0
  %377 = vdwg.mxu0
  %378 = vmatpush.bf16.msra.mxu0 %v193
  %379 = vmatpush.bf16.msra.mxu0 %v189
  %380 = vmatpush.bf16.msra.mxu0 %v185
  %381 = vmatpush.bf16.msra.mxu0 %v181
  %382 = vmatpush.bf16.msra.mxu0 %v177
  %383 = vmatpush.bf16.msra.mxu0 %v173
  %384 = vmatpush.bf16.msra.mxu0 %v169
  %385 = vmatpush.bf16.msra.mxu0 %v165
  %386 = vmatmul.bf16.gmra.mxu0 %v364
  %v387 = vpop.f32.mrf.mxu0
  %v388 = vadd.f32 0.0, %v387
  %v389 = vpop.f32.mrf.mxu0
  %390 = vdwg.mxu0
  %391 = vmatpush.bf16.msra.mxu0 %v194
  %392 = vmatpush.bf16.msra.mxu0 %v190
  %393 = vmatpush.bf16.msra.mxu0 %v186
  %394 = vmatpush.bf16.msra.mxu0 %v182
  %395 = vmatpush.bf16.msra.mxu0 %v178
  %396 = vmatpush.bf16.msra.mxu0 %v174
  %397 = vmatpush.bf16.msra.mxu0 %v170
  %398 = vmatpush.bf16.msra.mxu0 %v166
  %399 = vmatmul.bf16.gmra.mxu0 %v364
  %v400 = vpop.f32.mrf.mxu0
  %v401 = vadd.f32 0.0, %v400
  %v402 = vpop.f32.mrf.mxu0
  %403 = vdwg.mxu0
  %404 = vmatpush.bf16.msra.mxu0 %v195
  %405 = vmatpush.bf16.msra.mxu0 %v191
  %406 = vmatpush.bf16.msra.mxu0 %v187
  %407 = vmatpush.bf16.msra.mxu0 %v183
  %408 = vmatpush.bf16.msra.mxu0 %v179
  %409 = vmatpush.bf16.msra.mxu0 %v175
  %410 = vmatpush.bf16.msra.mxu0 %v171
  %411 = vmatpush.bf16.msra.mxu0 %v167
  %412 = vmatmul.bf16.gmra.mxu0 %v364
  %v413 = vpop.f32.mrf.mxu0
  %v414 = vadd.f32 0.0, %v413
  %v415 = vpop.f32.mrf.mxu0
  %416 = vdwg.mxu0
  %v417 = vadd.f32 %v360, %v375
  %v418 = vadd.f32 %v361, %v388
  %v419 = vadd.f32 %v362, %v401
  %v420 = vadd.f32 %v363, %v414
  %v421 = vxor.u32 %v417, 2147483648
  %v422 = vmul.f32 %v421, 1.442695
  %v423 = vpow.pop %v422
  %v424 = vadd.f32 %v423, 1.0
  %v425 = vrcp.pop %v424
  %v426 = vmul.f32 %v424, %v425
  %v427 = vsub.f32 1.0, %v426
  %v428 = vmul.f32 %v425, %v427
  %v429 = vadd.f32 %v425, %v428
  %vm430 = vweird.f32 %v424
  %vm431 = vweird.f32 %v425
  %vm432 = vmor %vm430, %vm431
  %v433 = vsel %vm432, %v425, %v429
  %v434 = vand.u32 2147483647, %v424
  %vm435 = vcmp.eq.f32.partialorder %v434, 8.507059e+37
  %v436 = vand.u32 %v424, 2147483648
  %v437 = vor.u32 1.1754944e-38, %v436
  %v438 = vsel %vm435, %v437, %v433
  %v439 = vmul.f32 1.0, %v438
  %v440 = vxor.u32 %v418, 2147483648
  %v441 = vmul.f32 %v440, 1.442695
  %v442 = vpow.pop %v441
  %v443 = vadd.f32 %v442, 1.0
  %v444 = vrcp.pop %v443
  %v445 = vmul.f32 %v443, %v444
  %v446 = vsub.f32 1.0, %v445
  %v447 = vmul.f32 %v444, %v446
  %v448 = vadd.f32 %v444, %v447
  %vm449 = vweird.f32 %v443
  %vm450 = vweird.f32 %v444
  %vm451 = vmor %vm449, %vm450
  %v452 = vsel %vm451, %v444, %v448
  %v453 = vand.u32 2147483647, %v443
  %vm454 = vcmp.eq.f32.partialorder %v453, 8.507059e+37
  %v455 = vand.u32 %v443, 2147483648
  %v456 = vor.u32 1.1754944e-38, %v455
  %v457 = vsel %vm454, %v456, %v452
  %v458 = vmul.f32 1.0, %v457
  %v459 = vtanh.pop %v419
  %v460 = vxor.u32 %v420, 2147483648
  %v461 = vmul.f32 %v460, 1.442695
  %v462 = vpow.pop %v461
  %v463 = vadd.f32 %v462, 1.0
  %v464 = vrcp.pop %v463
  %v465 = vmul.f32 %v463, %v464
  %v466 = vsub.f32 1.0, %v465
  %v467 = vmul.f32 %v464, %v466
  %v468 = vadd.f32 %v464, %v467
  %vm469 = vweird.f32 %v463
  %vm470 = vweird.f32 %v464
  %vm471 = vmor %vm469, %vm470
  %v472 = vsel %vm471, %v464, %v468
  %v473 = vand.u32 2147483647, %v463
  %vm474 = vcmp.eq.f32.partialorder %v473, 8.507059e+37
  %v475 = vand.u32 %v463, 2147483648
  %v476 = vor.u32 1.1754944e-38, %v475
  %v477 = vsel %vm474, %v476, %v472
  %v478 = vmul.f32 1.0, %v477
  %v479 = vmul.f32 %v458, %v344
  %v480 = vmul.f32 %v439, %v459
  %v481 = vadd.f32 %v479, %v480
  %v482 = vtanh.pop %v481
  %v483 = vmul.f32 %v478, %v482
  %s484 = sadd.f32 %s60, 1.0
  %v485 = vstv %s484
  %vm486 = vcmp.gt.f32.partialorder %v58, %v485
  %v487 = vsel %vm486, 1, 0
  %v488 = vcvt.s32.f32 %v487
  %490 = vset.pattern.permute.xlu0 0
  %491 = vperm.xlu0 %490, %v488
  %v492 = vpop.permute.xlu0 %491
  %v494 = vmul.f32 %v483, %v492
  %s495 = scalar_lea.vmem [#allocation4], 8
  %496 = vst [vmem:[%s495] sm:$0xff] %v494
  %s497 = scalar_lea.vmem %s0, 64
  %v498 = vld [vmem:[%s497] sm:$0xff]
  %v499 = vld [vmem:[%s497 + $0x8] sm:$0xff]
  %v500 = vld [vmem:[%s497 + $0x10] sm:$0xff]
  %v501 = vld [vmem:[%s497 + $0x18] sm:$0xff]
  %v502 = vpack.c.bf16 %v483, %v483
  %503 = vmatpush.bf16.msra.mxu0 %v192
  %504 = vmatpush.bf16.msra.mxu0 %v188
  %505 = vmatpush.bf16.msra.mxu0 %v184
  %506 = vmatpush.bf16.msra.mxu0 %v180
  %507 = vmatpush.bf16.msra.mxu0 %v176
  %508 = vmatpush.bf16.msra.mxu0 %v172
  %509 = vmatpush.bf16.msra.mxu0 %v168
  %510 = vmatpush.bf16.msra.mxu0 %v164
  %511 = vmatmul.bf16.gmra.mxu0 %v502
  %v512 = vpop.f32.mrf.mxu0
  %v513 = vadd.f32 0.0, %v512
  %v514 = vpop.f32.mrf.mxu0
  %515 = vdwg.mxu0
  %516 = vmatpush.bf16.msra.mxu0 %v193
  %517 = vmatpush.bf16.msra.mxu0 %v189
  %518 = vmatpush.bf16.msra.mxu0 %v185
  %519 = vmatpush.bf16.msra.mxu0 %v181
  %520 = vmatpush.bf16.msra.mxu0 %v177
  %521 = vmatpush.bf16.msra.mxu0 %v173
  %522 = vmatpush.bf16.msra.mxu0 %v169
  %523 = vmatpush.bf16.msra.mxu0 %v165
  %524 = vmatmul.bf16.gmra.mxu0 %v502
  %v525 = vpop.f32.mrf.mxu0
  %v526 = vadd.f32 0.0, %v525
  %v527 = vpop.f32.mrf.mxu0
  %528 = vdwg.mxu0
  %529 = vmatpush.bf16.msra.mxu0 %v194
  %530 = vmatpush.bf16.msra.mxu0 %v190
  %531 = vmatpush.bf16.msra.mxu0 %v186
  %532 = vmatpush.bf16.msra.mxu0 %v182
  %533 = vmatpush.bf16.msra.mxu0 %v178
  %534 = vmatpush.bf16.msra.mxu0 %v174
  %535 = vmatpush.bf16.msra.mxu0 %v170
  %536 = vmatpush.bf16.msra.mxu0 %v166
  %537 = vmatmul.bf16.gmra.mxu0 %v502
  %v538 = vpop.f32.mrf.mxu0
  %v539 = vadd.f32 0.0, %v538
  %v540 = vpop.f32.mrf.mxu0
  %541 = vdwg.mxu0
  %542 = vmatpush.bf16.msra.mxu0 %v195
  %543 = vmatpush.bf16.msra.mxu0 %v191
  %544 = vmatpush.bf16.msra.mxu0 %v187
  %545 = vmatpush.bf16.msra.mxu0 %v183
  %546 = vmatpush.bf16.msra.mxu0 %v179
  %547 = vmatpush.bf16.msra.mxu0 %v175
  %548 = vmatpush.bf16.msra.mxu0 %v171
  %549 = vmatpush.bf16.msra.mxu0 %v167
  %550 = vmatmul.bf16.gmra.mxu0 %v502
  %v551 = vpop.f32.mrf.mxu0
  %v552 = vadd.f32 0.0, %v551
  %v553 = vpop.f32.mrf.mxu0
  %554 = vdwg.mxu0
  %v555 = vadd.f32 %v498, %v513
  %v556 = vadd.f32 %v499, %v526
  %v557 = vadd.f32 %v500, %v539
  %v558 = vadd.f32 %v501, %v552
  %v559 = vxor.u32 %v555, 2147483648
  %v560 = vmul.f32 %v559, 1.442695
  %v561 = vpow.pop %v560
  %v562 = vadd.f32 %v561, 1.0
  %v563 = vrcp.pop %v562
  %v564 = vmul.f32 %v562, %v563
  %v565 = vsub.f32 1.0, %v564
  %v566 = vmul.f32 %v563, %v565
  %v567 = vadd.f32 %v563, %v566
  %vm568 = vweird.f32 %v562
  %vm569 = vweird.f32 %v563
  %vm570 = vmor %vm568, %vm569
  %v571 = vsel %vm570, %v563, %v567
  %v572 = vand.u32 2147483647, %v562
  %vm573 = vcmp.eq.f32.partialorder %v572, 8.507059e+37
  %v574 = vand.u32 %v562, 2147483648
  %v575 = vor.u32 1.1754944e-38, %v574
  %v576 = vsel %vm573, %v575, %v571
  %v577 = vmul.f32 1.0, %v576
  %v578 = vxor.u32 %v556, 2147483648
  %v579 = vmul.f32 %v578, 1.442695
  %v580 = vpow.pop %v579
  %v581 = vadd.f32 %v580, 1.0
  %v582 = vrcp.pop %v581
  %v583 = vmul.f32 %v581, %v582
  %v584 = vsub.f32 1.0, %v583
  %v585 = vmul.f32 %v582, %v584
  %v586 = vadd.f32 %v582, %v585
  %vm587 = vweird.f32 %v581
  %vm588 = vweird.f32 %v582
  %vm589 = vmor %vm587, %vm588
  %v590 = vsel %vm589, %v582, %v586
  %v591 = vand.u32 2147483647, %v581
  %vm592 = vcmp.eq.f32.partialorder %v591, 8.507059e+37
  %v593 = vand.u32 %v581, 2147483648
  %v594 = vor.u32 1.1754944e-38, %v593
  %v595 = vsel %vm592, %v594, %v590
  %v596 = vmul.f32 1.0, %v595
  %v597 = vtanh.pop %v557
  %v598 = vxor.u32 %v558, 2147483648
  %v599 = vmul.f32 %v598, 1.442695
  %v600 = vpow.pop %v599
  %v601 = vadd.f32 %v600, 1.0
  %v602 = vrcp.pop %v601
  %v603 = vmul.f32 %v601, %v602
  %v604 = vsub.f32 1.0, %v603
  %v605 = vmul.f32 %v602, %v604
  %v606 = vadd.f32 %v602, %v605
  %vm607 = vweird.f32 %v601
  %vm608 = vweird.f32 %v602
  %vm609 = vmor %vm607, %vm608
  %v610 = vsel %vm609, %v602, %v606
  %v611 = vand.u32 2147483647, %v601
  %vm612 = vcmp.eq.f32.partialorder %v611, 8.507059e+37
  %v613 = vand.u32 %v601, 2147483648
  %v614 = vor.u32 1.1754944e-38, %v613
  %v615 = vsel %vm612, %v614, %v610
  %v616 = vmul.f32 1.0, %v615
  %v617 = vmul.f32 %v596, %v481
  %v618 = vmul.f32 %v577, %v597
  %v619 = vadd.f32 %v617, %v618
  %v620 = vtanh.pop %v619
  %v621 = vmul.f32 %v616, %v620
  %s622 = sadd.f32 %s60, 2.0
  %v623 = vstv %s622
  %vm624 = vcmp.gt.f32.partialorder %v58, %v623
  %v625 = vsel %vm624, 1, 0
  %v626 = vcvt.s32.f32 %v625
  %628 = vset.pattern.permute.xlu0 0
  %629 = vperm.xlu0 %628, %v626
  %v630 = vpop.permute.xlu0 %629
  %v632 = vmul.f32 %v621, %v630
  %s633 = scalar_lea.vmem [#allocation4], 16
  %634 = vst [vmem:[%s633] sm:$0xff] %v632
  %s635 = scalar_lea.vmem %s0, 96
  %v636 = vld [vmem:[%s635] sm:$0xff]
  %v637 = vld [vmem:[%s635 + $0x8] sm:$0xff]
  %v638 = vld [vmem:[%s635 + $0x10] sm:$0xff]
  %v639 = vld [vmem:[%s635 + $0x18] sm:$0xff]
  %v640 = vpack.c.bf16 %v621, %v621
  %641 = vmatpush.bf16.msra.mxu0 %v192
  %642 = vmatpush.bf16.msra.mxu0 %v188
  %643 = vmatpush.bf16.msra.mxu0 %v184
  %644 = vmatpush.bf16.msra.mxu0 %v180
  %645 = vmatpush.bf16.msra.mxu0 %v176
  %646 = vmatpush.bf16.msra.mxu0 %v172
  %647 = vmatpush.bf16.msra.mxu0 %v168
  %648 = vmatpush.bf16.msra.mxu0 %v164
  %649 = vmatmul.bf16.gmra.mxu0 %v640
  %v650 = vpop.f32.mrf.mxu0
  %v651 = vadd.f32 0.0, %v650
  %v652 = vpop.f32.mrf.mxu0
  %653 = vdwg.mxu0
  %654 = vmatpush.bf16.msra.mxu0 %v193
  %655 = vmatpush.bf16.msra.mxu0 %v189
  %656 = vmatpush.bf16.msra.mxu0 %v185
  %657 = vmatpush.bf16.msra.mxu0 %v181
  %658 = vmatpush.bf16.msra.mxu0 %v177
  %659 = vmatpush.bf16.msra.mxu0 %v173
  %660 = vmatpush.bf16.msra.mxu0 %v169
  %661 = vmatpush.bf16.msra.mxu0 %v165
  %662 = vmatmul.bf16.gmra.mxu0 %v640
  %v663 = vpop.f32.mrf.mxu0
  %v664 = vadd.f32 0.0, %v663
  %v665 = vpop.f32.mrf.mxu0
  %666 = vdwg.mxu0
  %667 = vmatpush.bf16.msra.mxu0 %v194
  %668 = vmatpush.bf16.msra.mxu0 %v190
  %669 = vmatpush.bf16.msra.mxu0 %v186
  %670 = vmatpush.bf16.msra.mxu0 %v182
  %671 = vmatpush.bf16.msra.mxu0 %v178
  %672 = vmatpush.bf16.msra.mxu0 %v174
  %673 = vmatpush.bf16.msra.mxu0 %v170
  %674 = vmatpush.bf16.msra.mxu0 %v166
  %675 = vmatmul.bf16.gmra.mxu0 %v640
  %v676 = vpop.f32.mrf.mxu0
  %v677 = vadd.f32 0.0, %v676
  %v678 = vpop.f32.mrf.mxu0
  %679 = vdwg.mxu0
  %680 = vmatpush.bf16.msra.mxu0 %v195
  %681 = vmatpush.bf16.msra.mxu0 %v191
  %682 = vmatpush.bf16.msra.mxu0 %v187
  %683 = vmatpush.bf16.msra.mxu0 %v183
  %684 = vmatpush.bf16.msra.mxu0 %v179
  %685 = vmatpush.bf16.msra.mxu0 %v175
  %686 = vmatpush.bf16.msra.mxu0 %v171
  %687 = vmatpush.bf16.msra.mxu0 %v167
  %688 = vmatmul.bf16.gmra.mxu0 %v640
  %v689 = vpop.f32.mrf.mxu0
  %v690 = vadd.f32 0.0, %v689
  %v691 = vpop.f32.mrf.mxu0
  %692 = vdwg.mxu0
  %v693 = vadd.f32 %v636, %v651
  %v694 = vadd.f32 %v637, %v664
  %v695 = vadd.f32 %v638, %v677
  %v696 = vadd.f32 %v639, %v690
  %v697 = vxor.u32 %v693, 2147483648
  %v698 = vmul.f32 %v697, 1.442695
  %v699 = vpow.pop %v698
  %v700 = vadd.f32 %v699, 1.0
  %v701 = vrcp.pop %v700
  %v702 = vmul.f32 %v700, %v701
  %v703 = vsub.f32 1.0, %v702
  %v704 = vmul.f32 %v701, %v703
  %v705 = vadd.f32 %v701, %v704
  %vm706 = vweird.f32 %v700
  %vm707 = vweird.f32 %v701
  %vm708 = vmor %vm706, %vm707
  %v709 = vsel %vm708, %v701, %v705
  %v710 = vand.u32 2147483647, %v700
  %vm711 = vcmp.eq.f32.partialorder %v710, 8.507059e+37
  %v712 = vand.u32 %v700, 2147483648
  %v713 = vor.u32 1.1754944e-38, %v712
  %v714 = vsel %vm711, %v713, %v709
  %v715 = vmul.f32 1.0, %v714
  %v716 = vxor.u32 %v694, 2147483648
  %v717 = vmul.f32 %v716, 1.442695
  %v718 = vpow.pop %v717
  %v719 = vadd.f32 %v718, 1.0
  %v720 = vrcp.pop %v719
  %v721 = vmul.f32 %v719, %v720
  %v722 = vsub.f32 1.0, %v721
  %v723 = vmul.f32 %v720, %v722
  %v724 = vadd.f32 %v720, %v723
  %vm725 = vweird.f32 %v719
  %vm726 = vweird.f32 %v720
  %vm727 = vmor %vm725, %vm726
  %v728 = vsel %vm727, %v720, %v724
  %v729 = vand.u32 2147483647, %v719
  %vm730 = vcmp.eq.f32.partialorder %v729, 8.507059e+37
  %v731 = vand.u32 %v719, 2147483648
  %v732 = vor.u32 1.1754944e-38, %v731
  %v733 = vsel %vm730, %v732, %v728
  %v734 = vmul.f32 1.0, %v733
  %v735 = vtanh.pop %v695
  %v736 = vxor.u32 %v696, 2147483648
  %v737 = vmul.f32 %v736, 1.442695
  %v738 = vpow.pop %v737
  %v739 = vadd.f32 %v738, 1.0
  %v740 = vrcp.pop %v739
  %v741 = vmul.f32 %v739, %v740
  %v742 = vsub.f32 1.0, %v741
  %v743 = vmul.f32 %v740, %v742
  %v744 = vadd.f32 %v740, %v743
  %vm745 = vweird.f32 %v739
  %vm746 = vweird.f32 %v740
  %vm747 = vmor %vm745, %vm746
  %v748 = vsel %vm747, %v740, %v744
  %v749 = vand.u32 2147483647, %v739
  %vm750 = vcmp.eq.f32.partialorder %v749, 8.507059e+37
  %v751 = vand.u32 %v739, 2147483648
  %v752 = vor.u32 1.1754944e-38, %v751
  %v753 = vsel %vm750, %v752, %v748
  %v754 = vmul.f32 1.0, %v753
  %v755 = vmul.f32 %v734, %v619
  %v756 = vmul.f32 %v715, %v735
  %v757 = vadd.f32 %v755, %v756
  %v758 = vtanh.pop %v757
  %v759 = vmul.f32 %v754, %v758
  %s760 = sadd.f32 %s60, 3.0
  %v761 = vstv %s760
  %vm762 = vcmp.gt.f32.partialorder %v58, %v761
  %v763 = vsel %vm762, 1, 0
  %v764 = vcvt.s32.f32 %v763
  %766 = vset.pattern.permute.xlu0 0
  %767 = vperm.xlu0 %766, %v764
  %v768 = vpop.permute.xlu0 %767
  %v770 = vmul.f32 %v759, %v768
  %s771 = scalar_lea.vmem [#allocation4], 24
  %772 = vst [vmem:[%s771] sm:$0xff] %v770
  %s773 = scalar_lea.vmem %s0, 128
  %v774 = vld [vmem:[%s773] sm:$0xff]
  %v775 = vld [vmem:[%s773 + $0x8] sm:$0xff]
  %v776 = vld [vmem:[%s773 + $0x10] sm:$0xff]
  %v777 = vld [vmem:[%s773 + $0x18] sm:$0xff]
  %v778 = vpack.c.bf16 %v759, %v759
  %779 = vmatpush.bf16.msra.mxu0 %v192
  %780 = vmatpush.bf16.msra.mxu0 %v188
  %781 = vmatpush.bf16.msra.mxu0 %v184
  %782 = vmatpush.bf16.msra.mxu0 %v180
  %783 = vmatpush.bf16.msra.mxu0 %v176
  %784 = vmatpush.bf16.msra.mxu0 %v172
  %785 = vmatpush.bf16.msra.mxu0 %v168
  %786 = vmatpush.bf16.msra.mxu0 %v164
  %787 = vmatmul.bf16.gmra.mxu0 %v778
  %v788 = vpop.f32.mrf.mxu0
  %v789 = vadd.f32 0.0, %v788
  %v790 = vpop.f32.mrf.mxu0
  %791 = vdwg.mxu0
  %792 = vmatpush.bf16.msra.mxu0 %v193
  %793 = vmatpush.bf16.msra.mxu0 %v189
  %794 = vmatpush.bf16.msra.mxu0 %v185
  %795 = vmatpush.bf16.msra.mxu0 %v181
  %796 = vmatpush.bf16.msra.mxu0 %v177
  %797 = vmatpush.bf16.msra.mxu0 %v173
  %798 = vmatpush.bf16.msra.mxu0 %v169
  %799 = vmatpush.bf16.msra.mxu0 %v165
  %800 = vmatmul.bf16.gmra.mxu0 %v778
  %v801 = vpop.f32.mrf.mxu0
  %v802 = vadd.f32 0.0, %v801
  %v803 = vpop.f32.mrf.mxu0
  %804 = vdwg.mxu0
  %805 = vmatpush.bf16.msra.mxu0 %v194
  %806 = vmatpush.bf16.msra.mxu0 %v190
  %807 = vmatpush.bf16.msra.mxu0 %v186
  %808 = vmatpush.bf16.msra.mxu0 %v182
  %809 = vmatpush.bf16.msra.mxu0 %v178
  %810 = vmatpush.bf16.msra.mxu0 %v174
  %811 = vmatpush.bf16.msra.mxu0 %v170
  %812 = vmatpush.bf16.msra.mxu0 %v166
  %813 = vmatmul.bf16.gmra.mxu0 %v778
  %v814 = vpop.f32.mrf.mxu0
  %v815 = vadd.f32 0.0, %v814
  %v816 = vpop.f32.mrf.mxu0
  %817 = vdwg.mxu0
  %818 = vmatpush.bf16.msra.mxu0 %v195
  %819 = vmatpush.bf16.msra.mxu0 %v191
  %820 = vmatpush.bf16.msra.mxu0 %v187
  %821 = vmatpush.bf16.msra.mxu0 %v183
  %822 = vmatpush.bf16.msra.mxu0 %v179
  %823 = vmatpush.bf16.msra.mxu0 %v175
  %824 = vmatpush.bf16.msra.mxu0 %v171
  %825 = vmatpush.bf16.msra.mxu0 %v167
  %826 = vmatmul.bf16.gmra.mxu0 %v778
  %v827 = vpop.f32.mrf.mxu0
  %v828 = vadd.f32 0.0, %v827
  %v829 = vpop.f32.mrf.mxu0
  %830 = vdwg.mxu0
  %v831 = vadd.f32 %v774, %v789
  %v832 = vadd.f32 %v775, %v802
  %v833 = vadd.f32 %v776, %v815
  %v834 = vadd.f32 %v777, %v828
  %v835 = vxor.u32 %v831, 2147483648
  %v836 = vmul.f32 %v835, 1.442695
  %v837 = vpow.pop %v836
  %v838 = vadd.f32 %v837, 1.0
  %v839 = vrcp.pop %v838
  %v840 = vmul.f32 %v838, %v839
  %v841 = vsub.f32 1.0, %v840
  %v842 = vmul.f32 %v839, %v841
  %v843 = vadd.f32 %v839, %v842
  %vm844 = vweird.f32 %v838
  %vm845 = vweird.f32 %v839
  %vm846 = vmor %vm844, %vm845
  %v847 = vsel %vm846, %v839, %v843
  %v848 = vand.u32 2147483647, %v838
  %vm849 = vcmp.eq.f32.partialorder %v848, 8.507059e+37
  %v850 = vand.u32 %v838, 2147483648
  %v851 = vor.u32 1.1754944e-38, %v850
  %v852 = vsel %vm849, %v851, %v847
  %v853 = vmul.f32 1.0, %v852
  %v854 = vxor.u32 %v832, 2147483648
  %v855 = vmul.f32 %v854, 1.442695
  %v856 = vpow.pop %v855
  %v857 = vadd.f32 %v856, 1.0
  %v858 = vrcp.pop %v857
  %v859 = vmul.f32 %v857, %v858
  %v860 = vsub.f32 1.0, %v859
  %v861 = vmul.f32 %v858, %v860
  %v862 = vadd.f32 %v858, %v861
  %vm863 = vweird.f32 %v857
  %vm864 = vweird.f32 %v858
  %vm865 = vmor %vm863, %vm864
  %v866 = vsel %vm865, %v858, %v862
  %v867 = vand.u32 2147483647, %v857
  %vm868 = vcmp.eq.f32.partialorder %v867, 8.507059e+37
  %v869 = vand.u32 %v857, 2147483648
  %v870 = vor.u32 1.1754944e-38, %v869
  %v871 = vsel %vm868, %v870, %v866
  %v872 = vmul.f32 1.0, %v871
  %v873 = vtanh.pop %v833
  %v874 = vxor.u32 %v834, 2147483648
  %v875 = vmul.f32 %v874, 1.442695
  %v876 = vpow.pop %v875
  %v877 = vadd.f32 %v876, 1.0
  %v878 = vrcp.pop %v877
  %v879 = vmul.f32 %v877, %v878
  %v880 = vsub.f32 1.0, %v879
  %v881 = vmul.f32 %v878, %v880
  %v882 = vadd.f32 %v878, %v881
  %vm883 = vweird.f32 %v877
  %vm884 = vweird.f32 %v878
  %vm885 = vmor %vm883, %vm884
  %v886 = vsel %vm885, %v878, %v882
  %v887 = vand.u32 2147483647, %v877
  %vm888 = vcmp.eq.f32.partialorder %v887, 8.507059e+37
  %v889 = vand.u32 %v877, 2147483648
  %v890 = vor.u32 1.1754944e-38, %v889
  %v891 = vsel %vm888, %v890, %v886
  %v892 = vmul.f32 1.0, %v891
  %v893 = vmul.f32 %v872, %v757
  %v894 = vmul.f32 %v853, %v873
  %v895 = vadd.f32 %v893, %v894
  %v896 = vtanh.pop %v895
  %v897 = vmul.f32 %v892, %v896
  %s898 = sadd.f32 %s60, 4.0
  %v899 = vstv %s898
  %vm900 = vcmp.gt.f32.partialorder %v58, %v899
  %v901 = vsel %vm900, 1, 0
  %v902 = vcvt.s32.f32 %v901
  %904 = vset.pattern.permute.xlu0 0
  %905 = vperm.xlu0 %904, %v902
  %v906 = vpop.permute.xlu0 %905
  %v908 = vmul.f32 %v897, %v906
  %s909 = scalar_lea.vmem [#allocation4], 32
  %910 = vst [vmem:[%s909] sm:$0xff] %v908
  %s911 = scalar_lea.vmem %s0, 160
  %v912 = vld [vmem:[%s911] sm:$0xff]
  %v913 = vld [vmem:[%s911 + $0x8] sm:$0xff]
  %v914 = vld [vmem:[%s911 + $0x10] sm:$0xff]
  %v915 = vld [vmem:[%s911 + $0x18] sm:$0xff]
  %v916 = vpack.c.bf16 %v897, %v897
  %917 = vmatpush.bf16.msra.mxu0 %v192
  %918 = vmatpush.bf16.msra.mxu0 %v188
  %919 = vmatpush.bf16.msra.mxu0 %v184
  %920 = vmatpush.bf16.msra.mxu0 %v180
  %921 = vmatpush.bf16.msra.mxu0 %v176
  %922 = vmatpush.bf16.msra.mxu0 %v172
  %923 = vmatpush.bf16.msra.mxu0 %v168
  %924 = vmatpush.bf16.msra.mxu0 %v164
  %925 = vmatmul.bf16.gmra.mxu0 %v916
  %v926 = vpop.f32.mrf.mxu0
  %v927 = vadd.f32 0.0, %v926
  %v928 = vpop.f32.mrf.mxu0
  %929 = vdwg.mxu0
  %930 = vmatpush.bf16.msra.mxu0 %v193
  %931 = vmatpush.bf16.msra.mxu0 %v189
  %932 = vmatpush.bf16.msra.mxu0 %v185
  %933 = vmatpush.bf16.msra.mxu0 %v181
  %934 = vmatpush.bf16.msra.mxu0 %v177
  %935 = vmatpush.bf16.msra.mxu0 %v173
  %936 = vmatpush.bf16.msra.mxu0 %v169
  %937 = vmatpush.bf16.msra.mxu0 %v165
  %938 = vmatmul.bf16.gmra.mxu0 %v916
  %v939 = vpop.f32.mrf.mxu0
  %v940 = vadd.f32 0.0, %v939
  %v941 = vpop.f32.mrf.mxu0
  %942 = vdwg.mxu0
  %943 = vmatpush.bf16.msra.mxu0 %v194
  %944 = vmatpush.bf16.msra.mxu0 %v190
  %945 = vmatpush.bf16.msra.mxu0 %v186
  %946 = vmatpush.bf16.msra.mxu0 %v182
  %947 = vmatpush.bf16.msra.mxu0 %v178
  %948 = vmatpush.bf16.msra.mxu0 %v174
  %949 = vmatpush.bf16.msra.mxu0 %v170
  %950 = vmatpush.bf16.msra.mxu0 %v166
  %951 = vmatmul.bf16.gmra.mxu0 %v916
  %v952 = vpop.f32.mrf.mxu0
  %v953 = vadd.f32 0.0, %v952
  %v954 = vpop.f32.mrf.mxu0
  %955 = vdwg.mxu0
  %956 = vmatpush.bf16.msra.mxu0 %v195
  %957 = vmatpush.bf16.msra.mxu0 %v191
  %958 = vmatpush.bf16.msra.mxu0 %v187
  %959 = vmatpush.bf16.msra.mxu0 %v183
  %960 = vmatpush.bf16.msra.mxu0 %v179
  %961 = vmatpush.bf16.msra.mxu0 %v175
  %962 = vmatpush.bf16.msra.mxu0 %v171
  %963 = vmatpush.bf16.msra.mxu0 %v167
  %964 = vmatmul.bf16.gmra.mxu0 %v916
  %v965 = vpop.f32.mrf.mxu0
  %v966 = vadd.f32 0.0, %v965
  %v967 = vpop.f32.mrf.mxu0
  %968 = vdwg.mxu0
  %v969 = vadd.f32 %v912, %v927
  %v970 = vadd.f32 %v913, %v940
  %v971 = vadd.f32 %v914, %v953
  %v972 = vadd.f32 %v915, %v966
  %v973 = vxor.u32 %v969, 2147483648
  %v974 = vmul.f32 %v973, 1.442695
  %v975 = vpow.pop %v974
  %v976 = vadd.f32 %v975, 1.0
  %v977 = vrcp.pop %v976
  %v978 = vmul.f32 %v976, %v977
  %v979 = vsub.f32 1.0, %v978
  %v980 = vmul.f32 %v977, %v979
  %v981 = vadd.f32 %v977, %v980
  %vm982 = vweird.f32 %v976
  %vm983 = vweird.f32 %v977
  %vm984 = vmor %vm982, %vm983
  %v985 = vsel %vm984, %v977, %v981
  %v986 = vand.u32 2147483647, %v976
  %vm987 = vcmp.eq.f32.partialorder %v986, 8.507059e+37
  %v988 = vand.u32 %v976, 2147483648
  %v989 = vor.u32 1.1754944e-38, %v988
  %v990 = vsel %vm987, %v989, %v985
  %v991 = vmul.f32 1.0, %v990
  %v992 = vxor.u32 %v970, 2147483648
  %v993 = vmul.f32 %v992, 1.442695
  %v994 = vpow.pop %v993
  %v995 = vadd.f32 %v994, 1.0
  %v996 = vrcp.pop %v995
  %v997 = vmul.f32 %v995, %v996
  %v998 = vsub.f32 1.0, %v997
  %v999 = vmul.f32 %v996, %v998
  %v1000 = vadd.f32 %v996, %v999
  %vm1001 = vweird.f32 %v995
  %vm1002 = vweird.f32 %v996
  %vm1003 = vmor %vm1001, %vm1002
  %v1004 = vsel %vm1003, %v996, %v1000
  %v1005 = vand.u32 2147483647, %v995
  %vm1006 = vcmp.eq.f32.partialorder %v1005, 8.507059e+37
  %v1007 = vand.u32 %v995, 2147483648
  %v1008 = vor.u32 1.1754944e-38, %v1007
  %v1009 = vsel %vm1006, %v1008, %v1004
  %v1010 = vmul.f32 1.0, %v1009
  %v1011 = vtanh.pop %v971
  %v1012 = vxor.u32 %v972, 2147483648
  %v1013 = vmul.f32 %v1012, 1.442695
  %v1014 = vpow.pop %v1013
  %v1015 = vadd.f32 %v1014, 1.0
  %v1016 = vrcp.pop %v1015
  %v1017 = vmul.f32 %v1015, %v1016
  %v1018 = vsub.f32 1.0, %v1017
  %v1019 = vmul.f32 %v1016, %v1018
  %v1020 = vadd.f32 %v1016, %v1019
  %vm1021 = vweird.f32 %v1015
  %vm1022 = vweird.f32 %v1016
  %vm1023 = vmor %vm1021, %vm1022
  %v1024 = vsel %vm1023, %v1016, %v1020
  %v1025 = vand.u32 2147483647, %v1015
  %vm1026 = vcmp.eq.f32.partialorder %v1025, 8.507059e+37
  %v1027 = vand.u32 %v1015, 2147483648
  %v1028 = vor.u32 1.1754944e-38, %v1027
  %v1029 = vsel %vm1026, %v1028, %v1024
  %v1030 = vmul.f32 1.0, %v1029
  %v1031 = vmul.f32 %v1010, %v895
  %v1032 = vmul.f32 %v991, %v1011
  %v1033 = vadd.f32 %v1031, %v1032
  %v1034 = vtanh.pop %v1033
  %v1035 = vmul.f32 %v1030, %v1034
  %s1036 = sadd.f32 %s60, 5.0
  %v1037 = vstv %s1036
  %vm1038 = vcmp.gt.f32.partialorder %v58, %v1037
  %v1039 = vsel %vm1038, 1, 0
  %v1040 = vcvt.s32.f32 %v1039
  %1042 = vset.pattern.permute.xlu0 0
  %1043 = vperm.xlu0 %1042, %v1040
  %v1044 = vpop.permute.xlu0 %1043
  %v1046 = vmul.f32 %v1035, %v1044
  %s1047 = scalar_lea.vmem [#allocation4], 40
  %1048 = vst [vmem:[%s1047] sm:$0xff] %v1046
  %s1049 = scalar_lea.vmem %s0, 192
  %v1050 = vld [vmem:[%s1049] sm:$0xff]
  %v1051 = vld [vmem:[%s1049 + $0x8] sm:$0xff]
  %v1052 = vld [vmem:[%s1049 + $0x10] sm:$0xff]
  %v1053 = vld [vmem:[%s1049 + $0x18] sm:$0xff]
  %v1054 = vpack.c.bf16 %v1035, %v1035
  %1055 = vmatpush.bf16.msra.mxu0 %v192
  %1056 = vmatpush.bf16.msra.mxu0 %v188
  %1057 = vmatpush.bf16.msra.mxu0 %v184
  %1058 = vmatpush.bf16.msra.mxu0 %v180
  %1059 = vmatpush.bf16.msra.mxu0 %v176
  %1060 = vmatpush.bf16.msra.mxu0 %v172
  %1061 = vmatpush.bf16.msra.mxu0 %v168
  %1062 = vmatpush.bf16.msra.mxu0 %v164
  %1063 = vmatmul.bf16.gmra.mxu0 %v1054
  %v1064 = vpop.f32.mrf.mxu0
  %v1065 = vadd.f32 0.0, %v1064
  %v1066 = vpop.f32.mrf.mxu0
  %1067 = vdwg.mxu0
  %1068 = vmatpush.bf16.msra.mxu0 %v193
  %1069 = vmatpush.bf16.msra.mxu0 %v189
  %1070 = vmatpush.bf16.msra.mxu0 %v185
  %1071 = vmatpush.bf16.msra.mxu0 %v181
  %1072 = vmatpush.bf16.msra.mxu0 %v177
  %1073 = vmatpush.bf16.msra.mxu0 %v173
  %1074 = vmatpush.bf16.msra.mxu0 %v169
  %1075 = vmatpush.bf16.msra.mxu0 %v165
  %1076 = vmatmul.bf16.gmra.mxu0 %v1054
  %v1077 = vpop.f32.mrf.mxu0
  %v1078 = vadd.f32 0.0, %v1077
  %v1079 = vpop.f32.mrf.mxu0
  %1080 = vdwg.mxu0
  %1081 = vmatpush.bf16.msra.mxu0 %v194
  %1082 = vmatpush.bf16.msra.mxu0 %v190
  %1083 = vmatpush.bf16.msra.mxu0 %v186
  %1084 = vmatpush.bf16.msra.mxu0 %v182
  %1085 = vmatpush.bf16.msra.mxu0 %v178
  %1086 = vmatpush.bf16.msra.mxu0 %v174
  %1087 = vmatpush.bf16.msra.mxu0 %v170
  %1088 = vmatpush.bf16.msra.mxu0 %v166
  %1089 = vmatmul.bf16.gmra.mxu0 %v1054
  %v1090 = vpop.f32.mrf.mxu0
  %v1091 = vadd.f32 0.0, %v1090
  %v1092 = vpop.f32.mrf.mxu0
  %1093 = vdwg.mxu0
  %1094 = vmatpush.bf16.msra.mxu0 %v195
  %1095 = vmatpush.bf16.msra.mxu0 %v191
  %1096 = vmatpush.bf16.msra.mxu0 %v187
  %1097 = vmatpush.bf16.msra.mxu0 %v183
  %1098 = vmatpush.bf16.msra.mxu0 %v179
  %1099 = vmatpush.bf16.msra.mxu0 %v175
  %1100 = vmatpush.bf16.msra.mxu0 %v171
  %1101 = vmatpush.bf16.msra.mxu0 %v167
  %1102 = vmatmul.bf16.gmra.mxu0 %v1054
  %v1103 = vpop.f32.mrf.mxu0
  %v1104 = vadd.f32 0.0, %v1103
  %v1105 = vpop.f32.mrf.mxu0
  %1106 = vdwg.mxu0
  %v1107 = vadd.f32 %v1050, %v1065
  %v1108 = vadd.f32 %v1051, %v1078
  %v1109 = vadd.f32 %v1052, %v1091
  %v1110 = vadd.f32 %v1053, %v1104
  %v1111 = vxor.u32 %v1107, 2147483648
  %v1112 = vmul.f32 %v1111, 1.442695
  %v1113 = vpow.pop %v1112
  %v1114 = vadd.f32 %v1113, 1.0
  %v1115 = vrcp.pop %v1114
  %v1116 = vmul.f32 %v1114, %v1115
  %v1117 = vsub.f32 1.0, %v1116
  %v1118 = vmul.f32 %v1115, %v1117
  %v1119 = vadd.f32 %v1115, %v1118
  %vm1120 = vweird.f32 %v1114
  %vm1121 = vweird.f32 %v1115
  %vm1122 = vmor %vm1120, %vm1121
  %v1123 = vsel %vm1122, %v1115, %v1119
  %v1124 = vand.u32 2147483647, %v1114
  %vm1125 = vcmp.eq.f32.partialorder %v1124, 8.507059e+37
  %v1126 = vand.u32 %v1114, 2147483648
  %v1127 = vor.u32 1.1754944e-38, %v1126
  %v1128 = vsel %vm1125, %v1127, %v1123
  %v1129 = vmul.f32 1.0, %v1128
  %v1130 = vxor.u32 %v1108, 2147483648
  %v1131 = vmul.f32 %v1130, 1.442695
  %v1132 = vpow.pop %v1131
  %v1133 = vadd.f32 %v1132, 1.0
  %v1134 = vrcp.pop %v1133
  %v1135 = vmul.f32 %v1133, %v1134
  %v1136 = vsub.f32 1.0, %v1135
  %v1137 = vmul.f32 %v1134, %v1136
  %v1138 = vadd.f32 %v1134, %v1137
  %vm1139 = vweird.f32 %v1133
  %vm1140 = vweird.f32 %v1134
  %vm1141 = vmor %vm1139, %vm1140
  %v1142 = vsel %vm1141, %v1134, %v1138
  %v1143 = vand.u32 2147483647, %v1133
  %vm1144 = vcmp.eq.f32.partialorder %v1143, 8.507059e+37
  %v1145 = vand.u32 %v1133, 2147483648
  %v1146 = vor.u32 1.1754944e-38, %v1145
  %v1147 = vsel %vm1144, %v1146, %v1142
  %v1148 = vmul.f32 1.0, %v1147
  %v1149 = vtanh.pop %v1109
  %v1150 = vxor.u32 %v1110, 2147483648
  %v1151 = vmul.f32 %v1150, 1.442695
  %v1152 = vpow.pop %v1151
  %v1153 = vadd.f32 %v1152, 1.0
  %v1154 = vrcp.pop %v1153
  %v1155 = vmul.f32 %v1153, %v1154
  %v1156 = vsub.f32 1.0, %v1155
  %v1157 = vmul.f32 %v1154, %v1156
  %v1158 = vadd.f32 %v1154, %v1157
  %vm1159 = vweird.f32 %v1153
  %vm1160 = vweird.f32 %v1154
  %vm1161 = vmor %vm1159, %vm1160
  %v1162 = vsel %vm1161, %v1154, %v1158
  %v1163 = vand.u32 2147483647, %v1153
  %vm1164 = vcmp.eq.f32.partialorder %v1163, 8.507059e+37
  %v1165 = vand.u32 %v1153, 2147483648
  %v1166 = vor.u32 1.1754944e-38, %v1165
  %v1167 = vsel %vm1164, %v1166, %v1162
  %v1168 = vmul.f32 1.0, %v1167
  %v1169 = vmul.f32 %v1148, %v1033
  %v1170 = vmul.f32 %v1129, %v1149
  %v1171 = vadd.f32 %v1169, %v1170
  %v1172 = vtanh.pop %v1171
  %v1173 = vmul.f32 %v1168, %v1172
  %s1174 = sadd.f32 %s60, 6.0
  %v1175 = vstv %s1174
  %vm1176 = vcmp.gt.f32.partialorder %v58, %v1175
  %v1177 = vsel %vm1176, 1, 0
  %v1178 = vcvt.s32.f32 %v1177
  %1180 = vset.pattern.permute.xlu0 0
  %1181 = vperm.xlu0 %1180, %v1178
  %v1182 = vpop.permute.xlu0 %1181
  %v1184 = vmul.f32 %v1173, %v1182
  %s1185 = scalar_lea.vmem [#allocation4], 48
  %1186 = vst [vmem:[%s1185] sm:$0xff] %v1184
  %s1187 = scalar_lea.vmem %s0, 224
  %v1188 = vld [vmem:[%s1187] sm:$0xff]
  %v1189 = vld [vmem:[%s1187 + $0x8] sm:$0xff]
  %v1190 = vld [vmem:[%s1187 + $0x10] sm:$0xff]
  %v1191 = vld [vmem:[%s1187 + $0x18] sm:$0xff]
  %v1192 = vpack.c.bf16 %v1173, %v1173
  %1193 = vmatpush.bf16.msra.mxu0 %v192
  %1194 = vmatpush.bf16.msra.mxu0 %v188
  %1195 = vmatpush.bf16.msra.mxu0 %v184
  %1196 = vmatpush.bf16.msra.mxu0 %v180
  %1197 = vmatpush.bf16.msra.mxu0 %v176
  %1198 = vmatpush.bf16.msra.mxu0 %v172
  %1199 = vmatpush.bf16.msra.mxu0 %v168
  %1200 = vmatpush.bf16.msra.mxu0 %v164
  %1201 = vmatmul.bf16.gmra.mxu0 %v1192
  %v1202 = vpop.f32.mrf.mxu0
  %v1203 = vadd.f32 0.0, %v1202
  %v1204 = vpop.f32.mrf.mxu0
  %1205 = vdwg.mxu0
  %1206 = vmatpush.bf16.msra.mxu0 %v193
  %1207 = vmatpush.bf16.msra.mxu0 %v189
  %1208 = vmatpush.bf16.msra.mxu0 %v185
  %1209 = vmatpush.bf16.msra.mxu0 %v181
  %1210 = vmatpush.bf16.msra.mxu0 %v177
  %1211 = vmatpush.bf16.msra.mxu0 %v173
  %1212 = vmatpush.bf16.msra.mxu0 %v169
  %1213 = vmatpush.bf16.msra.mxu0 %v165
  %1214 = vmatmul.bf16.gmra.mxu0 %v1192
  %v1215 = vpop.f32.mrf.mxu0
  %v1216 = vadd.f32 0.0, %v1215
  %v1217 = vpop.f32.mrf.mxu0
  %1218 = vdwg.mxu0
  %1219 = vmatpush.bf16.msra.mxu0 %v194
  %1220 = vmatpush.bf16.msra.mxu0 %v190
  %1221 = vmatpush.bf16.msra.mxu0 %v186
  %1222 = vmatpush.bf16.msra.mxu0 %v182
  %1223 = vmatpush.bf16.msra.mxu0 %v178
  %1224 = vmatpush.bf16.msra.mxu0 %v174
  %1225 = vmatpush.bf16.msra.mxu0 %v170
  %1226 = vmatpush.bf16.msra.mxu0 %v166
  %1227 = vmatmul.bf16.gmra.mxu0 %v1192
  %v1228 = vpop.f32.mrf.mxu0
  %v1229 = vadd.f32 0.0, %v1228
  %v1230 = vpop.f32.mrf.mxu0
  %1231 = vdwg.mxu0
  %1232 = vmatpush.bf16.msra.mxu0 %v195
  %1233 = vmatpush.bf16.msra.mxu0 %v191
  %1234 = vmatpush.bf16.msra.mxu0 %v187
  %1235 = vmatpush.bf16.msra.mxu0 %v183
  %1236 = vmatpush.bf16.msra.mxu0 %v179
  %1237 = vmatpush.bf16.msra.mxu0 %v175
  %1238 = vmatpush.bf16.msra.mxu0 %v171
  %1239 = vmatpush.bf16.msra.mxu0 %v167
  %1240 = vmatmul.bf16.gmra.mxu0 %v1192
  %v1241 = vpop.f32.mrf.mxu0
  %v1242 = vadd.f32 0.0, %v1241
  %v1243 = vpop.f32.mrf.mxu0
  %1244 = vdwg.mxu0
  %v1245 = vadd.f32 %v1188, %v1203
  %v1246 = vadd.f32 %v1189, %v1216
  %v1247 = vadd.f32 %v1190, %v1229
  %v1248 = vadd.f32 %v1191, %v1242
  %v1249 = vxor.u32 %v1245, 2147483648
  %v1250 = vmul.f32 %v1249, 1.442695
  %v1251 = vpow.pop %v1250
  %v1252 = vadd.f32 %v1251, 1.0
  %v1253 = vrcp.pop %v1252
  %v1254 = vmul.f32 %v1252, %v1253
  %v1255 = vsub.f32 1.0, %v1254
  %v1256 = vmul.f32 %v1253, %v1255
  %v1257 = vadd.f32 %v1253, %v1256
  %vm1258 = vweird.f32 %v1252
  %vm1259 = vweird.f32 %v1253
  %vm1260 = vmor %vm1258, %vm1259
  %v1261 = vsel %vm1260, %v1253, %v1257
  %v1262 = vand.u32 2147483647, %v1252
  %vm1263 = vcmp.eq.f32.partialorder %v1262, 8.507059e+37
  %v1264 = vand.u32 %v1252, 2147483648
  %v1265 = vor.u32 1.1754944e-38, %v1264
  %v1266 = vsel %vm1263, %v1265, %v1261
  %v1267 = vmul.f32 1.0, %v1266
  %v1268 = vxor.u32 %v1246, 2147483648
  %v1269 = vmul.f32 %v1268, 1.442695
  %v1270 = vpow.pop %v1269
  %v1271 = vadd.f32 %v1270, 1.0
  %v1272 = vrcp.pop %v1271
  %v1273 = vmul.f32 %v1271, %v1272
  %v1274 = vsub.f32 1.0, %v1273
  %v1275 = vmul.f32 %v1272, %v1274
  %v1276 = vadd.f32 %v1272, %v1275
  %vm1277 = vweird.f32 %v1271
  %vm1278 = vweird.f32 %v1272
  %vm1279 = vmor %vm1277, %vm1278
  %v1280 = vsel %vm1279, %v1272, %v1276
  %v1281 = vand.u32 2147483647, %v1271
  %vm1282 = vcmp.eq.f32.partialorder %v1281, 8.507059e+37
  %v1283 = vand.u32 %v1271, 2147483648
  %v1284 = vor.u32 1.1754944e-38, %v1283
  %v1285 = vsel %vm1282, %v1284, %v1280
  %v1286 = vmul.f32 1.0, %v1285
  %v1287 = vtanh.pop %v1247
  %v1288 = vxor.u32 %v1248, 2147483648
  %v1289 = vmul.f32 %v1288, 1.442695
  %v1290 = vpow.pop %v1289
  %v1291 = vadd.f32 %v1290, 1.0
  %v1292 = vrcp.pop %v1291
  %v1293 = vmul.f32 %v1291, %v1292
  %v1294 = vsub.f32 1.0, %v1293
  %v1295 = vmul.f32 %v1292, %v1294
  %v1296 = vadd.f32 %v1292, %v1295
  %vm1297 = vweird.f32 %v1291
  %vm1298 = vweird.f32 %v1292
  %vm1299 = vmor %vm1297, %vm1298
  %v1300 = vsel %vm1299, %v1292, %v1296
  %v1301 = vand.u32 2147483647, %v1291
  %vm1302 = vcmp.eq.f32.partialorder %v1301, 8.507059e+37
  %v1303 = vand.u32 %v1291, 2147483648
  %v1304 = vor.u32 1.1754944e-38, %v1303
  %v1305 = vsel %vm1302, %v1304, %v1300
  %v1306 = vmul.f32 1.0, %v1305
  %v1307 = vmul.f32 %v1286, %v1171
  %v1308 = vmul.f32 %v1267, %v1287
  %v1309 = vadd.f32 %v1307, %v1308
  %v1310 = vtanh.pop %v1309
  %v1311 = vmul.f32 %v1306, %v1310
  %s1312 = sadd.f32 %s60, 7.0
  %v1313 = vstv %s1312
  %vm1314 = vcmp.gt.f32.partialorder %v58, %v1313
  %v1315 = vsel %vm1314, 1, 0
  %v1316 = vcvt.s32.f32 %v1315
  %1318 = vset.pattern.permute.xlu0 0
  %1319 = vperm.xlu0 %1318, %v1316
  %v1320 = vpop.permute.xlu0 %1319
  %v1322 = vmul.f32 %v1311, %v1320
  %s1323 = scalar_lea.vmem [#allocation4], 56
  %1324 = vst [vmem:[%s1323] sm:$0xff] %v1322
  %s1325 = scalar_lea.vmem %s0, 256
  %v1326 = vld [vmem:[%s1325] sm:$0xff]
  %v1327 = vld [vmem:[%s1325 + $0x8] sm:$0xff]
  %v1328 = vld [vmem:[%s1325 + $0x10] sm:$0xff]
  %v1329 = vld [vmem:[%s1325 + $0x18] sm:$0xff]
  %v1330 = vpack.c.bf16 %v1311, %v1311
  %1331 = vmatpush.bf16.msra.mxu0 %v192
  %1332 = vmatpush.bf16.msra.mxu0 %v188
  %1333 = vmatpush.bf16.msra.mxu0 %v184
  %1334 = vmatpush.bf16.msra.mxu0 %v180
  %1335 = vmatpush.bf16.msra.mxu0 %v176
  %1336 = vmatpush.bf16.msra.mxu0 %v172
  %1337 = vmatpush.bf16.msra.mxu0 %v168
  %1338 = vmatpush.bf16.msra.mxu0 %v164
  %1339 = vmatmul.bf16.gmra.mxu0 %v1330
  %v1340 = vpop.f32.mrf.mxu0
  %v1341 = vadd.f32 0.0, %v1340
  %v1342 = vpop.f32.mrf.mxu0
  %1343 = vdwg.mxu0
  %1344 = vmatpush.bf16.msra.mxu0 %v193
  %1345 = vmatpush.bf16.msra.mxu0 %v189
  %1346 = vmatpush.bf16.msra.mxu0 %v185
  %1347 = vmatpush.bf16.msra.mxu0 %v181
  %1348 = vmatpush.bf16.msra.mxu0 %v177
  %1349 = vmatpush.bf16.msra.mxu0 %v173
  %1350 = vmatpush.bf16.msra.mxu0 %v169
  %1351 = vmatpush.bf16.msra.mxu0 %v165
  %1352 = vmatmul.bf16.gmra.mxu0 %v1330
  %v1353 = vpop.f32.mrf.mxu0
  %v1354 = vadd.f32 0.0, %v1353
  %v1355 = vpop.f32.mrf.mxu0
  %1356 = vdwg.mxu0
  %1357 = vmatpush.bf16.msra.mxu0 %v194
  %1358 = vmatpush.bf16.msra.mxu0 %v190
  %1359 = vmatpush.bf16.msra.mxu0 %v186
  %1360 = vmatpush.bf16.msra.mxu0 %v182
  %1361 = vmatpush.bf16.msra.mxu0 %v178
  %1362 = vmatpush.bf16.msra.mxu0 %v174
  %1363 = vmatpush.bf16.msra.mxu0 %v170
  %1364 = vmatpush.bf16.msra.mxu0 %v166
  %1365 = vmatmul.bf16.gmra.mxu0 %v1330
  %v1366 = vpop.f32.mrf.mxu0
  %v1367 = vadd.f32 0.0, %v1366
  %v1368 = vpop.f32.mrf.mxu0
  %1369 = vdwg.mxu0
  %1370 = vmatpush.bf16.msra.mxu0 %v195
  %1371 = vmatpush.bf16.msra.mxu0 %v191
  %1372 = vmatpush.bf16.msra.mxu0 %v187
  %1373 = vmatpush.bf16.msra.mxu0 %v183
  %1374 = vmatpush.bf16.msra.mxu0 %v179
  %1375 = vmatpush.bf16.msra.mxu0 %v175
  %1376 = vmatpush.bf16.msra.mxu0 %v171
  %1377 = vmatpush.bf16.msra.mxu0 %v167
  %1378 = vmatmul.bf16.gmra.mxu0 %v1330
  %v1379 = vpop.f32.mrf.mxu0
  %v1380 = vadd.f32 0.0, %v1379
  %v1381 = vpop.f32.mrf.mxu0
  %1382 = vdwg.mxu0
  %v1383 = vadd.f32 %v1326, %v1341
  %v1384 = vadd.f32 %v1327, %v1354
  %v1385 = vadd.f32 %v1328, %v1367
  %v1386 = vadd.f32 %v1329, %v1380
  %v1387 = vxor.u32 %v1383, 2147483648
  %v1388 = vmul.f32 %v1387, 1.442695
  %v1389 = vpow.pop %v1388
  %v1390 = vadd.f32 %v1389, 1.0
  %v1391 = vrcp.pop %v1390
  %v1392 = vmul.f32 %v1390, %v1391
  %v1393 = vsub.f32 1.0, %v1392
  %v1394 = vmul.f32 %v1391, %v1393
  %v1395 = vadd.f32 %v1391, %v1394
  %vm1396 = vweird.f32 %v1390
  %vm1397 = vweird.f32 %v1391
  %vm1398 = vmor %vm1396, %vm1397
  %v1399 = vsel %vm1398, %v1391, %v1395
  %v1400 = vand.u32 2147483647, %v1390
  %vm1401 = vcmp.eq.f32.partialorder %v1400, 8.507059e+37
  %v1402 = vand.u32 %v1390, 2147483648
  %v1403 = vor.u32 1.1754944e-38, %v1402
  %v1404 = vsel %vm1401, %v1403, %v1399
  %v1405 = vmul.f32 1.0, %v1404
  %v1406 = vxor.u32 %v1384, 2147483648
  %v1407 = vmul.f32 %v1406, 1.442695
  %v1408 = vpow.pop %v1407
  %v1409 = vadd.f32 %v1408, 1.0
  %v1410 = vrcp.pop %v1409
  %v1411 = vmul.f32 %v1409, %v1410
  %v1412 = vsub.f32 1.0, %v1411
  %v1413 = vmul.f32 %v1410, %v1412
  %v1414 = vadd.f32 %v1410, %v1413
  %vm1415 = vweird.f32 %v1409
  %vm1416 = vweird.f32 %v1410
  %vm1417 = vmor %vm1415, %vm1416
  %v1418 = vsel %vm1417, %v1410, %v1414
  %v1419 = vand.u32 2147483647, %v1409
  %vm1420 = vcmp.eq.f32.partialorder %v1419, 8.507059e+37
  %v1421 = vand.u32 %v1409, 2147483648
  %v1422 = vor.u32 1.1754944e-38, %v1421
  %v1423 = vsel %vm1420, %v1422, %v1418
  %v1424 = vmul.f32 1.0, %v1423
  %v1425 = vtanh.pop %v1385
  %v1426 = vxor.u32 %v1386, 2147483648
  %v1427 = vmul.f32 %v1426, 1.442695
  %v1428 = vpow.pop %v1427
  %v1429 = vadd.f32 %v1428, 1.0
  %v1430 = vrcp.pop %v1429
  %v1431 = vmul.f32 %v1429, %v1430
  %v1432 = vsub.f32 1.0, %v1431
  %v1433 = vmul.f32 %v1430, %v1432
  %v1434 = vadd.f32 %v1430, %v1433
  %vm1435 = vweird.f32 %v1429
  %vm1436 = vweird.f32 %v1430
  %vm1437 = vmor %vm1435, %vm1436
  %v1438 = vsel %vm1437, %v1430, %v1434
  %v1439 = vand.u32 2147483647, %v1429
  %vm1440 = vcmp.eq.f32.partialorder %v1439, 8.507059e+37
  %v1441 = vand.u32 %v1429, 2147483648
  %v1442 = vor.u32 1.1754944e-38, %v1441
  %v1443 = vsel %vm1440, %v1442, %v1438
  %v1444 = vmul.f32 1.0, %v1443
  %v1445 = vmul.f32 %v1424, %v1309
  %v1446 = vmul.f32 %v1405, %v1425
  %v1447 = vadd.f32 %v1445, %v1446
  %v1448 = vtanh.pop %v1447
  %v1449 = vmul.f32 %v1444, %v1448
  %s1450 = sadd.f32 %s60, 8.0
  %v1451 = vstv %s1450
  %vm1452 = vcmp.gt.f32.partialorder %v58, %v1451
  %v1453 = vsel %vm1452, 1, 0
  %v1454 = vcvt.s32.f32 %v1453
  %1456 = vset.pattern.permute.xlu0 0
  %1457 = vperm.xlu0 %1456, %v1454
  %v1458 = vpop.permute.xlu0 %1457
  %v1460 = vmul.f32 %v1449, %v1458
  %s1461 = scalar_lea.vmem [#allocation4], 64
  %1462 = vst [vmem:[%s1461] sm:$0xff] %v1460
  %s1463 = scalar_lea.vmem %s0, 288
  %v1464 = vld [vmem:[%s1463] sm:$0xff]
  %v1465 = vld [vmem:[%s1463 + $0x8] sm:$0xff]
  %v1466 = vld [vmem:[%s1463 + $0x10] sm:$0xff]
  %v1467 = vld [vmem:[%s1463 + $0x18] sm:$0xff]
  %v1468 = vpack.c.bf16 %v1449, %v1449
  %1469 = vmatpush.bf16.msra.mxu0 %v192
  %1470 = vmatpush.bf16.msra.mxu0 %v188
  %1471 = vmatpush.bf16.msra.mxu0 %v184
  %1472 = vmatpush.bf16.msra.mxu0 %v180
  %1473 = vmatpush.bf16.msra.mxu0 %v176
  %1474 = vmatpush.bf16.msra.mxu0 %v172
  %1475 = vmatpush.bf16.msra.mxu0 %v168
  %1476 = vmatpush.bf16.msra.mxu0 %v164
  %1477 = vmatmul.bf16.gmra.mxu0 %v1468
  %v1478 = vpop.f32.mrf.mxu0
  %v1479 = vadd.f32 0.0, %v1478
  %v1480 = vpop.f32.mrf.mxu0
  %1481 = vdwg.mxu0
  %1482 = vmatpush.bf16.msra.mxu0 %v193
  %1483 = vmatpush.bf16.msra.mxu0 %v189
  %1484 = vmatpush.bf16.msra.mxu0 %v185
  %1485 = vmatpush.bf16.msra.mxu0 %v181
  %1486 = vmatpush.bf16.msra.mxu0 %v177
  %1487 = vmatpush.bf16.msra.mxu0 %v173
  %1488 = vmatpush.bf16.msra.mxu0 %v169
  %1489 = vmatpush.bf16.msra.mxu0 %v165
  %1490 = vmatmul.bf16.gmra.mxu0 %v1468
  %v1491 = vpop.f32.mrf.mxu0
  %v1492 = vadd.f32 0.0, %v1491
  %v1493 = vpop.f32.mrf.mxu0
  %1494 = vdwg.mxu0
  %1495 = vmatpush.bf16.msra.mxu0 %v194
  %1496 = vmatpush.bf16.msra.mxu0 %v190
  %1497 = vmatpush.bf16.msra.mxu0 %v186
  %1498 = vmatpush.bf16.msra.mxu0 %v182
  %1499 = vmatpush.bf16.msra.mxu0 %v178
  %1500 = vmatpush.bf16.msra.mxu0 %v174
  %1501 = vmatpush.bf16.msra.mxu0 %v170
  %1502 = vmatpush.bf16.msra.mxu0 %v166
  %1503 = vmatmul.bf16.gmra.mxu0 %v1468
  %v1504 = vpop.f32.mrf.mxu0
  %v1505 = vadd.f32 0.0, %v1504
  %v1506 = vpop.f32.mrf.mxu0
  %1507 = vdwg.mxu0
  %1508 = vmatpush.bf16.msra.mxu0 %v195
  %1509 = vmatpush.bf16.msra.mxu0 %v191
  %1510 = vmatpush.bf16.msra.mxu0 %v187
  %1511 = vmatpush.bf16.msra.mxu0 %v183
  %1512 = vmatpush.bf16.msra.mxu0 %v179
  %1513 = vmatpush.bf16.msra.mxu0 %v175
  %1514 = vmatpush.bf16.msra.mxu0 %v171
  %1515 = vmatpush.bf16.msra.mxu0 %v167
  %1516 = vmatmul.bf16.gmra.mxu0 %v1468
  %v1517 = vpop.f32.mrf.mxu0
  %v1518 = vadd.f32 0.0, %v1517
  %v1519 = vpop.f32.mrf.mxu0
  %1520 = vdwg.mxu0
  %v1521 = vadd.f32 %v1464, %v1479
  %v1522 = vadd.f32 %v1465, %v1492
  %v1523 = vadd.f32 %v1466, %v1505
  %v1524 = vadd.f32 %v1467, %v1518
  %v1525 = vxor.u32 %v1521, 2147483648
  %v1526 = vmul.f32 %v1525, 1.442695
  %v1527 = vpow.pop %v1526
  %v1528 = vadd.f32 %v1527, 1.0
  %v1529 = vrcp.pop %v1528
  %v1530 = vmul.f32 %v1528, %v1529
  %v1531 = vsub.f32 1.0, %v1530
  %v1532 = vmul.f32 %v1529, %v1531
  %v1533 = vadd.f32 %v1529, %v1532
  %vm1534 = vweird.f32 %v1528
  %vm1535 = vweird.f32 %v1529
  %vm1536 = vmor %vm1534, %vm1535
  %v1537 = vsel %vm1536, %v1529, %v1533
  %v1538 = vand.u32 2147483647, %v1528
  %vm1539 = vcmp.eq.f32.partialorder %v1538, 8.507059e+37
  %v1540 = vand.u32 %v1528, 2147483648
  %v1541 = vor.u32 1.1754944e-38, %v1540
  %v1542 = vsel %vm1539, %v1541, %v1537
  %v1543 = vmul.f32 1.0, %v1542
  %v1544 = vxor.u32 %v1522, 2147483648
  %v1545 = vmul.f32 %v1544, 1.442695
  %v1546 = vpow.pop %v1545
  %v1547 = vadd.f32 %v1546, 1.0
  %v1548 = vrcp.pop %v1547
  %v1549 = vmul.f32 %v1547, %v1548
  %v1550 = vsub.f32 1.0, %v1549
  %v1551 = vmul.f32 %v1548, %v1550
  %v1552 = vadd.f32 %v1548, %v1551
  %vm1553 = vweird.f32 %v1547
  %vm1554 = vweird.f32 %v1548
  %vm1555 = vmor %vm1553, %vm1554
  %v1556 = vsel %vm1555, %v1548, %v1552
  %v1557 = vand.u32 2147483647, %v1547
  %vm1558 = vcmp.eq.f32.partialorder %v1557, 8.507059e+37
  %v1559 = vand.u32 %v1547, 2147483648
  %v1560 = vor.u32 1.1754944e-38, %v1559
  %v1561 = vsel %vm1558, %v1560, %v1556
  %v1562 = vmul.f32 1.0, %v1561
  %v1563 = vtanh.pop %v1523
  %v1564 = vxor.u32 %v1524, 2147483648
  %v1565 = vmul.f32 %v1564, 1.442695
  %v1566 = vpow.pop %v1565
  %v1567 = vadd.f32 %v1566, 1.0
  %v1568 = vrcp.pop %v1567
  %v1569 = vmul.f32 %v1567, %v1568
  %v1570 = vsub.f32 1.0, %v1569
  %v1571 = vmul.f32 %v1568, %v1570
  %v1572 = vadd.f32 %v1568, %v1571
  %vm1573 = vweird.f32 %v1567
  %vm1574 = vweird.f32 %v1568
  %vm1575 = vmor %vm1573, %vm1574
  %v1576 = vsel %vm1575, %v1568, %v1572
  %v1577 = vand.u32 2147483647, %v1567
  %vm1578 = vcmp.eq.f32.partialorder %v1577, 8.507059e+37
  %v1579 = vand.u32 %v1567, 2147483648
  %v1580 = vor.u32 1.1754944e-38, %v1579
  %v1581 = vsel %vm1578, %v1580, %v1576
  %v1582 = vmul.f32 1.0, %v1581
  %v1583 = vmul.f32 %v1562, %v1447
  %v1584 = vmul.f32 %v1543, %v1563
  %v1585 = vadd.f32 %v1583, %v1584
  %v1586 = vtanh.pop %v1585
  %v1587 = vmul.f32 %v1582, %v1586
  %s1588 = sadd.f32 %s60, 9.0
  %v1589 = vstv %s1588
  %vm1590 = vcmp.gt.f32.partialorder %v58, %v1589
  %v1591 = vsel %vm1590, 1, 0
  %v1592 = vcvt.s32.f32 %v1591
  %1594 = vset.pattern.permute.xlu0 0
  %1595 = vperm.xlu0 %1594, %v1592
  %v1596 = vpop.permute.xlu0 %1595
  %v1598 = vmul.f32 %v1587, %v1596
  %s1599 = scalar_lea.vmem [#allocation4], 72
  %1600 = vst [vmem:[%s1599] sm:$0xff] %v1598
  %s1601 = scalar_lea.vmem %s0, 320
  %v1602 = vld [vmem:[%s1601] sm:$0xff]
  %v1603 = vld [vmem:[%s1601 + $0x8] sm:$0xff]
  %v1604 = vld [vmem:[%s1601 + $0x10] sm:$0xff]
  %v1605 = vld [vmem:[%s1601 + $0x18] sm:$0xff]
  %v1606 = vpack.c.bf16 %v1587, %v1587
  %1607 = vmatpush.bf16.msra.mxu0 %v192
  %1608 = vmatpush.bf16.msra.mxu0 %v188
  %1609 = vmatpush.bf16.msra.mxu0 %v184
  %1610 = vmatpush.bf16.msra.mxu0 %v180
  %1611 = vmatpush.bf16.msra.mxu0 %v176
  %1612 = vmatpush.bf16.msra.mxu0 %v172
  %1613 = vmatpush.bf16.msra.mxu0 %v168
  %1614 = vmatpush.bf16.msra.mxu0 %v164
  %1615 = vmatmul.bf16.gmra.mxu0 %v1606
  %v1616 = vpop.f32.mrf.mxu0
  %v1617 = vadd.f32 0.0, %v1616
  %v1618 = vpop.f32.mrf.mxu0
  %1619 = vdwg.mxu0
  %1620 = vmatpush.bf16.msra.mxu0 %v193
  %1621 = vmatpush.bf16.msra.mxu0 %v189
  %1622 = vmatpush.bf16.msra.mxu0 %v185
  %1623 = vmatpush.bf16.msra.mxu0 %v181
  %1624 = vmatpush.bf16.msra.mxu0 %v177
  %1625 = vmatpush.bf16.msra.mxu0 %v173
  %1626 = vmatpush.bf16.msra.mxu0 %v169
  %1627 = vmatpush.bf16.msra.mxu0 %v165
  %1628 = vmatmul.bf16.gmra.mxu0 %v1606
  %v1629 = vpop.f32.mrf.mxu0
  %v1630 = vadd.f32 0.0, %v1629
  %v1631 = vpop.f32.mrf.mxu0
  %1632 = vdwg.mxu0
  %1633 = vmatpush.bf16.msra.mxu0 %v194
  %1634 = vmatpush.bf16.msra.mxu0 %v190
  %1635 = vmatpush.bf16.msra.mxu0 %v186
  %1636 = vmatpush.bf16.msra.mxu0 %v182
  %1637 = vmatpush.bf16.msra.mxu0 %v178
  %1638 = vmatpush.bf16.msra.mxu0 %v174
  %1639 = vmatpush.bf16.msra.mxu0 %v170
  %1640 = vmatpush.bf16.msra.mxu0 %v166
  %1641 = vmatmul.bf16.gmra.mxu0 %v1606
  %v1642 = vpop.f32.mrf.mxu0
  %v1643 = vadd.f32 0.0, %v1642
  %v1644 = vpop.f32.mrf.mxu0
  %1645 = vdwg.mxu0
  %1646 = vmatpush.bf16.msra.mxu0 %v195
  %1647 = vmatpush.bf16.msra.mxu0 %v191
  %1648 = vmatpush.bf16.msra.mxu0 %v187
  %1649 = vmatpush.bf16.msra.mxu0 %v183
  %1650 = vmatpush.bf16.msra.mxu0 %v179
  %1651 = vmatpush.bf16.msra.mxu0 %v175
  %1652 = vmatpush.bf16.msra.mxu0 %v171
  %1653 = vmatpush.bf16.msra.mxu0 %v167
  %1654 = vmatmul.bf16.gmra.mxu0 %v1606
  %v1655 = vpop.f32.mrf.mxu0
  %v1656 = vadd.f32 0.0, %v1655
  %v1657 = vpop.f32.mrf.mxu0
  %1658 = vdwg.mxu0
  %v1659 = vadd.f32 %v1602, %v1617
  %v1660 = vadd.f32 %v1603, %v1630
  %v1661 = vadd.f32 %v1604, %v1643
  %v1662 = vadd.f32 %v1605, %v1656
  %v1663 = vxor.u32 %v1659, 2147483648
  %v1664 = vmul.f32 %v1663, 1.442695
  %v1665 = vpow.pop %v1664
  %v1666 = vadd.f32 %v1665, 1.0
  %v1667 = vrcp.pop %v1666
  %v1668 = vmul.f32 %v1666, %v1667
  %v1669 = vsub.f32 1.0, %v1668
  %v1670 = vmul.f32 %v1667, %v1669
  %v1671 = vadd.f32 %v1667, %v1670
  %vm1672 = vweird.f32 %v1666
  %vm1673 = vweird.f32 %v1667
  %vm1674 = vmor %vm1672, %vm1673
  %v1675 = vsel %vm1674, %v1667, %v1671
  %v1676 = vand.u32 2147483647, %v1666
  %vm1677 = vcmp.eq.f32.partialorder %v1676, 8.507059e+37
  %v1678 = vand.u32 %v1666, 2147483648
  %v1679 = vor.u32 1.1754944e-38, %v1678
  %v1680 = vsel %vm1677, %v1679, %v1675
  %v1681 = vmul.f32 1.0, %v1680
  %v1682 = vxor.u32 %v1660, 2147483648
  %v1683 = vmul.f32 %v1682, 1.442695
  %v1684 = vpow.pop %v1683
  %v1685 = vadd.f32 %v1684, 1.0
  %v1686 = vrcp.pop %v1685
  %v1687 = vmul.f32 %v1685, %v1686
  %v1688 = vsub.f32 1.0, %v1687
  %v1689 = vmul.f32 %v1686, %v1688
  %v1690 = vadd.f32 %v1686, %v1689
  %vm1691 = vweird.f32 %v1685
  %vm1692 = vweird.f32 %v1686
  %vm1693 = vmor %vm1691, %vm1692
  %v1694 = vsel %vm1693, %v1686, %v1690
  %v1695 = vand.u32 2147483647, %v1685
  %vm1696 = vcmp.eq.f32.partialorder %v1695, 8.507059e+37
  %v1697 = vand.u32 %v1685, 2147483648
  %v1698 = vor.u32 1.1754944e-38, %v1697
  %v1699 = vsel %vm1696, %v1698, %v1694
  %v1700 = vmul.f32 1.0, %v1699
  %v1701 = vtanh.pop %v1661
  %v1702 = vxor.u32 %v1662, 2147483648
  %v1703 = vmul.f32 %v1702, 1.442695
  %v1704 = vpow.pop %v1703
  %v1705 = vadd.f32 %v1704, 1.0
  %v1706 = vrcp.pop %v1705
  %v1707 = vmul.f32 %v1705, %v1706
  %v1708 = vsub.f32 1.0, %v1707
  %v1709 = vmul.f32 %v1706, %v1708
  %v1710 = vadd.f32 %v1706, %v1709
  %vm1711 = vweird.f32 %v1705
  %vm1712 = vweird.f32 %v1706
  %vm1713 = vmor %vm1711, %vm1712
  %v1714 = vsel %vm1713, %v1706, %v1710
  %v1715 = vand.u32 2147483647, %v1705
  %vm1716 = vcmp.eq.f32.partialorder %v1715, 8.507059e+37
  %v1717 = vand.u32 %v1705, 2147483648
  %v1718 = vor.u32 1.1754944e-38, %v1717
  %v1719 = vsel %vm1716, %v1718, %v1714
  %v1720 = vmul.f32 1.0, %v1719
  %v1721 = vmul.f32 %v1700, %v1585
  %v1722 = vmul.f32 %v1681, %v1701
  %v1723 = vadd.f32 %v1721, %v1722
  %v1724 = vtanh.pop %v1723
  %v1725 = vmul.f32 %v1720, %v1724
  %s1726 = sadd.f32 %s60, 10.0
  %v1727 = vstv %s1726
  %vm1728 = vcmp.gt.f32.partialorder %v58, %v1727
  %v1729 = vsel %vm1728, 1, 0
  %v1730 = vcvt.s32.f32 %v1729
  %1732 = vset.pattern.permute.xlu0 0
  %1733 = vperm.xlu0 %1732, %v1730
  %v1734 = vpop.permute.xlu0 %1733
  %v1736 = vmul.f32 %v1725, %v1734
  %s1737 = scalar_lea.vmem [#allocation4], 80
  %1738 = vst [vmem:[%s1737] sm:$0xff] %v1736
  %s1739 = scalar_lea.vmem %s0, 352
  %v1740 = vld [vmem:[%s1739] sm:$0xff]
  %v1741 = vld [vmem:[%s1739 + $0x8] sm:$0xff]
  %v1742 = vld [vmem:[%s1739 + $0x10] sm:$0xff]
  %v1743 = vld [vmem:[%s1739 + $0x18] sm:$0xff]
  %v1744 = vpack.c.bf16 %v1725, %v1725
  %1745 = vmatpush.bf16.msra.mxu0 %v192
  %1746 = vmatpush.bf16.msra.mxu0 %v188
  %1747 = vmatpush.bf16.msra.mxu0 %v184
  %1748 = vmatpush.bf16.msra.mxu0 %v180
  %1749 = vmatpush.bf16.msra.mxu0 %v176
  %1750 = vmatpush.bf16.msra.mxu0 %v172
  %1751 = vmatpush.bf16.msra.mxu0 %v168
  %1752 = vmatpush.bf16.msra.mxu0 %v164
  %1753 = vmatmul.bf16.gmra.mxu0 %v1744
  %v1754 = vpop.f32.mrf.mxu0
  %v1755 = vadd.f32 0.0, %v1754
  %v1756 = vpop.f32.mrf.mxu0
  %1757 = vdwg.mxu0
  %1758 = vmatpush.bf16.msra.mxu0 %v193
  %1759 = vmatpush.bf16.msra.mxu0 %v189
  %1760 = vmatpush.bf16.msra.mxu0 %v185
  %1761 = vmatpush.bf16.msra.mxu0 %v181
  %1762 = vmatpush.bf16.msra.mxu0 %v177
  %1763 = vmatpush.bf16.msra.mxu0 %v173
  %1764 = vmatpush.bf16.msra.mxu0 %v169
  %1765 = vmatpush.bf16.msra.mxu0 %v165
  %1766 = vmatmul.bf16.gmra.mxu0 %v1744
  %v1767 = vpop.f32.mrf.mxu0
  %v1768 = vadd.f32 0.0, %v1767
  %v1769 = vpop.f32.mrf.mxu0
  %1770 = vdwg.mxu0
  %1771 = vmatpush.bf16.msra.mxu0 %v194
  %1772 = vmatpush.bf16.msra.mxu0 %v190
  %1773 = vmatpush.bf16.msra.mxu0 %v186
  %1774 = vmatpush.bf16.msra.mxu0 %v182
  %1775 = vmatpush.bf16.msra.mxu0 %v178
  %1776 = vmatpush.bf16.msra.mxu0 %v174
  %1777 = vmatpush.bf16.msra.mxu0 %v170
  %1778 = vmatpush.bf16.msra.mxu0 %v166
  %1779 = vmatmul.bf16.gmra.mxu0 %v1744
  %v1780 = vpop.f32.mrf.mxu0
  %v1781 = vadd.f32 0.0, %v1780
  %v1782 = vpop.f32.mrf.mxu0
  %1783 = vdwg.mxu0
  %1784 = vmatpush.bf16.msra.mxu0 %v195
  %1785 = vmatpush.bf16.msra.mxu0 %v191
  %1786 = vmatpush.bf16.msra.mxu0 %v187
  %1787 = vmatpush.bf16.msra.mxu0 %v183
  %1788 = vmatpush.bf16.msra.mxu0 %v179
  %1789 = vmatpush.bf16.msra.mxu0 %v175
  %1790 = vmatpush.bf16.msra.mxu0 %v171
  %1791 = vmatpush.bf16.msra.mxu0 %v167
  %1792 = vmatmul.bf16.gmra.mxu0 %v1744
  %v1793 = vpop.f32.mrf.mxu0
  %v1794 = vadd.f32 0.0, %v1793
  %v1795 = vpop.f32.mrf.mxu0
  %1796 = vdwg.mxu0
  %v1797 = vadd.f32 %v1740, %v1755
  %v1798 = vadd.f32 %v1741, %v1768
  %v1799 = vadd.f32 %v1742, %v1781
  %v1800 = vadd.f32 %v1743, %v1794
  %v1801 = vxor.u32 %v1797, 2147483648
  %v1802 = vmul.f32 %v1801, 1.442695
  %v1803 = vpow.pop %v1802
  %v1804 = vadd.f32 %v1803, 1.0
  %v1805 = vrcp.pop %v1804
  %v1806 = vmul.f32 %v1804, %v1805
  %v1807 = vsub.f32 1.0, %v1806
  %v1808 = vmul.f32 %v1805, %v1807
  %v1809 = vadd.f32 %v1805, %v1808
  %vm1810 = vweird.f32 %v1804
  %vm1811 = vweird.f32 %v1805
  %vm1812 = vmor %vm1810, %vm1811
  %v1813 = vsel %vm1812, %v1805, %v1809
  %v1814 = vand.u32 2147483647, %v1804
  %vm1815 = vcmp.eq.f32.partialorder %v1814, 8.507059e+37
  %v1816 = vand.u32 %v1804, 2147483648
  %v1817 = vor.u32 1.1754944e-38, %v1816
  %v1818 = vsel %vm1815, %v1817, %v1813
  %v1819 = vmul.f32 1.0, %v1818
  %v1820 = vxor.u32 %v1798, 2147483648
  %v1821 = vmul.f32 %v1820, 1.442695
  %v1822 = vpow.pop %v1821
  %v1823 = vadd.f32 %v1822, 1.0
  %v1824 = vrcp.pop %v1823
  %v1825 = vmul.f32 %v1823, %v1824
  %v1826 = vsub.f32 1.0, %v1825
  %v1827 = vmul.f32 %v1824, %v1826
  %v1828 = vadd.f32 %v1824, %v1827
  %vm1829 = vweird.f32 %v1823
  %vm1830 = vweird.f32 %v1824
  %vm1831 = vmor %vm1829, %vm1830
  %v1832 = vsel %vm1831, %v1824, %v1828
  %v1833 = vand.u32 2147483647, %v1823
  %vm1834 = vcmp.eq.f32.partialorder %v1833, 8.507059e+37
  %v1835 = vand.u32 %v1823, 2147483648
  %v1836 = vor.u32 1.1754944e-38, %v1835
  %v1837 = vsel %vm1834, %v1836, %v1832
  %v1838 = vmul.f32 1.0, %v1837
  %v1839 = vtanh.pop %v1799
  %v1840 = vxor.u32 %v1800, 2147483648
  %v1841 = vmul.f32 %v1840, 1.442695
  %v1842 = vpow.pop %v1841
  %v1843 = vadd.f32 %v1842, 1.0
  %v1844 = vrcp.pop %v1843
  %v1845 = vmul.f32 %v1843, %v1844
  %v1846 = vsub.f32 1.0, %v1845
  %v1847 = vmul.f32 %v1844, %v1846
  %v1848 = vadd.f32 %v1844, %v1847
  %vm1849 = vweird.f32 %v1843
  %vm1850 = vweird.f32 %v1844
  %vm1851 = vmor %vm1849, %vm1850
  %v1852 = vsel %vm1851, %v1844, %v1848
  %v1853 = vand.u32 2147483647, %v1843
  %vm1854 = vcmp.eq.f32.partialorder %v1853, 8.507059e+37
  %v1855 = vand.u32 %v1843, 2147483648
  %v1856 = vor.u32 1.1754944e-38, %v1855
  %v1857 = vsel %vm1854, %v1856, %v1852
  %v1858 = vmul.f32 1.0, %v1857
  %v1859 = vmul.f32 %v1838, %v1723
  %v1860 = vmul.f32 %v1819, %v1839
  %v1861 = vadd.f32 %v1859, %v1860
  %v1862 = vtanh.pop %v1861
  %v1863 = vmul.f32 %v1858, %v1862
  %s1864 = sadd.f32 %s60, 11.0
  %v1865 = vstv %s1864
  %vm1866 = vcmp.gt.f32.partialorder %v58, %v1865
  %v1867 = vsel %vm1866, 1, 0
  %v1868 = vcvt.s32.f32 %v1867
  %1870 = vset.pattern.permute.xlu0 0
  %1871 = vperm.xlu0 %1870, %v1868
  %v1872 = vpop.permute.xlu0 %1871
  %v1874 = vmul.f32 %v1863, %v1872
  %s1875 = scalar_lea.vmem [#allocation4], 88
  %1876 = vst [vmem:[%s1875] sm:$0xff] %v1874
  %s1877 = scalar_lea.vmem %s0, 384
  %v1878 = vld [vmem:[%s1877] sm:$0xff]
  %v1879 = vld [vmem:[%s1877 + $0x8] sm:$0xff]
  %v1880 = vld [vmem:[%s1877 + $0x10] sm:$0xff]
  %v1881 = vld [vmem:[%s1877 + $0x18] sm:$0xff]
  %v1882 = vpack.c.bf16 %v1863, %v1863
  %1883 = vmatpush.bf16.msra.mxu0 %v192
  %1884 = vmatpush.bf16.msra.mxu0 %v188
  %1885 = vmatpush.bf16.msra.mxu0 %v184
  %1886 = vmatpush.bf16.msra.mxu0 %v180
  %1887 = vmatpush.bf16.msra.mxu0 %v176
  %1888 = vmatpush.bf16.msra.mxu0 %v172
  %1889 = vmatpush.bf16.msra.mxu0 %v168
  %1890 = vmatpush.bf16.msra.mxu0 %v164
  %1891 = vmatmul.bf16.gmra.mxu0 %v1882
  %v1892 = vpop.f32.mrf.mxu0
  %v1893 = vadd.f32 0.0, %v1892
  %v1894 = vpop.f32.mrf.mxu0
  %1895 = vdwg.mxu0
  %1896 = vmatpush.bf16.msra.mxu0 %v193
  %1897 = vmatpush.bf16.msra.mxu0 %v189
  %1898 = vmatpush.bf16.msra.mxu0 %v185
  %1899 = vmatpush.bf16.msra.mxu0 %v181
  %1900 = vmatpush.bf16.msra.mxu0 %v177
  %1901 = vmatpush.bf16.msra.mxu0 %v173
  %1902 = vmatpush.bf16.msra.mxu0 %v169
  %1903 = vmatpush.bf16.msra.mxu0 %v165
  %1904 = vmatmul.bf16.gmra.mxu0 %v1882
  %v1905 = vpop.f32.mrf.mxu0
  %v1906 = vadd.f32 0.0, %v1905
  %v1907 = vpop.f32.mrf.mxu0
  %1908 = vdwg.mxu0
  %1909 = vmatpush.bf16.msra.mxu0 %v194
  %1910 = vmatpush.bf16.msra.mxu0 %v190
  %1911 = vmatpush.bf16.msra.mxu0 %v186
  %1912 = vmatpush.bf16.msra.mxu0 %v182
  %1913 = vmatpush.bf16.msra.mxu0 %v178
  %1914 = vmatpush.bf16.msra.mxu0 %v174
  %1915 = vmatpush.bf16.msra.mxu0 %v170
  %1916 = vmatpush.bf16.msra.mxu0 %v166
  %1917 = vmatmul.bf16.gmra.mxu0 %v1882
  %v1918 = vpop.f32.mrf.mxu0
  %v1919 = vadd.f32 0.0, %v1918
  %v1920 = vpop.f32.mrf.mxu0
  %1921 = vdwg.mxu0
  %1922 = vmatpush.bf16.msra.mxu0 %v195
  %1923 = vmatpush.bf16.msra.mxu0 %v191
  %1924 = vmatpush.bf16.msra.mxu0 %v187
  %1925 = vmatpush.bf16.msra.mxu0 %v183
  %1926 = vmatpush.bf16.msra.mxu0 %v179
  %1927 = vmatpush.bf16.msra.mxu0 %v175
  %1928 = vmatpush.bf16.msra.mxu0 %v171
  %1929 = vmatpush.bf16.msra.mxu0 %v167
  %1930 = vmatmul.bf16.gmra.mxu0 %v1882
  %v1931 = vpop.f32.mrf.mxu0
  %v1932 = vadd.f32 0.0, %v1931
  %v1933 = vpop.f32.mrf.mxu0
  %1934 = vdwg.mxu0
  %v1935 = vadd.f32 %v1878, %v1893
  %v1936 = vadd.f32 %v1879, %v1906
  %v1937 = vadd.f32 %v1880, %v1919
  %v1938 = vadd.f32 %v1881, %v1932
  %v1939 = vxor.u32 %v1935, 2147483648
  %v1940 = vmul.f32 %v1939, 1.442695
  %v1941 = vpow.pop %v1940
  %v1942 = vadd.f32 %v1941, 1.0
  %v1943 = vrcp.pop %v1942
  %v1944 = vmul.f32 %v1942, %v1943
  %v1945 = vsub.f32 1.0, %v1944
  %v1946 = vmul.f32 %v1943, %v1945
  %v1947 = vadd.f32 %v1943, %v1946
  %vm1948 = vweird.f32 %v1942
  %vm1949 = vweird.f32 %v1943
  %vm1950 = vmor %vm1948, %vm1949
  %v1951 = vsel %vm1950, %v1943, %v1947
  %v1952 = vand.u32 2147483647, %v1942
  %vm1953 = vcmp.eq.f32.partialorder %v1952, 8.507059e+37
  %v1954 = vand.u32 %v1942, 2147483648
  %v1955 = vor.u32 1.1754944e-38, %v1954
  %v1956 = vsel %vm1953, %v1955, %v1951
  %v1957 = vmul.f32 1.0, %v1956
  %v1958 = vxor.u32 %v1936, 2147483648
  %v1959 = vmul.f32 %v1958, 1.442695
  %v1960 = vpow.pop %v1959
  %v1961 = vadd.f32 %v1960, 1.0
  %v1962 = vrcp.pop %v1961
  %v1963 = vmul.f32 %v1961, %v1962
  %v1964 = vsub.f32 1.0, %v1963
  %v1965 = vmul.f32 %v1962, %v1964
  %v1966 = vadd.f32 %v1962, %v1965
  %vm1967 = vweird.f32 %v1961
  %vm1968 = vweird.f32 %v1962
  %vm1969 = vmor %vm1967, %vm1968
  %v1970 = vsel %vm1969, %v1962, %v1966
  %v1971 = vand.u32 2147483647, %v1961
  %vm1972 = vcmp.eq.f32.partialorder %v1971, 8.507059e+37
  %v1973 = vand.u32 %v1961, 2147483648
  %v1974 = vor.u32 1.1754944e-38, %v1973
  %v1975 = vsel %vm1972, %v1974, %v1970
  %v1976 = vmul.f32 1.0, %v1975
  %v1977 = vtanh.pop %v1937
  %v1978 = vxor.u32 %v1938, 2147483648
  %v1979 = vmul.f32 %v1978, 1.442695
  %v1980 = vpow.pop %v1979
  %v1981 = vadd.f32 %v1980, 1.0
  %v1982 = vrcp.pop %v1981
  %v1983 = vmul.f32 %v1981, %v1982
  %v1984 = vsub.f32 1.0, %v1983
  %v1985 = vmul.f32 %v1982, %v1984
  %v1986 = vadd.f32 %v1982, %v1985
  %vm1987 = vweird.f32 %v1981
  %vm1988 = vweird.f32 %v1982
  %vm1989 = vmor %vm1987, %vm1988
  %v1990 = vsel %vm1989, %v1982, %v1986
  %v1991 = vand.u32 2147483647, %v1981
  %vm1992 = vcmp.eq.f32.partialorder %v1991, 8.507059e+37
  %v1993 = vand.u32 %v1981, 2147483648
  %v1994 = vor.u32 1.1754944e-38, %v1993
  %v1995 = vsel %vm1992, %v1994, %v1990
  %v1996 = vmul.f32 1.0, %v1995
  %v1997 = vmul.f32 %v1976, %v1861
  %v1998 = vmul.f32 %v1957, %v1977
  %v1999 = vadd.f32 %v1997, %v1998
  %v2000 = vtanh.pop %v1999
  %v2001 = vmul.f32 %v1996, %v2000
  %s2002 = sadd.f32 %s60, 12.0
  %v2003 = vstv %s2002
  %vm2004 = vcmp.gt.f32.partialorder %v58, %v2003
  %v2005 = vsel %vm2004, 1, 0
  %v2006 = vcvt.s32.f32 %v2005
  %2008 = vset.pattern.permute.xlu0 0
  %2009 = vperm.xlu0 %2008, %v2006
  %v2010 = vpop.permute.xlu0 %2009
  %v2012 = vmul.f32 %v2001, %v2010
  %s2013 = scalar_lea.vmem [#allocation4], 96
  %2014 = vst [vmem:[%s2013] sm:$0xff] %v2012
  %s2015 = scalar_lea.vmem %s0, 416
  %v2016 = vld [vmem:[%s2015] sm:$0xff]
  %v2017 = vld [vmem:[%s2015 + $0x8] sm:$0xff]
  %v2018 = vld [vmem:[%s2015 + $0x10] sm:$0xff]
  %v2019 = vld [vmem:[%s2015 + $0x18] sm:$0xff]
  %v2020 = vpack.c.bf16 %v2001, %v2001
  %2021 = vmatpush.bf16.msra.mxu0 %v192
  %2022 = vmatpush.bf16.msra.mxu0 %v188
  %2023 = vmatpush.bf16.msra.mxu0 %v184
  %2024 = vmatpush.bf16.msra.mxu0 %v180
  %2025 = vmatpush.bf16.msra.mxu0 %v176
  %2026 = vmatpush.bf16.msra.mxu0 %v172
  %2027 = vmatpush.bf16.msra.mxu0 %v168
  %2028 = vmatpush.bf16.msra.mxu0 %v164
  %2029 = vmatmul.bf16.gmra.mxu0 %v2020
  %v2030 = vpop.f32.mrf.mxu0
  %v2031 = vadd.f32 0.0, %v2030
  %v2032 = vpop.f32.mrf.mxu0
  %2033 = vdwg.mxu0
  %2034 = vmatpush.bf16.msra.mxu0 %v193
  %2035 = vmatpush.bf16.msra.mxu0 %v189
  %2036 = vmatpush.bf16.msra.mxu0 %v185
  %2037 = vmatpush.bf16.msra.mxu0 %v181
  %2038 = vmatpush.bf16.msra.mxu0 %v177
  %2039 = vmatpush.bf16.msra.mxu0 %v173
  %2040 = vmatpush.bf16.msra.mxu0 %v169
  %2041 = vmatpush.bf16.msra.mxu0 %v165
  %2042 = vmatmul.bf16.gmra.mxu0 %v2020
  %v2043 = vpop.f32.mrf.mxu0
  %v2044 = vadd.f32 0.0, %v2043
  %v2045 = vpop.f32.mrf.mxu0
  %2046 = vdwg.mxu0
  %2047 = vmatpush.bf16.msra.mxu0 %v194
  %2048 = vmatpush.bf16.msra.mxu0 %v190
  %2049 = vmatpush.bf16.msra.mxu0 %v186
  %2050 = vmatpush.bf16.msra.mxu0 %v182
  %2051 = vmatpush.bf16.msra.mxu0 %v178
  %2052 = vmatpush.bf16.msra.mxu0 %v174
  %2053 = vmatpush.bf16.msra.mxu0 %v170
  %2054 = vmatpush.bf16.msra.mxu0 %v166
  %2055 = vmatmul.bf16.gmra.mxu0 %v2020
  %v2056 = vpop.f32.mrf.mxu0
  %v2057 = vadd.f32 0.0, %v2056
  %v2058 = vpop.f32.mrf.mxu0
  %2059 = vdwg.mxu0
  %2060 = vmatpush.bf16.msra.mxu0 %v195
  %2061 = vmatpush.bf16.msra.mxu0 %v191
  %2062 = vmatpush.bf16.msra.mxu0 %v187
  %2063 = vmatpush.bf16.msra.mxu0 %v183
  %2064 = vmatpush.bf16.msra.mxu0 %v179
  %2065 = vmatpush.bf16.msra.mxu0 %v175
  %2066 = vmatpush.bf16.msra.mxu0 %v171
  %2067 = vmatpush.bf16.msra.mxu0 %v167
  %2068 = vmatmul.bf16.gmra.mxu0 %v2020
  %v2069 = vpop.f32.mrf.mxu0
  %v2070 = vadd.f32 0.0, %v2069
  %v2071 = vpop.f32.mrf.mxu0
  %2072 = vdwg.mxu0
  %v2073 = vadd.f32 %v2016, %v2031
  %v2074 = vadd.f32 %v2017, %v2044
  %v2075 = vadd.f32 %v2018, %v2057
  %v2076 = vadd.f32 %v2019, %v2070
  %v2077 = vxor.u32 %v2073, 2147483648
  %v2078 = vmul.f32 %v2077, 1.442695
  %v2079 = vpow.pop %v2078
  %v2080 = vadd.f32 %v2079, 1.0
  %v2081 = vrcp.pop %v2080
  %v2082 = vmul.f32 %v2080, %v2081
  %v2083 = vsub.f32 1.0, %v2082
  %v2084 = vmul.f32 %v2081, %v2083
  %v2085 = vadd.f32 %v2081, %v2084
  %vm2086 = vweird.f32 %v2080
  %vm2087 = vweird.f32 %v2081
  %vm2088 = vmor %vm2086, %vm2087
  %v2089 = vsel %vm2088, %v2081, %v2085
  %v2090 = vand.u32 2147483647, %v2080
  %vm2091 = vcmp.eq.f32.partialorder %v2090, 8.507059e+37
  %v2092 = vand.u32 %v2080, 2147483648
  %v2093 = vor.u32 1.1754944e-38, %v2092
  %v2094 = vsel %vm2091, %v2093, %v2089
  %v2095 = vmul.f32 1.0, %v2094
  %v2096 = vxor.u32 %v2074, 2147483648
  %v2097 = vmul.f32 %v2096, 1.442695
  %v2098 = vpow.pop %v2097
  %v2099 = vadd.f32 %v2098, 1.0
  %v2100 = vrcp.pop %v2099
  %v2101 = vmul.f32 %v2099, %v2100
  %v2102 = vsub.f32 1.0, %v2101
  %v2103 = vmul.f32 %v2100, %v2102
  %v2104 = vadd.f32 %v2100, %v2103
  %vm2105 = vweird.f32 %v2099
  %vm2106 = vweird.f32 %v2100
  %vm2107 = vmor %vm2105, %vm2106
  %v2108 = vsel %vm2107, %v2100, %v2104
  %v2109 = vand.u32 2147483647, %v2099
  %vm2110 = vcmp.eq.f32.partialorder %v2109, 8.507059e+37
  %v2111 = vand.u32 %v2099, 2147483648
  %v2112 = vor.u32 1.1754944e-38, %v2111
  %v2113 = vsel %vm2110, %v2112, %v2108
  %v2114 = vmul.f32 1.0, %v2113
  %v2115 = vtanh.pop %v2075
  %v2116 = vxor.u32 %v2076, 2147483648
  %v2117 = vmul.f32 %v2116, 1.442695
  %v2118 = vpow.pop %v2117
  %v2119 = vadd.f32 %v2118, 1.0
  %v2120 = vrcp.pop %v2119
  %v2121 = vmul.f32 %v2119, %v2120
  %v2122 = vsub.f32 1.0, %v2121
  %v2123 = vmul.f32 %v2120, %v2122
  %v2124 = vadd.f32 %v2120, %v2123
  %vm2125 = vweird.f32 %v2119
  %vm2126 = vweird.f32 %v2120
  %vm2127 = vmor %vm2125, %vm2126
  %v2128 = vsel %vm2127, %v2120, %v2124
  %v2129 = vand.u32 2147483647, %v2119
  %vm2130 = vcmp.eq.f32.partialorder %v2129, 8.507059e+37
  %v2131 = vand.u32 %v2119, 2147483648
  %v2132 = vor.u32 1.1754944e-38, %v2131
  %v2133 = vsel %vm2130, %v2132, %v2128
  %v2134 = vmul.f32 1.0, %v2133
  %v2135 = vmul.f32 %v2114, %v1999
  %v2136 = vmul.f32 %v2095, %v2115
  %v2137 = vadd.f32 %v2135, %v2136
  %v2138 = vtanh.pop %v2137
  %v2139 = vmul.f32 %v2134, %v2138
  %s2140 = sadd.f32 %s60, 13.0
  %v2141 = vstv %s2140
  %vm2142 = vcmp.gt.f32.partialorder %v58, %v2141
  %v2143 = vsel %vm2142, 1, 0
  %v2144 = vcvt.s32.f32 %v2143
  %2146 = vset.pattern.permute.xlu0 0
  %2147 = vperm.xlu0 %2146, %v2144
  %v2148 = vpop.permute.xlu0 %2147
  %v2150 = vmul.f32 %v2139, %v2148
  %s2151 = scalar_lea.vmem [#allocation4], 104
  %2152 = vst [vmem:[%s2151] sm:$0xff] %v2150
  %s2153 = scalar_lea.vmem %s0, 448
  %v2154 = vld [vmem:[%s2153] sm:$0xff]
  %v2155 = vld [vmem:[%s2153 + $0x8] sm:$0xff]
  %v2156 = vld [vmem:[%s2153 + $0x10] sm:$0xff]
  %v2157 = vld [vmem:[%s2153 + $0x18] sm:$0xff]
  %v2158 = vpack.c.bf16 %v2139, %v2139
  %2159 = vmatpush.bf16.msra.mxu0 %v192
  %2160 = vmatpush.bf16.msra.mxu0 %v188
  %2161 = vmatpush.bf16.msra.mxu0 %v184
  %2162 = vmatpush.bf16.msra.mxu0 %v180
  %2163 = vmatpush.bf16.msra.mxu0 %v176
  %2164 = vmatpush.bf16.msra.mxu0 %v172
  %2165 = vmatpush.bf16.msra.mxu0 %v168
  %2166 = vmatpush.bf16.msra.mxu0 %v164
  %2167 = vmatmul.bf16.gmra.mxu0 %v2158
  %v2168 = vpop.f32.mrf.mxu0
  %v2169 = vadd.f32 0.0, %v2168
  %v2170 = vpop.f32.mrf.mxu0
  %2171 = vdwg.mxu0
  %2172 = vmatpush.bf16.msra.mxu0 %v193
  %2173 = vmatpush.bf16.msra.mxu0 %v189
  %2174 = vmatpush.bf16.msra.mxu0 %v185
  %2175 = vmatpush.bf16.msra.mxu0 %v181
  %2176 = vmatpush.bf16.msra.mxu0 %v177
  %2177 = vmatpush.bf16.msra.mxu0 %v173
  %2178 = vmatpush.bf16.msra.mxu0 %v169
  %2179 = vmatpush.bf16.msra.mxu0 %v165
  %2180 = vmatmul.bf16.gmra.mxu0 %v2158
  %v2181 = vpop.f32.mrf.mxu0
  %v2182 = vadd.f32 0.0, %v2181
  %v2183 = vpop.f32.mrf.mxu0
  %2184 = vdwg.mxu0
  %2185 = vmatpush.bf16.msra.mxu0 %v194
  %2186 = vmatpush.bf16.msra.mxu0 %v190
  %2187 = vmatpush.bf16.msra.mxu0 %v186
  %2188 = vmatpush.bf16.msra.mxu0 %v182
  %2189 = vmatpush.bf16.msra.mxu0 %v178
  %2190 = vmatpush.bf16.msra.mxu0 %v174
  %2191 = vmatpush.bf16.msra.mxu0 %v170
  %2192 = vmatpush.bf16.msra.mxu0 %v166
  %2193 = vmatmul.bf16.gmra.mxu0 %v2158
  %v2194 = vpop.f32.mrf.mxu0
  %v2195 = vadd.f32 0.0, %v2194
  %v2196 = vpop.f32.mrf.mxu0
  %2197 = vdwg.mxu0
  %2198 = vmatpush.bf16.msra.mxu0 %v195
  %2199 = vmatpush.bf16.msra.mxu0 %v191
  %2200 = vmatpush.bf16.msra.mxu0 %v187
  %2201 = vmatpush.bf16.msra.mxu0 %v183
  %2202 = vmatpush.bf16.msra.mxu0 %v179
  %2203 = vmatpush.bf16.msra.mxu0 %v175
  %2204 = vmatpush.bf16.msra.mxu0 %v171
  %2205 = vmatpush.bf16.msra.mxu0 %v167
  %2206 = vmatmul.bf16.gmra.mxu0 %v2158
  %v2207 = vpop.f32.mrf.mxu0
  %v2208 = vadd.f32 0.0, %v2207
  %v2209 = vpop.f32.mrf.mxu0
  %2210 = vdwg.mxu0
  %v2211 = vadd.f32 %v2154, %v2169
  %v2212 = vadd.f32 %v2155, %v2182
  %v2213 = vadd.f32 %v2156, %v2195
  %v2214 = vadd.f32 %v2157, %v2208
  %v2215 = vxor.u32 %v2211, 2147483648
  %v2216 = vmul.f32 %v2215, 1.442695
  %v2217 = vpow.pop %v2216
  %v2218 = vadd.f32 %v2217, 1.0
  %v2219 = vrcp.pop %v2218
  %v2220 = vmul.f32 %v2218, %v2219
  %v2221 = vsub.f32 1.0, %v2220
  %v2222 = vmul.f32 %v2219, %v2221
  %v2223 = vadd.f32 %v2219, %v2222
  %vm2224 = vweird.f32 %v2218
  %vm2225 = vweird.f32 %v2219
  %vm2226 = vmor %vm2224, %vm2225
  %v2227 = vsel %vm2226, %v2219, %v2223
  %v2228 = vand.u32 2147483647, %v2218
  %vm2229 = vcmp.eq.f32.partialorder %v2228, 8.507059e+37
  %v2230 = vand.u32 %v2218, 2147483648
  %v2231 = vor.u32 1.1754944e-38, %v2230
  %v2232 = vsel %vm2229, %v2231, %v2227
  %v2233 = vmul.f32 1.0, %v2232
  %v2234 = vxor.u32 %v2212, 2147483648
  %v2235 = vmul.f32 %v2234, 1.442695
  %v2236 = vpow.pop %v2235
  %v2237 = vadd.f32 %v2236, 1.0
  %v2238 = vrcp.pop %v2237
  %v2239 = vmul.f32 %v2237, %v2238
  %v2240 = vsub.f32 1.0, %v2239
  %v2241 = vmul.f32 %v2238, %v2240
  %v2242 = vadd.f32 %v2238, %v2241
  %vm2243 = vweird.f32 %v2237
  %vm2244 = vweird.f32 %v2238
  %vm2245 = vmor %vm2243, %vm2244
  %v2246 = vsel %vm2245, %v2238, %v2242
  %v2247 = vand.u32 2147483647, %v2237
  %vm2248 = vcmp.eq.f32.partialorder %v2247, 8.507059e+37
  %v2249 = vand.u32 %v2237, 2147483648
  %v2250 = vor.u32 1.1754944e-38, %v2249
  %v2251 = vsel %vm2248, %v2250, %v2246
  %v2252 = vmul.f32 1.0, %v2251
  %v2253 = vtanh.pop %v2213
  %v2254 = vxor.u32 %v2214, 2147483648
  %v2255 = vmul.f32 %v2254, 1.442695
  %v2256 = vpow.pop %v2255
  %v2257 = vadd.f32 %v2256, 1.0
  %v2258 = vrcp.pop %v2257
  %v2259 = vmul.f32 %v2257, %v2258
  %v2260 = vsub.f32 1.0, %v2259
  %v2261 = vmul.f32 %v2258, %v2260
  %v2262 = vadd.f32 %v2258, %v2261
  %vm2263 = vweird.f32 %v2257
  %vm2264 = vweird.f32 %v2258
  %vm2265 = vmor %vm2263, %vm2264
  %v2266 = vsel %vm2265, %v2258, %v2262
  %v2267 = vand.u32 2147483647, %v2257
  %vm2268 = vcmp.eq.f32.partialorder %v2267, 8.507059e+37
  %v2269 = vand.u32 %v2257, 2147483648
  %v2270 = vor.u32 1.1754944e-38, %v2269
  %v2271 = vsel %vm2268, %v2270, %v2266
  %v2272 = vmul.f32 1.0, %v2271
  %v2273 = vmul.f32 %v2252, %v2137
  %v2274 = vmul.f32 %v2233, %v2253
  %v2275 = vadd.f32 %v2273, %v2274
  %v2276 = vtanh.pop %v2275
  %v2277 = vmul.f32 %v2272, %v2276
  %s2278 = sadd.f32 %s60, 14.0
  %v2279 = vstv %s2278
  %vm2280 = vcmp.gt.f32.partialorder %v58, %v2279
  %v2281 = vsel %vm2280, 1, 0
  %v2282 = vcvt.s32.f32 %v2281
  %2284 = vset.pattern.permute.xlu0 0
  %2285 = vperm.xlu0 %2284, %v2282
  %v2286 = vpop.permute.xlu0 %2285
  %v2288 = vmul.f32 %v2277, %v2286
  %s2289 = scalar_lea.vmem [#allocation4], 112
  %2290 = vst [vmem:[%s2289] sm:$0xff] %v2288
  %s2291 = scalar_lea.vmem %s0, 480
  %v2292 = vld [vmem:[%s2291] sm:$0xff]
  %v2293 = vld [vmem:[%s2291 + $0x8] sm:$0xff]
  %v2294 = vld [vmem:[%s2291 + $0x10] sm:$0xff]
  %v2295 = vld [vmem:[%s2291 + $0x18] sm:$0xff]
  %v2296 = vpack.c.bf16 %v2277, %v2277
  %2297 = vmatpush.bf16.msra.mxu0 %v192
  %2298 = vmatpush.bf16.msra.mxu0 %v188
  %2299 = vmatpush.bf16.msra.mxu0 %v184
  %2300 = vmatpush.bf16.msra.mxu0 %v180
  %2301 = vmatpush.bf16.msra.mxu0 %v176
  %2302 = vmatpush.bf16.msra.mxu0 %v172
  %2303 = vmatpush.bf16.msra.mxu0 %v168
  %2304 = vmatpush.bf16.msra.mxu0 %v164
  %2305 = vmatmul.bf16.gmra.mxu0 %v2296
  %v2306 = vpop.f32.mrf.mxu0
  %v2307 = vadd.f32 0.0, %v2306
  %v2308 = vpop.f32.mrf.mxu0
  %2309 = vdwg.mxu0
  %2310 = vmatpush.bf16.msra.mxu0 %v193
  %2311 = vmatpush.bf16.msra.mxu0 %v189
  %2312 = vmatpush.bf16.msra.mxu0 %v185
  %2313 = vmatpush.bf16.msra.mxu0 %v181
  %2314 = vmatpush.bf16.msra.mxu0 %v177
  %2315 = vmatpush.bf16.msra.mxu0 %v173
  %2316 = vmatpush.bf16.msra.mxu0 %v169
  %2317 = vmatpush.bf16.msra.mxu0 %v165
  %2318 = vmatmul.bf16.gmra.mxu0 %v2296
  %v2319 = vpop.f32.mrf.mxu0
  %v2320 = vadd.f32 0.0, %v2319
  %v2321 = vpop.f32.mrf.mxu0
  %2322 = vdwg.mxu0
  %2323 = vmatpush.bf16.msra.mxu0 %v194
  %2324 = vmatpush.bf16.msra.mxu0 %v190
  %2325 = vmatpush.bf16.msra.mxu0 %v186
  %2326 = vmatpush.bf16.msra.mxu0 %v182
  %2327 = vmatpush.bf16.msra.mxu0 %v178
  %2328 = vmatpush.bf16.msra.mxu0 %v174
  %2329 = vmatpush.bf16.msra.mxu0 %v170
  %2330 = vmatpush.bf16.msra.mxu0 %v166
  %2331 = vmatmul.bf16.gmra.mxu0 %v2296
  %v2332 = vpop.f32.mrf.mxu0
  %v2333 = vadd.f32 0.0, %v2332
  %v2334 = vpop.f32.mrf.mxu0
  %2335 = vdwg.mxu0
  %2336 = vmatpush.bf16.msra.mxu0 %v195
  %2337 = vmatpush.bf16.msra.mxu0 %v191
  %2338 = vmatpush.bf16.msra.mxu0 %v187
  %2339 = vmatpush.bf16.msra.mxu0 %v183
  %2340 = vmatpush.bf16.msra.mxu0 %v179
  %2341 = vmatpush.bf16.msra.mxu0 %v175
  %2342 = vmatpush.bf16.msra.mxu0 %v171
  %2343 = vmatpush.bf16.msra.mxu0 %v167
  %2344 = vmatmul.bf16.gmra.mxu0 %v2296
  %v2345 = vpop.f32.mrf.mxu0
  %v2346 = vadd.f32 0.0, %v2345
  %v2347 = vpop.f32.mrf.mxu0
  %2348 = vdwg.mxu0
  %v2349 = vadd.f32 %v2292, %v2307
  %v2350 = vadd.f32 %v2293, %v2320
  %v2351 = vadd.f32 %v2294, %v2333
  %v2352 = vadd.f32 %v2295, %v2346
  %v2353 = vxor.u32 %v2349, 2147483648
  %v2354 = vmul.f32 %v2353, 1.442695
  %v2355 = vpow.pop %v2354
  %v2356 = vadd.f32 %v2355, 1.0
  %v2357 = vrcp.pop %v2356
  %v2358 = vmul.f32 %v2356, %v2357
  %v2359 = vsub.f32 1.0, %v2358
  %v2360 = vmul.f32 %v2357, %v2359
  %v2361 = vadd.f32 %v2357, %v2360
  %vm2362 = vweird.f32 %v2356
  %vm2363 = vweird.f32 %v2357
  %vm2364 = vmor %vm2362, %vm2363
  %v2365 = vsel %vm2364, %v2357, %v2361
  %v2366 = vand.u32 2147483647, %v2356
  %vm2367 = vcmp.eq.f32.partialorder %v2366, 8.507059e+37
  %v2368 = vand.u32 %v2356, 2147483648
  %v2369 = vor.u32 1.1754944e-38, %v2368
  %v2370 = vsel %vm2367, %v2369, %v2365
  %v2371 = vmul.f32 1.0, %v2370
  %v2372 = vxor.u32 %v2350, 2147483648
  %v2373 = vmul.f32 %v2372, 1.442695
  %v2374 = vpow.pop %v2373
  %v2375 = vadd.f32 %v2374, 1.0
  %v2376 = vrcp.pop %v2375
  %v2377 = vmul.f32 %v2375, %v2376
  %v2378 = vsub.f32 1.0, %v2377
  %v2379 = vmul.f32 %v2376, %v2378
  %v2380 = vadd.f32 %v2376, %v2379
  %vm2381 = vweird.f32 %v2375
  %vm2382 = vweird.f32 %v2376
  %vm2383 = vmor %vm2381, %vm2382
  %v2384 = vsel %vm2383, %v2376, %v2380
  %v2385 = vand.u32 2147483647, %v2375
  %vm2386 = vcmp.eq.f32.partialorder %v2385, 8.507059e+37
  %v2387 = vand.u32 %v2375, 2147483648
  %v2388 = vor.u32 1.1754944e-38, %v2387
  %v2389 = vsel %vm2386, %v2388, %v2384
  %v2390 = vmul.f32 1.0, %v2389
  %v2391 = vtanh.pop %v2351
  %v2392 = vxor.u32 %v2352, 2147483648
  %v2393 = vmul.f32 %v2392, 1.442695
  %v2394 = vpow.pop %v2393
  %v2395 = vadd.f32 %v2394, 1.0
  %v2396 = vrcp.pop %v2395
  %v2397 = vmul.f32 %v2395, %v2396
  %v2398 = vsub.f32 1.0, %v2397
  %v2399 = vmul.f32 %v2396, %v2398
  %v2400 = vadd.f32 %v2396, %v2399
  %vm2401 = vweird.f32 %v2395
  %vm2402 = vweird.f32 %v2396
  %vm2403 = vmor %vm2401, %vm2402
  %v2404 = vsel %vm2403, %v2396, %v2400
  %v2405 = vand.u32 2147483647, %v2395
  %vm2406 = vcmp.eq.f32.partialorder %v2405, 8.507059e+37
  %v2407 = vand.u32 %v2395, 2147483648
  %v2408 = vor.u32 1.1754944e-38, %v2407
  %v2409 = vsel %vm2406, %v2408, %v2404
  %v2410 = vmul.f32 1.0, %v2409
  %v2411 = vmul.f32 %v2390, %v2275
  %v2412 = vmul.f32 %v2371, %v2391
  %v2413 = vadd.f32 %v2411, %v2412
  %v2414 = vtanh.pop %v2413
  %v2415 = vmul.f32 %v2410, %v2414
  %s2416 = sadd.f32 %s60, 15.0
  %v2417 = vstv %s2416
  %vm2418 = vcmp.gt.f32.partialorder %v58, %v2417
  %v2419 = vsel %vm2418, 1, 0
  %v2420 = vcvt.s32.f32 %v2419
  %2422 = vset.pattern.permute.xlu0 0
  %2423 = vperm.xlu0 %2422, %v2420
  %v2424 = vpop.permute.xlu0 %2423
  %v2426 = vmul.f32 %v2415, %v2424
  %s2427 = scalar_lea.vmem [#allocation4], 120
  %2428 = vst [vmem:[%s2427] sm:$0xff] %v2426
  %2429 = vst [vmem:[#allocation2] sm:$0xff] %v2415
  %2430 = vst [vmem:[#allocation3] sm:$0xff] %v2413
  %v2431 = vld [vmem:[#allocation4] sm:$0xff]
  %v2432 = vld [vmem:[#allocation4 + $0x8] sm:$0xff]
  %v2433 = vld [vmem:[#allocation4 + $0x10] sm:$0xff]
  %v2434 = vld [vmem:[#allocation4 + $0x18] sm:$0xff]
  %v2435 = vld [vmem:[#allocation4 + $0x20] sm:$0xff]
  %v2436 = vld [vmem:[#allocation4 + $0x28] sm:$0xff]
  %v2437 = vld [vmem:[#allocation4 + $0x30] sm:$0xff]
  %v2438 = vld [vmem:[#allocation4 + $0x38] sm:$0xff]
  %v2439 = vld [vmem:[#allocation4 + $0x40] sm:$0xff]
  %v2440 = vld [vmem:[#allocation4 + $0x48] sm:$0xff]
  %v2441 = vld [vmem:[#allocation4 + $0x50] sm:$0xff]
  %v2442 = vld [vmem:[#allocation4 + $0x58] sm:$0xff]
  %v2443 = vld [vmem:[#allocation4 + $0x60] sm:$0xff]
  %v2444 = vld [vmem:[#allocation4 + $0x68] sm:$0xff]
  %v2445 = vld [vmem:[#allocation4 + $0x70] sm:$0xff]
  %v2446 = vld [vmem:[#allocation4 + $0x78] sm:$0xff]
  %v2447 = vpack.c.bf16 %v2432, %v2431
  %v2448 = vpack.c.bf16 %v2434, %v2433
  %v2449 = vpack.c.bf16 %v2436, %v2435
  %v2450 = vpack.c.bf16 %v2438, %v2437
  %v2451 = vpack.c.bf16 %v2440, %v2439
  %v2452 = vpack.c.bf16 %v2442, %v2441
  %v2453 = vpack.c.bf16 %v2444, %v2443
  %v2454 = vpack.c.bf16 %v2446, %v2445
  %v2455 = vld [vmem:[%s3] sm:$0xf]
  %v2456 = vld [vmem:[%s3 + $0x4] sm:$0xf]
  %v2457 = vld [vmem:[%s3 + $0x8] sm:$0xf]
  %v2458 = vld [vmem:[%s3 + $0xc] sm:$0xf]
  %v2459 = vld [vmem:[%s3 + $0x10] sm:$0xf]
  %v2460 = vld [vmem:[%s3 + $0x14] sm:$0xf]
  %v2461 = vld [vmem:[%s3 + $0x18] sm:$0xf]
  %v2462 = vld [vmem:[%s3 + $0x1c] sm:$0xf]
  %v2463 = vld [vmem:[%s3 + $0x20] sm:$0xf]
  %v2464 = vld [vmem:[%s3 + $0x24] sm:$0xf]
  %v2465 = vld [vmem:[%s3 + $0x28] sm:$0xf]
  %v2466 = vld [vmem:[%s3 + $0x2c] sm:$0xf]
  %v2467 = vld [vmem:[%s3 + $0x30] sm:$0xf]
  %v2468 = vld [vmem:[%s3 + $0x34] sm:$0xf]
  %v2469 = vld [vmem:[%s3 + $0x38] sm:$0xf]
  %v2470 = vld [vmem:[%s3 + $0x3c] sm:$0xf]
  %v2471 = vld [vmem:[%s4] sm:$0x1]
  %v2473 = vperm.slane %v2471, 0
  %v2491 = vunpack.c.l.b16 %v2455
  %v2492 = vunpack.c.l.b16 %v2456
  %v2493 = vunpack.c.l.b16 %v2457
  %v2494 = vunpack.c.l.b16 %v2458
  %v2495 = vunpack.c.l.b16 %v2459
  %v2496 = vunpack.c.l.b16 %v2460
  %v2497 = vunpack.c.l.b16 %v2461
  %v2498 = vunpack.c.l.b16 %v2462
  %v2499 = vunpack.c.l.b16 %v2463
  %v2500 = vunpack.c.l.b16 %v2464
  %v2501 = vunpack.c.l.b16 %v2465
  %v2502 = vunpack.c.l.b16 %v2466
  %v2503 = vunpack.c.l.b16 %v2467
  %v2504 = vunpack.c.l.b16 %v2468
  %v2505 = vunpack.c.l.b16 %v2469
  %v2506 = vunpack.c.l.b16 %v2470
  %v2507 = vpack.c.b16 %v2492, %v2491
  %v2508 = vpack.c.b16 %v2494, %v2493
  %v2509 = vpack.c.b16 %v2496, %v2495
  %v2510 = vpack.c.b16 %v2498, %v2497
  %v2511 = vpack.c.b16 %v2500, %v2499
  %v2512 = vpack.c.b16 %v2502, %v2501
  %v2513 = vpack.c.b16 %v2504, %v2503
  %v2514 = vpack.c.b16 %v2506, %v2505
  %2523 = vmatpush.bf16.msra.mxu0 %v2514
  %2524 = vmatpush.bf16.msra.mxu0 %v2513
  %2525 = vmatpush.bf16.msra.mxu0 %v2512
  %2526 = vmatpush.bf16.msra.mxu0 %v2511
  %2527 = vmatpush.bf16.msra.mxu0 %v2510
  %2528 = vmatpush.bf16.msra.mxu0 %v2509
  %2529 = vmatpush.bf16.msra.mxu0 %v2508
  %2530 = vmatpush.bf16.msra.mxu0 %v2507
  %2531 = vmatmul.bf16.gmra.mxu0 %v2447
  %v2532 = vpop.f32.mrf.mxu0
  %v2533 = vadd.f32 %v2473, %v2532
  %v2534 = vpop.f32.mrf.mxu0
  %v2535 = vadd.f32 %v2473, %v2534
  %2536 = vmatmul.bf16.gmra.mxu0 %v2448
  %v2537 = vpop.f32.mrf.mxu0
  %v2538 = vadd.f32 %v2473, %v2537
  %v2539 = vpop.f32.mrf.mxu0
  %v2540 = vadd.f32 %v2473, %v2539
  %2541 = vmatmul.bf16.gmra.mxu0 %v2449
  %v2542 = vpop.f32.mrf.mxu0
  %v2543 = vadd.f32 %v2473, %v2542
  %v2544 = vpop.f32.mrf.mxu0
  %v2545 = vadd.f32 %v2473, %v2544
  %2546 = vmatmul.bf16.gmra.mxu0 %v2450
  %v2547 = vpop.f32.mrf.mxu0
  %v2548 = vadd.f32 %v2473, %v2547
  %v2549 = vpop.f32.mrf.mxu0
  %v2550 = vadd.f32 %v2473, %v2549
  %2551 = vmatmul.bf16.gmra.mxu0 %v2451
  %v2552 = vpop.f32.mrf.mxu0
  %v2553 = vadd.f32 %v2473, %v2552
  %v2554 = vpop.f32.mrf.mxu0
  %v2555 = vadd.f32 %v2473, %v2554
  %2556 = vmatmul.bf16.gmra.mxu0 %v2452
  %v2557 = vpop.f32.mrf.mxu0
  %v2558 = vadd.f32 %v2473, %v2557
  %v2559 = vpop.f32.mrf.mxu0
  %v2560 = vadd.f32 %v2473, %v2559
  %2561 = vmatmul.bf16.gmra.mxu0 %v2453
  %v2562 = vpop.f32.mrf.mxu0
  %v2563 = vadd.f32 %v2473, %v2562
  %v2564 = vpop.f32.mrf.mxu0
  %v2565 = vadd.f32 %v2473, %v2564
  %2566 = vmatmul.bf16.gmra.mxu0 %v2454
  %v2567 = vpop.f32.mrf.mxu0
  %v2568 = vadd.f32 %v2473, %v2567
  %v2569 = vpop.f32.mrf.mxu0
  %v2570 = vadd.f32 %v2473, %v2569
  %2571 = vdwg.mxu0
  %v2572 = vmax.f32 %v2533, 0.0
  %v2573 = vmax.f32 %v2535, 0.0
  %v2574 = vmax.f32 %v2538, 0.0
  %v2575 = vmax.f32 %v2540, 0.0
  %v2576 = vmax.f32 %v2543, 0.0
  %v2577 = vmax.f32 %v2545, 0.0
  %v2578 = vmax.f32 %v2548, 0.0
  %v2579 = vmax.f32 %v2550, 0.0
  %v2580 = vmax.f32 %v2553, 0.0
  %v2581 = vmax.f32 %v2555, 0.0
  %v2582 = vmax.f32 %v2558, 0.0
  %v2583 = vmax.f32 %v2560, 0.0
  %v2584 = vmax.f32 %v2563, 0.0
  %v2585 = vmax.f32 %v2565, 0.0
  %v2586 = vmax.f32 %v2568, 0.0
  %v2587 = vmax.f32 %v2570, 0.0
  %2588 = vst [vmem:[%s5] sm:$0xff] %v2572
  %2589 = vst [vmem:[%s5 + $0x8] sm:$0xff] %v2573
  %2590 = vst [vmem:[%s5 + $0x10] sm:$0xff] %v2574
  %2591 = vst [vmem:[%s5 + $0x18] sm:$0xff] %v2575
  %2592 = vst [vmem:[%s5 + $0x20] sm:$0xff] %v2576
  %2593 = vst [vmem:[%s5 + $0x28] sm:$0xff] %v2577
  %2594 = vst [vmem:[%s5 + $0x30] sm:$0xff] %v2578
  %2595 = vst [vmem:[%s5 + $0x38] sm:$0xff] %v2579
  %2596 = vst [vmem:[%s5 + $0x40] sm:$0xff] %v2580
  %2597 = vst [vmem:[%s5 + $0x48] sm:$0xff] %v2581
  %2598 = vst [vmem:[%s5 + $0x50] sm:$0xff] %v2582
  %2599 = vst [vmem:[%s5 + $0x58] sm:$0xff] %v2583
  %2600 = vst [vmem:[%s5 + $0x60] sm:$0xff] %v2584
  %2601 = vst [vmem:[%s5 + $0x68] sm:$0xff] %v2585
  %2602 = vst [vmem:[%s5 + $0x70] sm:$0xff] %v2586
  %2603 = vst [vmem:[%s5 + $0x78] sm:$0xff] %v2587
  // Predicated region
  $region26: #{_lambda_.7} parent=0 // pred_check
    _
  $region27: #{_lambda_.7} parent=0 // pred_check_branch
    %2605 = sbr.rel (0) target = $region29
  $region28: #{_lambda_.7} parent=0 // pred_region
    _
  $region29: #{_lambda_.7} parent=0 // pred_fallthru
    _
  // Predicated region
  $region30: #{_lambda_.7} parent=0 // pred_check
    _
  $region31: #{_lambda_.7} parent=0 // pred_check_branch
    %2607 = sbr.rel (0) target = $region33
  $region32: #{_lambda_.7} parent=0 // pred_region
    _
  $region33: #{_lambda_.7} parent=0 // pred_fallthru
    _

</llo_original>
